<compile_context>
chip_gen: v5e
topology: v5e:2x2
jax: 0.10.0
libtpu: 0.0.40
codegen_flags: <defaults>
</compile_context>

<pallas_src>
import functools

import jax
import jax.numpy as jnp
from jax.experimental import pallas as pl
from jax.experimental.pallas import tpu as pltpu  # noqa: F401  (TPU backend)

# ----------------------------- model hyper-parameters -----------------------------
INPUT_SIZE = 16       # per-sequence feature size (transformer_cfg.INPUT_SIZE)
EMB = 32              # transformer_cfg.SEQ_EMB.OUTPUT_SIZE / EMBEDDING_SIZE
NUM_HEADS = 4
MLP_RATIO = 4
DEPTH = 2
HEAD_HIDDEN = 32      # hidden width of the logits-head MLP


# ================================= fused Pallas kernel =============================
def fused_forward_kernel(
    xaug_ref, neg_ref, flag_ref,
    embw_ref, blkw32_ref, blkfc2_ref, blkvec_ref,
    normwb_ref, headw1_ref, headvec_ref,
    out_ref, *, num_heads, depth,
):
    B, N, in_aug = xaug_ref.shape         # N = max_nb_seq + 1 (token 0 = summary)
    C = embw_ref.shape[1]
    dh = C // num_heads
    scale = dh ** (-0.5)
    BN = B * N
    HID = blkfc2_ref.shape[1]             # MLP hidden = 4C
    HHID = headw1_ref.shape[1] // 2       # logits-head hidden
    S = out_ref.shape[1]                  # = N - 1 (output columns)

    # ---- embedding + summary token in ONE matmul (augmented-input construction) ----
    # row 0 per batch is the indicator [0..0,1] selecting the summary-token row of embw.
    x = jnp.dot(xaug_ref[...].reshape(BN, in_aug), embw_ref[...],
                preferred_element_type=jnp.float32)                        # (BN, C)

    # additive key-padding mask, broadcast ONCE for all layers/heads: (1, B, 1, N)
    neg4 = neg_ref[...][None, :, None, :]

    def layernorm(v, w, b, eps):
        mu = jnp.mean(v, axis=-1, keepdims=True)
        var = jnp.mean((v - mu) ** 2, axis=-1, keepdims=True)
        return (v - mu) * jax.lax.rsqrt(var + eps) * w + b

    # =============================== transformer blocks =============================
    for d in range(depth):
        # unpack per-layer parameters (static slices of packed slabs)
        qkv_w = blkw32_ref[d, :, 0:3 * C]                                  # (C, 3C)
        proj_w = blkw32_ref[d, :, 3 * C:4 * C]                             # (C, C)
        fc1_w = blkw32_ref[d, :, 4 * C:4 * C + HID]                        # (C, HID)
        fc2_w = blkfc2_ref[d]                                              # (HID, C)
        ln1w = blkvec_ref[d, 0:1, 0:C]
        ln1b = blkvec_ref[d, 1:2, 0:C]
        ln2w = blkvec_ref[d, 2:3, 0:C]
        ln2b = blkvec_ref[d, 3:4, 0:C]
        proj_b = blkvec_ref[d, 4:5, 0:C]
        fc2_b = blkvec_ref[d, 5:6, 0:C]
        fc1_b = blkvec_ref[d, 6:7, 0:HID]
        qkv_b = blkvec_ref[d, 7:8, 0:3 * C]

        # ---- LayerNorm 1 (eps=1e-6) + multi-head self attention ----
        xn = layernorm(x, ln1w, ln1b, 1e-6)
        qkv = jnp.dot(xn, qkv_w, preferred_element_type=jnp.float32) + qkv_b   # (BN, 3C)
        q = (qkv[:, 0:C] * scale).reshape(B, N, C)        # scale folded once into q
        k = qkv[:, C:2 * C].reshape(B, N, C)
        v = qkv[:, 2 * C:3 * C].reshape(B, N, C)

        # per-head score matmuls (separate MXU pushes either way), then ONE mask add
        # and ONE softmax chain over all heads at once.
        s_heads = [
            jnp.einsum('bnd,bmd->bnm',
                       q[:, :, h * dh:(h + 1) * dh],
                       k[:, :, h * dh:(h + 1) * dh],
                       preferred_element_type=jnp.float32)
            for h in range(num_heads)
        ]
        s = jnp.stack(s_heads, axis=0) + neg4                              # (H, B, N, N)
        s = s - jnp.max(s, axis=-1, keepdims=True)
        p = jnp.exp(s)                          # masked keys underflow to exactly 0
        a = p * pl.reciprocal(jnp.sum(p, axis=-1, keepdims=True), approx=True)

        # per-head context, lane-concatenated, then ONE output-projection matmul
        ctx = jnp.concatenate(
            [jnp.einsum('bnm,bmd->bnd', a[h], v[:, :, h * dh:(h + 1) * dh],
                        preferred_element_type=jnp.float32)
             for h in range(num_heads)],
            axis=-1).reshape(BN, C)
        x = x + jnp.dot(ctx, proj_w, preferred_element_type=jnp.float32) + proj_b

        # ---- LayerNorm 2 (eps=1e-6) + GELU MLP ----
        xn2 = layernorm(x, ln2w, ln2b, 1e-6)
        h1 = jnp.dot(xn2, fc1_w, preferred_element_type=jnp.float32) + fc1_b   # (BN, HID)
        h1 = 0.5 * h1 * (1.0 + jax.lax.erf(h1 * (2.0 ** -0.5)))    # exact nn.GELU()
        x = x + jnp.dot(h1, fc2_w, preferred_element_type=jnp.float32) + fc2_b

    # ---- final encoder LayerNorm (nn.LayerNorm default eps = 1e-5) ----
    x = layernorm(x, normwb_ref[0:1, :], normwb_ref[1:2, :], 1e-5)         # (BN, C)

    # =============================== fused logits heads ==============================
    b1cat = headvec_ref[0:1, 0:2 * HHID]                                   # (1, 2H)
    w2a = headvec_ref[1:2, 0:HHID]                                         # (1, H)
    w2b = headvec_ref[2:3, 0:HHID]
    b2a = headvec_ref[3:4, 0:1]                                            # (1, 1)
    b2b = headvec_ref[3:4, 1:2]

    hh = jnp.maximum(
        jnp.dot(x, headw1_ref[...], preferred_element_type=jnp.float32) + b1cat, 0.0)
    hh3 = hh.reshape(B, N, 2 * HHID)
    vals1 = jnp.sum(hh3[:, :, 0:HHID] * w2a[None], axis=-1) + b2a          # (B, N)
    vals2 = jnp.sum(hh3[:, :, HHID:2 * HHID] * w2b[None], axis=-1) + b2b   # (B, N)

    # token -> output-column selection (no concatenate): part1 reads token j+1,
    # part2 reads token j+2 and its last column is exactly 0 by construction.
    rows = jax.lax.broadcasted_iota(jnp.int32, (N, S), 0)
    cols = jax.lax.broadcasted_iota(jnp.int32, (N, S), 1)
    sel1 = (rows == cols + 1).astype(jnp.float32)                          # (N, S)
    sel2 = (rows == cols + 2).astype(jnp.float32)
    logits1 = jnp.dot(vals1, sel1, preferred_element_type=jnp.float32)     # (B, S)
    logits2 = jnp.dot(vals2, sel2, preferred_element_type=jnp.float32)

    flag = flag_ref[...]                           # (B, 1): 1.0 where intermediate
    out_ref[...] = jnp.where(flag > 0.5, logits2, logits1)


# ============================ parameter packing (once) ==============================
def pack_params(params):
    """Pack the module-style parameter dict into a few VMEM-friendly slabs so the
    gridless pallas_call issues ~10 DMAs instead of ~27 tiny ones."""
    e = params['encoder']
    h1p, h2p = params['part1_head'], params['part2_head']

    def lane_pad(v, width=128):
        pad = [(0, 0)] * (v.ndim - 1) + [(0, width - v.shape[-1])]
        return jnp.pad(v, pad)

    emb_w = jnp.concatenate([params['seq_emb_w'], params['summary_token']], axis=0)  # (17, C)
    blk_w32 = jnp.concatenate([e['qkv_w'], e['proj_w'], e['fc1_w']], axis=2)          # (D, C, 256)
    blk_vec = jnp.concatenate(
        [lane_pad(e[k]) for k in ('ln1_w', 'ln1_b', 'ln2_w', 'ln2_b',
                                  'proj_b', 'fc2_b', 'fc1_b', 'qkv_b')], axis=1)      # (D, 8, 128)
    norm_wb = jnp.concatenate([e['norm_w'], e['norm_b']], axis=0)                      # (2, C)
    head_w1 = jnp.concatenate([h1p['w1'], h2p['w1']], axis=1)                          # (C, 2H)
    head_vec = jnp.concatenate([
        lane_pad(jnp.concatenate([h1p['b1'], h2p['b1']], axis=1)),   # row 0: b1 | b1
        lane_pad(h1p['w2']),                                         # row 1: part1 w2
        lane_pad(h2p['w2']),                                         # row 2: part2 w2
        lane_pad(jnp.concatenate([h1p['b2'], h2p['b2']], axis=1)),   # row 3: b2, b2
    ], axis=0)                                                                          # (4, 128)

    return dict(emb_w=emb_w, blk_w32=blk_w32, blk_wfc2=e['fc2_w'], blk_vec=blk_vec,
                norm_wb=norm_wb, head_w1=head_w1, head_vec=head_vec)


# ================================== model (glue) ====================================
def phylo_tree_forward(packed, batch_input, batch_intermediate_flag, batch_nb_seq):
    """Mirrors PhyloTreeModel.forward with the config choices listed at the top.
    Fully jittable: one fused pallas_call, no host-side indexing."""
    B, max_nb_seq, in_sz = batch_input.shape

    # augmented input: extra zero feature column + an indicator row 0 per batch; the
    # packed (in_sz+1, C) embedding matrix has the summary token as its last row, so a
    # single matmul yields [summary_token; seq_emb(batch_input)] per batch.
    feats = jnp.pad(batch_input.astype(jnp.float32), ((0, 0), (0, 0), (0, 1)))
    ind = jnp.zeros((B, 1, in_sz + 1), jnp.float32).at[:, :, in_sz].set(1.0)
    x_aug = jnp.concatenate([ind, feats], axis=1)                          # (B, N, in_sz+1)

    # padding mask: 1-based position index > nb_seq (== cumsum(ones) > nb_seq)
    pad_mask = (jnp.arange(1, max_nb_seq + 1, dtype=jnp.int32)[None, :]
                > batch_nb_seq[:, None])                                   # (B, max_nb_seq)
    key_pad = jnp.concatenate([jnp.zeros((B, 1), dtype=bool), pad_mask], axis=1)
    neg = jnp.where(key_pad, jnp.float32(-1e30), jnp.float32(0.0))         # (B, N)

    flag_b = batch_intermediate_flag.astype(bool)
    flag_f = flag_b.astype(jnp.float32).reshape(B, 1)

    logits = pl.pallas_call(
        functools.partial(fused_forward_kernel, num_heads=NUM_HEADS, depth=DEPTH),
        out_shape=jax.ShapeDtypeStruct((B, max_nb_seq), jnp.float32),
    )(x_aug, neg, flag_f,
      packed['emb_w'], packed['blk_w32'], packed['blk_wfc2'],
      packed['blk_vec'], packed['norm_wb'], packed['head_w1'], packed['head_vec'])

    # returned padding mask: intermediate rows additionally mask position nb_seq - 1
    out_mask = pad_mask | (flag_b[:, None]
                           & (jnp.arange(max_nb_seq, dtype=jnp.int32)[None, :]
                              == (batch_nb_seq - 1)[:, None]))
    return logits, out_mask


# ================================ parameter init ====================================
def init_params(key):
    keys = iter(jax.random.split(key, 32))
    C, D, HID = EMB, DEPTH, EMB * MLP_RATIO

    def lin_w(shape, std=0.02):
        return jax.random.normal(next(keys), shape, jnp.float32) * std

    encoder = dict(
        ln1_w=jnp.ones((D, 1, C), jnp.float32), ln1_b=jnp.zeros((D, 1, C), jnp.float32),
        qkv_w=lin_w((D, C, 3 * C)),             qkv_b=jnp.zeros((D, 1, 3 * C), jnp.float32),
        proj_w=lin_w((D, C, C)),                proj_b=jnp.zeros((D, 1, C), jnp.float32),
        ln2_w=jnp.ones((D, 1, C), jnp.float32), ln2_b=jnp.zeros((D, 1, C), jnp.float32),
        fc1_w=lin_w((D, C, HID)),               fc1_b=jnp.zeros((D, 1, HID), jnp.float32),
        fc2_w=lin_w((D, HID, C)),               fc2_b=jnp.zeros((D, 1, C), jnp.float32),
        norm_w=jnp.ones((1, C), jnp.float32),   norm_b=jnp.zeros((1, C), jnp.float32),
    )

    def make_head():
        return dict(w1=lin_w((C, HEAD_HIDDEN)), b1=jnp.zeros((1, HEAD_HIDDEN), jnp.float32),
                    w2=lin_w((1, HEAD_HIDDEN)), b2=jnp.zeros((1, 1), jnp.float32))

    return dict(
        seq_emb_w=lin_w((INPUT_SIZE, C)),
        summary_token=lin_w((1, C), std=0.1),
        encoder=encoder,
        part1_head=make_head(),
        part2_head=make_head(),
    )


# ====================================== main ========================================
if __name__ == "__main__":
    key = jax.random.PRNGKey(0)
    k_param, k_in = jax.random.split(key)

    params = init_params(k_param)
    packed = pack_params(params)          # one-time packing, outside the jitted forward

    batch_size, max_nb_seq = 4, 7
    batch_input = jax.random.normal(k_in, (batch_size, max_nb_seq, INPUT_SIZE), jnp.float32)
    batch_intermediate_flag = jnp.array([False, True, False, True])
    batch_nb_seq = jnp.array([7, 5, 6, 4], dtype=jnp.int32)

    forward = jax.jit(phylo_tree_forward)
    logits, padding_mask = forward(packed, batch_input,
                                   batch_intermediate_flag, batch_nb_seq)
    jax.block_until_ready(logits)
    jax.block_until_ready(padding_mask)

    assert logits.shape == (batch_size, max_nb_seq)
    assert padding_mask.shape == (batch_size, max_nb_seq)
    assert bool(jnp.all(jnp.isfinite(logits)))
    print("KERNEL_OK")
</pallas_src>

<mosaic_0001>
module attributes {stable_mosaic.version = 11 : i64} {
  func.func @fused_forward_kernel(%arg0: memref<4x8x17xf32, #tpu.memory_space<vmem>>, %arg1: memref<4x8xf32, #tpu.memory_space<vmem>>, %arg2: memref<4x1xf32, #tpu.memory_space<vmem>>, %arg3: memref<17x32xf32, #tpu.memory_space<vmem>>, %arg4: memref<2x32x256xf32, #tpu.memory_space<vmem>>, %arg5: memref<2x128x32xf32, #tpu.memory_space<vmem>>, %arg6: memref<2x8x128xf32, #tpu.memory_space<vmem>>, %arg7: memref<2x32xf32, #tpu.memory_space<vmem>>, %arg8: memref<32x64xf32, #tpu.memory_space<vmem>>, %arg9: memref<4x128xf32, #tpu.memory_space<vmem>>, %arg10: memref<4x7xf32, #tpu.memory_space<vmem>>) attributes {dimension_semantics = [], scalar_prefetch = 0 : i64, scratch_operands = 0 : i64, tpu.core_type = #tpu.core_type<tc>} {
    %c0 = arith.constant 0 : index
    %c0_0 = arith.constant 0 : index
    %c0_1 = arith.constant 0 : index
    %0 = vector.load %arg0[%c0, %c0_0, %c0_1] : memref<4x8x17xf32, #tpu.memory_space<vmem>>, vector<4x8x17xf32>
    %1 = vector.shape_cast %0 : vector<4x8x17xf32> to vector<32x17xf32>
    %c0_2 = arith.constant 0 : index
    %c0_3 = arith.constant 0 : index
    %2 = vector.load %arg3[%c0_2, %c0_3] : memref<17x32xf32, #tpu.memory_space<vmem>>, vector<17x32xf32>
    %cst = arith.constant dense<0.000000e+00> : vector<32x32xf32>
    %3 = tpu.matmul %1, %2, %cst {dimension_numbers = #tpu.dot_dimension_numbers<[1], [0], [0], [1], [0, 0, 1, 1], [], []>} : vector<32x17xf32>, vector<17x32xf32>, vector<32x32xf32> -> vector<32x32xf32>
    %c0_4 = arith.constant 0 : index
    %c0_5 = arith.constant 0 : index
    %4 = vector.load %arg1[%c0_4, %c0_5] : memref<4x8xf32, #tpu.memory_space<vmem>>, vector<4x8xf32>
    %5 = vector.shape_cast %4 : vector<4x8xf32> to vector<1x4x1x8xf32>
    %c0_6 = arith.constant 0 : index
    %c0_7 = arith.constant 0 : index
    %c0_8 = arith.constant 0 : index
    %6 = vector.load %arg4[%c0_6, %c0_7, %c0_8] : memref<2x32x256xf32, #tpu.memory_space<vmem>>, vector<1x32x96xf32>
    %7 = vector.shape_cast %6 : vector<1x32x96xf32> to vector<32x96xf32>
    %c0_9 = arith.constant 0 : index
    %c0_10 = arith.constant 0 : index
    %c96 = arith.constant 96 : index
    %8 = vector.load %arg4[%c0_9, %c0_10, %c96] : memref<2x32x256xf32, #tpu.memory_space<vmem>>, vector<1x32x32xf32>
    %9 = vector.shape_cast %8 : vector<1x32x32xf32> to vector<32x32xf32>
    %c0_11 = arith.constant 0 : index
    %c0_12 = arith.constant 0 : index
    %c128 = arith.constant 128 : index
    %10 = vector.load %arg4[%c0_11, %c0_12, %c128] : memref<2x32x256xf32, #tpu.memory_space<vmem>>, vector<1x32x128xf32>
    %11 = vector.shape_cast %10 : vector<1x32x128xf32> to vector<32x128xf32>
    %c0_13 = arith.constant 0 : index
    %c0_14 = arith.constant 0 : index
    %c0_15 = arith.constant 0 : index
    %12 = vector.load %arg5[%c0_13, %c0_14, %c0_15] : memref<2x128x32xf32, #tpu.memory_space<vmem>>, vector<1x128x32xf32>
    %13 = vector.shape_cast %12 : vector<1x128x32xf32> to vector<128x32xf32>
    %c0_16 = arith.constant 0 : index
    %c0_17 = arith.constant 0 : index
    %c0_18 = arith.constant 0 : index
    %14 = vector.load %arg6[%c0_16, %c0_17, %c0_18] : memref<2x8x128xf32, #tpu.memory_space<vmem>>, vector<1x1x32xf32>
    %15 = vector.shape_cast %14 : vector<1x1x32xf32> to vector<1x32xf32>
    %c0_19 = arith.constant 0 : index
    %c1 = arith.constant 1 : index
    %c0_20 = arith.constant 0 : index
    %16 = vector.load %arg6[%c0_19, %c1, %c0_20] : memref<2x8x128xf32, #tpu.memory_space<vmem>>, vector<1x1x32xf32>
    %17 = vector.shape_cast %16 : vector<1x1x32xf32> to vector<1x32xf32>
    %c0_21 = arith.constant 0 : index
    %c2 = arith.constant 2 : index
    %c0_22 = arith.constant 0 : index
    %18 = vector.load %arg6[%c0_21, %c2, %c0_22] : memref<2x8x128xf32, #tpu.memory_space<vmem>>, vector<1x1x32xf32>
    %19 = vector.shape_cast %18 : vector<1x1x32xf32> to vector<1x32xf32>
    %c0_23 = arith.constant 0 : index
    %c3 = arith.constant 3 : index
    %c0_24 = arith.constant 0 : index
    %20 = vector.load %arg6[%c0_23, %c3, %c0_24] : memref<2x8x128xf32, #tpu.memory_space<vmem>>, vector<1x1x32xf32>
    %21 = vector.shape_cast %20 : vector<1x1x32xf32> to vector<1x32xf32>
    %c0_25 = arith.constant 0 : index
    %c4 = arith.constant 4 : index
    %c0_26 = arith.constant 0 : index
    %22 = vector.load %arg6[%c0_25, %c4, %c0_26] : memref<2x8x128xf32, #tpu.memory_space<vmem>>, vector<1x1x32xf32>
    %23 = vector.shape_cast %22 : vector<1x1x32xf32> to vector<1x32xf32>
    %c0_27 = arith.constant 0 : index
    %c5 = arith.constant 5 : index
    %c0_28 = arith.constant 0 : index
    %24 = vector.load %arg6[%c0_27, %c5, %c0_28] : memref<2x8x128xf32, #tpu.memory_space<vmem>>, vector<1x1x32xf32>
    %25 = vector.shape_cast %24 : vector<1x1x32xf32> to vector<1x32xf32>
    %c0_29 = arith.constant 0 : index
    %c6 = arith.constant 6 : index
    %c0_30 = arith.constant 0 : index
    %26 = vector.load %arg6[%c0_29, %c6, %c0_30] : memref<2x8x128xf32, #tpu.memory_space<vmem>>, vector<1x1x128xf32>
    %27 = vector.shape_cast %26 : vector<1x1x128xf32> to vector<1x128xf32>
    %c0_31 = arith.constant 0 : index
    %c7 = arith.constant 7 : index
    %c0_32 = arith.constant 0 : index
    %28 = vector.load %arg6[%c0_31, %c7, %c0_32] : memref<2x8x128xf32, #tpu.memory_space<vmem>>, vector<1x1x96xf32>
    %29 = vector.shape_cast %28 : vector<1x1x96xf32> to vector<1x96xf32>
    %cst_33 = arith.constant dense<0.000000e+00> : vector<32xf32>
    %30 = vector.multi_reduction <add>, %3, %cst_33 [1] : vector<32x32xf32> to vector<32xf32>
    %31 = vector.shape_cast %30 : vector<32xf32> to vector<32x1xf32>
    %cst_34 = arith.constant 3.200000e+01 : f32
    %32 = vector.broadcast %cst_34 : f32 to vector<32x1xf32>
    %33 = arith.divf %31, %32 : vector<32x1xf32>
    %34 = vector.broadcast %33 : vector<32x1xf32> to vector<32x32xf32>
    %35 = arith.subf %3, %34 : vector<32x32xf32>
    %36 = arith.mulf %35, %35 : vector<32x32xf32>
    %cst_35 = arith.constant dense<0.000000e+00> : vector<32xf32>
    %37 = vector.multi_reduction <add>, %36, %cst_35 [1] : vector<32x32xf32> to vector<32xf32>
    %38 = vector.shape_cast %37 : vector<32xf32> to vector<32x1xf32>
    %cst_36 = arith.constant 3.200000e+01 : f32
    %39 = vector.broadcast %cst_36 : f32 to vector<32x1xf32>
    %40 = arith.divf %38, %39 : vector<32x1xf32>
    %41 = vector.broadcast %33 : vector<32x1xf32> to vector<32x32xf32>
    %42 = arith.subf %3, %41 : vector<32x32xf32>
    %cst_37 = arith.constant 9.99999997E-7 : f32
    %43 = vector.broadcast %cst_37 : f32 to vector<32x1xf32>
    %44 = arith.addf %40, %43 : vector<32x1xf32>
    %45 = math.rsqrt %44 : vector<32x1xf32>
    %46 = vector.broadcast %45 : vector<32x1xf32> to vector<32x32xf32>
    %47 = arith.mulf %42, %46 : vector<32x32xf32>
    %48 = vector.broadcast %15 : vector<1x32xf32> to vector<32x32xf32>
    %49 = arith.mulf %47, %48 : vector<32x32xf32>
    %50 = vector.broadcast %17 : vector<1x32xf32> to vector<32x32xf32>
    %51 = arith.addf %49, %50 : vector<32x32xf32>
    %cst_38 = arith.constant dense<0.000000e+00> : vector<32x96xf32>
    %52 = tpu.matmul %51, %7, %cst_38 {dimension_numbers = #tpu.dot_dimension_numbers<[1], [0], [0], [1], [0, 0, 1, 1], [], []>} : vector<32x32xf32>, vector<32x96xf32>, vector<32x96xf32> -> vector<32x96xf32>
    %53 = vector.broadcast %29 : vector<1x96xf32> to vector<32x96xf32>
    %54 = arith.addf %52, %53 : vector<32x96xf32>
    %55 = vector.extract_strided_slice %54 {offsets = [0, 0], sizes = [32, 32], strides = [1, 1]} : vector<32x96xf32> to vector<32x32xf32>
    %cst_39 = arith.constant 0.353553385 : f32
    %56 = vector.broadcast %cst_39 : f32 to vector<32x32xf32>
    %57 = arith.mulf %55, %56 : vector<32x32xf32>
    %58 = vector.shape_cast %57 : vector<32x32xf32> to vector<4x8x32xf32>
    %59 = vector.extract_strided_slice %54 {offsets = [0, 32], sizes = [32, 32], strides = [1, 1]} : vector<32x96xf32> to vector<32x32xf32>
    %60 = vector.shape_cast %59 : vector<32x32xf32> to vector<4x8x32xf32>
    %61 = vector.extract_strided_slice %54 {offsets = [0, 64], sizes = [32, 32], strides = [1, 1]} : vector<32x96xf32> to vector<32x32xf32>
    %62 = vector.shape_cast %61 : vector<32x32xf32> to vector<4x8x32xf32>
    %63 = vector.extract_strided_slice %58 {offsets = [0, 0, 0], sizes = [4, 8, 8], strides = [1, 1, 1]} : vector<4x8x32xf32> to vector<4x8x8xf32>
    %64 = vector.extract_strided_slice %60 {offsets = [0, 0, 0], sizes = [4, 8, 8], strides = [1, 1, 1]} : vector<4x8x32xf32> to vector<4x8x8xf32>
    "tpu.trace_start"() <{level = 10 : i32, message = "bnd,bmd->bnm"}> : () -> ()
    %cst_40 = arith.constant dense<0.000000e+00> : vector<4x8x8xf32>
    %65 = tpu.matmul %63, %64, %cst_40 {dimension_numbers = #tpu.dot_dimension_numbers<[2], [2], [1], [1], [0, 0, 0, 1, 1, 1], [0], [0]>} : vector<4x8x8xf32>, vector<4x8x8xf32>, vector<4x8x8xf32> -> vector<4x8x8xf32>
    "tpu.trace_stop"() : () -> ()
    %66 = vector.extract_strided_slice %58 {offsets = [0, 0, 8], sizes = [4, 8, 8], strides = [1, 1, 1]} : vector<4x8x32xf32> to vector<4x8x8xf32>
    %67 = vector.extract_strided_slice %60 {offsets = [0, 0, 8], sizes = [4, 8, 8], strides = [1, 1, 1]} : vector<4x8x32xf32> to vector<4x8x8xf32>
    "tpu.trace_start"() <{level = 10 : i32, message = "bnd,bmd->bnm"}> : () -> ()
    %cst_41 = arith.constant dense<0.000000e+00> : vector<4x8x8xf32>
    %68 = tpu.matmul %66, %67, %cst_41 {dimension_numbers = #tpu.dot_dimension_numbers<[2], [2], [1], [1], [0, 0, 0, 1, 1, 1], [0], [0]>} : vector<4x8x8xf32>, vector<4x8x8xf32>, vector<4x8x8xf32> -> vector<4x8x8xf32>
    "tpu.trace_stop"() : () -> ()
    %69 = vector.extract_strided_slice %58 {offsets = [0, 0, 16], sizes = [4, 8, 8], strides = [1, 1, 1]} : vector<4x8x32xf32> to vector<4x8x8xf32>
    %70 = vector.extract_strided_slice %60 {offsets = [0, 0, 16], sizes = [4, 8, 8], strides = [1, 1, 1]} : vector<4x8x32xf32> to vector<4x8x8xf32>
    "tpu.trace_start"() <{level = 10 : i32, message = "bnd,bmd->bnm"}> : () -> ()
    %cst_42 = arith.constant dense<0.000000e+00> : vector<4x8x8xf32>
    %71 = tpu.matmul %69, %70, %cst_42 {dimension_numbers = #tpu.dot_dimension_numbers<[2], [2], [1], [1], [0, 0, 0, 1, 1, 1], [0], [0]>} : vector<4x8x8xf32>, vector<4x8x8xf32>, vector<4x8x8xf32> -> vector<4x8x8xf32>
    "tpu.trace_stop"() : () -> ()
    %72 = vector.extract_strided_slice %58 {offsets = [0, 0, 24], sizes = [4, 8, 8], strides = [1, 1, 1]} : vector<4x8x32xf32> to vector<4x8x8xf32>
    %73 = vector.extract_strided_slice %60 {offsets = [0, 0, 24], sizes = [4, 8, 8], strides = [1, 1, 1]} : vector<4x8x32xf32> to vector<4x8x8xf32>
    "tpu.trace_start"() <{level = 10 : i32, message = "bnd,bmd->bnm"}> : () -> ()
    %cst_43 = arith.constant dense<0.000000e+00> : vector<4x8x8xf32>
    %74 = tpu.matmul %72, %73, %cst_43 {dimension_numbers = #tpu.dot_dimension_numbers<[2], [2], [1], [1], [0, 0, 0, 1, 1, 1], [0], [0]>} : vector<4x8x8xf32>, vector<4x8x8xf32>, vector<4x8x8xf32> -> vector<4x8x8xf32>
    "tpu.trace_stop"() : () -> ()
    %75 = vector.shape_cast %65 : vector<4x8x8xf32> to vector<1x4x8x8xf32>
    %76 = vector.shape_cast %68 : vector<4x8x8xf32> to vector<1x4x8x8xf32>
    %77 = vector.shape_cast %71 : vector<4x8x8xf32> to vector<1x4x8x8xf32>
    %78 = vector.shape_cast %74 : vector<4x8x8xf32> to vector<1x4x8x8xf32>
    %79 = tpu.concatenate %75, %76, %77, %78 in 0 : vector<1x4x8x8xf32>, vector<1x4x8x8xf32>, vector<1x4x8x8xf32>, vector<1x4x8x8xf32> -> vector<4x4x8x8xf32>
    %80 = vector.broadcast %5 : vector<1x4x1x8xf32> to vector<4x4x8x8xf32>
    %81 = arith.addf %79, %80 : vector<4x4x8x8xf32>
    %cst_44 = arith.constant dense<0xFF800000> : vector<4x4x8xf32>
    %82 = vector.multi_reduction <maximumf>, %81, %cst_44 [3] : vector<4x4x8x8xf32> to vector<4x4x8xf32>
    %83 = vector.shape_cast %82 : vector<4x4x8xf32> to vector<4x4x8x1xf32>
    %84 = vector.broadcast %83 : vector<4x4x8x1xf32> to vector<4x4x8x8xf32>
    %85 = arith.subf %81, %84 : vector<4x4x8x8xf32>
    %86 = math.exp %85 : vector<4x4x8x8xf32>
    %cst_45 = arith.constant dense<0.000000e+00> : vector<4x4x8xf32>
    %87 = vector.multi_reduction <add>, %86, %cst_45 [3] : vector<4x4x8x8xf32> to vector<4x4x8xf32>
    %88 = vector.shape_cast %87 : vector<4x4x8xf32> to vector<4x4x8x1xf32>
    %89 = tpu.reciprocal %88 {approx = true} : vector<4x4x8x1xf32> -> vector<4x4x8x1xf32>
    %90 = vector.broadcast %89 : vector<4x4x8x1xf32> to vector<4x4x8x8xf32>
    %91 = arith.mulf %86, %90 : vector<4x4x8x8xf32>
    %92 = vector.extract_strided_slice %91 {offsets = [0, 0, 0, 0], sizes = [1, 4, 8, 8], strides = [1, 1, 1, 1]} : vector<4x4x8x8xf32> to vector<1x4x8x8xf32>
    %93 = vector.shape_cast %92 : vector<1x4x8x8xf32> to vector<4x8x8xf32>
    %94 = vector.extract_strided_slice %62 {offsets = [0, 0, 0], sizes = [4, 8, 8], strides = [1, 1, 1]} : vector<4x8x32xf32> to vector<4x8x8xf32>
    "tpu.trace_start"() <{level = 10 : i32, message = "bnm,bmd->bnd"}> : () -> ()
    %cst_46 = arith.constant dense<0.000000e+00> : vector<4x8x8xf32>
    %95 = tpu.matmul %93, %94, %cst_46 {dimension_numbers = #tpu.dot_dimension_numbers<[2], [1], [1], [2], [0, 0, 0, 1, 1, 2], [0], [0]>} : vector<4x8x8xf32>, vector<4x8x8xf32>, vector<4x8x8xf32> -> vector<4x8x8xf32>
    "tpu.trace_stop"() : () -> ()
    %96 = vector.extract_strided_slice %91 {offsets = [1, 0, 0, 0], sizes = [1, 4, 8, 8], strides = [1, 1, 1, 1]} : vector<4x4x8x8xf32> to vector<1x4x8x8xf32>
    %97 = vector.shape_cast %96 : vector<1x4x8x8xf32> to vector<4x8x8xf32>
    %98 = vector.extract_strided_slice %62 {offsets = [0, 0, 8], sizes = [4, 8, 8], strides = [1, 1, 1]} : vector<4x8x32xf32> to vector<4x8x8xf32>
    "tpu.trace_start"() <{level = 10 : i32, message = "bnm,bmd->bnd"}> : () -> ()
    %cst_47 = arith.constant dense<0.000000e+00> : vector<4x8x8xf32>
    %99 = tpu.matmul %97, %98, %cst_47 {dimension_numbers = #tpu.dot_dimension_numbers<[2], [1], [1], [2], [0, 0, 0, 1, 1, 2], [0], [0]>} : vector<4x8x8xf32>, vector<4x8x8xf32>, vector<4x8x8xf32> -> vector<4x8x8xf32>
    "tpu.trace_stop"() : () -> ()
    %100 = vector.extract_strided_slice %91 {offsets = [2, 0, 0, 0], sizes = [1, 4, 8, 8], strides = [1, 1, 1, 1]} : vector<4x4x8x8xf32> to vector<1x4x8x8xf32>
    %101 = vector.shape_cast %100 : vector<1x4x8x8xf32> to vector<4x8x8xf32>
    %102 = vector.extract_strided_slice %62 {offsets = [0, 0, 16], sizes = [4, 8, 8], strides = [1, 1, 1]} : vector<4x8x32xf32> to vector<4x8x8xf32>
    "tpu.trace_start"() <{level = 10 : i32, message = "bnm,bmd->bnd"}> : () -> ()
    %cst_48 = arith.constant dense<0.000000e+00> : vector<4x8x8xf32>
    %103 = tpu.matmul %101, %102, %cst_48 {dimension_numbers = #tpu.dot_dimension_numbers<[2], [1], [1], [2], [0, 0, 0, 1, 1, 2], [0], [0]>} : vector<4x8x8xf32>, vector<4x8x8xf32>, vector<4x8x8xf32> -> vector<4x8x8xf32>
    "tpu.trace_stop"() : () -> ()
    %104 = vector.extract_strided_slice %91 {offsets = [3, 0, 0, 0], sizes = [1, 4, 8, 8], strides = [1, 1, 1, 1]} : vector<4x4x8x8xf32> to vector<1x4x8x8xf32>
    %105 = vector.shape_cast %104 : vector<1x4x8x8xf32> to vector<4x8x8xf32>
    %106 = vector.extract_strided_slice %62 {offsets = [0, 0, 24], sizes = [4, 8, 8], strides = [1, 1, 1]} : vector<4x8x32xf32> to vector<4x8x8xf32>
    "tpu.trace_start"() <{level = 10 : i32, message = "bnm,bmd->bnd"}> : () -> ()
    %cst_49 = arith.constant dense<0.000000e+00> : vector<4x8x8xf32>
    %107 = tpu.matmul %105, %106, %cst_49 {dimension_numbers = #tpu.dot_dimension_numbers<[2], [1], [1], [2], [0, 0, 0, 1, 1, 2], [0], [0]>} : vector<4x8x8xf32>, vector<4x8x8xf32>, vector<4x8x8xf32> -> vector<4x8x8xf32>
    "tpu.trace_stop"() : () -> ()
    %108 = tpu.concatenate %95, %99, %103, %107 in 2 : vector<4x8x8xf32>, vector<4x8x8xf32>, vector<4x8x8xf32>, vector<4x8x8xf32> -> vector<4x8x32xf32>
    %109 = vector.shape_cast %108 : vector<4x8x32xf32> to vector<32x32xf32>
    %cst_50 = arith.constant dense<0.000000e+00> : vector<32x32xf32>
    %110 = tpu.matmul %109, %9, %cst_50 {dimension_numbers = #tpu.dot_dimension_numbers<[1], [0], [0], [1], [0, 0, 1, 1], [], []>} : vector<32x32xf32>, vector<32x32xf32>, vector<32x32xf32> -> vector<32x32xf32>
    %111 = arith.addf %3, %110 : vector<32x32xf32>
    %112 = vector.broadcast %23 : vector<1x32xf32> to vector<32x32xf32>
    %113 = arith.addf %111, %112 : vector<32x32xf32>
    %cst_51 = arith.constant dense<0.000000e+00> : vector<32xf32>
    %114 = vector.multi_reduction <add>, %113, %cst_51 [1] : vector<32x32xf32> to vector<32xf32>
    %115 = vector.shape_cast %114 : vector<32xf32> to vector<32x1xf32>
    %cst_52 = arith.constant 3.200000e+01 : f32
    %116 = vector.broadcast %cst_52 : f32 to vector<32x1xf32>
    %117 = arith.divf %115, %116 : vector<32x1xf32>
    %118 = vector.broadcast %117 : vector<32x1xf32> to vector<32x32xf32>
    %119 = arith.subf %113, %118 : vector<32x32xf32>
    %120 = arith.mulf %119, %119 : vector<32x32xf32>
    %cst_53 = arith.constant dense<0.000000e+00> : vector<32xf32>
    %121 = vector.multi_reduction <add>, %120, %cst_53 [1] : vector<32x32xf32> to vector<32xf32>
    %122 = vector.shape_cast %121 : vector<32xf32> to vector<32x1xf32>
    %cst_54 = arith.constant 3.200000e+01 : f32
    %123 = vector.broadcast %cst_54 : f32 to vector<32x1xf32>
    %124 = arith.divf %122, %123 : vector<32x1xf32>
    %125 = vector.broadcast %117 : vector<32x1xf32> to vector<32x32xf32>
    %126 = arith.subf %113, %125 : vector<32x32xf32>
    %cst_55 = arith.constant 9.99999997E-7 : f32
    %127 = vector.broadcast %cst_55 : f32 to vector<32x1xf32>
    %128 = arith.addf %124, %127 : vector<32x1xf32>
    %129 = math.rsqrt %128 : vector<32x1xf32>
    %130 = vector.broadcast %129 : vector<32x1xf32> to vector<32x32xf32>
    %131 = arith.mulf %126, %130 : vector<32x32xf32>
    %132 = vector.broadcast %19 : vector<1x32xf32> to vector<32x32xf32>
    %133 = arith.mulf %131, %132 : vector<32x32xf32>
    %134 = vector.broadcast %21 : vector<1x32xf32> to vector<32x32xf32>
    %135 = arith.addf %133, %134 : vector<32x32xf32>
    %cst_56 = arith.constant dense<0.000000e+00> : vector<32x128xf32>
    %136 = tpu.matmul %135, %11, %cst_56 {dimension_numbers = #tpu.dot_dimension_numbers<[1], [0], [0], [1], [0, 0, 1, 1], [], []>} : vector<32x32xf32>, vector<32x128xf32>, vector<32x128xf32> -> vector<32x128xf32>
    %137 = vector.broadcast %27 : vector<1x128xf32> to vector<32x128xf32>
    %138 = arith.addf %136, %137 : vector<32x128xf32>
    %cst_57 = arith.constant 5.000000e-01 : f32
    %139 = vector.broadcast %cst_57 : f32 to vector<32x128xf32>
    %140 = arith.mulf %139, %138 : vector<32x128xf32>
    %cst_58 = arith.constant 0.707106769 : f32
    %141 = vector.broadcast %cst_58 : f32 to vector<32x128xf32>
    %142 = arith.mulf %138, %141 : vector<32x128xf32>
    %143 = math.erf %142 : vector<32x128xf32>
    %cst_59 = arith.constant 1.000000e+00 : f32
    %144 = vector.broadcast %cst_59 : f32 to vector<32x128xf32>
    %145 = arith.addf %144, %143 : vector<32x128xf32>
    %146 = arith.mulf %140, %145 : vector<32x128xf32>
    %cst_60 = arith.constant dense<0.000000e+00> : vector<32x32xf32>
    %147 = tpu.matmul %146, %13, %cst_60 {dimension_numbers = #tpu.dot_dimension_numbers<[1], [0], [0], [1], [0, 0, 1, 1], [], []>} : vector<32x128xf32>, vector<128x32xf32>, vector<32x32xf32> -> vector<32x32xf32>
    %148 = arith.addf %113, %147 : vector<32x32xf32>
    %149 = vector.broadcast %25 : vector<1x32xf32> to vector<32x32xf32>
    %150 = arith.addf %148, %149 : vector<32x32xf32>
    %c1_61 = arith.constant 1 : index
    %c0_62 = arith.constant 0 : index
    %c0_63 = arith.constant 0 : index
    %151 = vector.load %arg4[%c1_61, %c0_62, %c0_63] : memref<2x32x256xf32, #tpu.memory_space<vmem>>, vector<1x32x96xf32>
    %152 = vector.shape_cast %151 : vector<1x32x96xf32> to vector<32x96xf32>
    %c1_64 = arith.constant 1 : index
    %c0_65 = arith.constant 0 : index
    %c96_66 = arith.constant 96 : index
    %153 = vector.load %arg4[%c1_64, %c0_65, %c96_66] : memref<2x32x256xf32, #tpu.memory_space<vmem>>, vector<1x32x32xf32>
    %154 = vector.shape_cast %153 : vector<1x32x32xf32> to vector<32x32xf32>
    %c1_67 = arith.constant 1 : index
    %c0_68 = arith.constant 0 : index
    %c128_69 = arith.constant 128 : index
    %155 = vector.load %arg4[%c1_67, %c0_68, %c128_69] : memref<2x32x256xf32, #tpu.memory_space<vmem>>, vector<1x32x128xf32>
    %156 = vector.shape_cast %155 : vector<1x32x128xf32> to vector<32x128xf32>
    %c1_70 = arith.constant 1 : index
    %c0_71 = arith.constant 0 : index
    %c0_72 = arith.constant 0 : index
    %157 = vector.load %arg5[%c1_70, %c0_71, %c0_72] : memref<2x128x32xf32, #tpu.memory_space<vmem>>, vector<1x128x32xf32>
    %158 = vector.shape_cast %157 : vector<1x128x32xf32> to vector<128x32xf32>
    %c1_73 = arith.constant 1 : index
    %c0_74 = arith.constant 0 : index
    %c0_75 = arith.constant 0 : index
    %159 = vector.load %arg6[%c1_73, %c0_74, %c0_75] : memref<2x8x128xf32, #tpu.memory_space<vmem>>, vector<1x1x32xf32>
    %160 = vector.shape_cast %159 : vector<1x1x32xf32> to vector<1x32xf32>
    %c1_76 = arith.constant 1 : index
    %c1_77 = arith.constant 1 : index
    %c0_78 = arith.constant 0 : index
    %161 = vector.load %arg6[%c1_76, %c1_77, %c0_78] : memref<2x8x128xf32, #tpu.memory_space<vmem>>, vector<1x1x32xf32>
    %162 = vector.shape_cast %161 : vector<1x1x32xf32> to vector<1x32xf32>
    %c1_79 = arith.constant 1 : index
    %c2_80 = arith.constant 2 : index
    %c0_81 = arith.constant 0 : index
    %163 = vector.load %arg6[%c1_79, %c2_80, %c0_81] : memref<2x8x128xf32, #tpu.memory_space<vmem>>, vector<1x1x32xf32>
    %164 = vector.shape_cast %163 : vector<1x1x32xf32> to vector<1x32xf32>
    %c1_82 = arith.constant 1 : index
    %c3_83 = arith.constant 3 : index
    %c0_84 = arith.constant 0 : index
    %165 = vector.load %arg6[%c1_82, %c3_83, %c0_84] : memref<2x8x128xf32, #tpu.memory_space<vmem>>, vector<1x1x32xf32>
    %166 = vector.shape_cast %165 : vector<1x1x32xf32> to vector<1x32xf32>
    %c1_85 = arith.constant 1 : index
    %c4_86 = arith.constant 4 : index
    %c0_87 = arith.constant 0 : index
    %167 = vector.load %arg6[%c1_85, %c4_86, %c0_87] : memref<2x8x128xf32, #tpu.memory_space<vmem>>, vector<1x1x32xf32>
    %168 = vector.shape_cast %167 : vector<1x1x32xf32> to vector<1x32xf32>
    %c1_88 = arith.constant 1 : index
    %c5_89 = arith.constant 5 : index
    %c0_90 = arith.constant 0 : index
    %169 = vector.load %arg6[%c1_88, %c5_89, %c0_90] : memref<2x8x128xf32, #tpu.memory_space<vmem>>, vector<1x1x32xf32>
    %170 = vector.shape_cast %169 : vector<1x1x32xf32> to vector<1x32xf32>
    %c1_91 = arith.constant 1 : index
    %c6_92 = arith.constant 6 : index
    %c0_93 = arith.constant 0 : index
    %171 = vector.load %arg6[%c1_91, %c6_92, %c0_93] : memref<2x8x128xf32, #tpu.memory_space<vmem>>, vector<1x1x128xf32>
    %172 = vector.shape_cast %171 : vector<1x1x128xf32> to vector<1x128xf32>
    %c1_94 = arith.constant 1 : index
    %c7_95 = arith.constant 7 : index
    %c0_96 = arith.constant 0 : index
    %173 = vector.load %arg6[%c1_94, %c7_95, %c0_96] : memref<2x8x128xf32, #tpu.memory_space<vmem>>, vector<1x1x96xf32>
    %174 = vector.shape_cast %173 : vector<1x1x96xf32> to vector<1x96xf32>
    %cst_97 = arith.constant dense<0.000000e+00> : vector<32xf32>
    %175 = vector.multi_reduction <add>, %150, %cst_97 [1] : vector<32x32xf32> to vector<32xf32>
    %176 = vector.shape_cast %175 : vector<32xf32> to vector<32x1xf32>
    %cst_98 = arith.constant 3.200000e+01 : f32
    %177 = vector.broadcast %cst_98 : f32 to vector<32x1xf32>
    %178 = arith.divf %176, %177 : vector<32x1xf32>
    %179 = vector.broadcast %178 : vector<32x1xf32> to vector<32x32xf32>
    %180 = arith.subf %150, %179 : vector<32x32xf32>
    %181 = arith.mulf %180, %180 : vector<32x32xf32>
    %cst_99 = arith.constant dense<0.000000e+00> : vector<32xf32>
    %182 = vector.multi_reduction <add>, %181, %cst_99 [1] : vector<32x32xf32> to vector<32xf32>
    %183 = vector.shape_cast %182 : vector<32xf32> to vector<32x1xf32>
    %cst_100 = arith.constant 3.200000e+01 : f32
    %184 = vector.broadcast %cst_100 : f32 to vector<32x1xf32>
    %185 = arith.divf %183, %184 : vector<32x1xf32>
    %186 = vector.broadcast %178 : vector<32x1xf32> to vector<32x32xf32>
    %187 = arith.subf %150, %186 : vector<32x32xf32>
    %cst_101 = arith.constant 9.99999997E-7 : f32
    %188 = vector.broadcast %cst_101 : f32 to vector<32x1xf32>
    %189 = arith.addf %185, %188 : vector<32x1xf32>
    %190 = math.rsqrt %189 : vector<32x1xf32>
    %191 = vector.broadcast %190 : vector<32x1xf32> to vector<32x32xf32>
    %192 = arith.mulf %187, %191 : vector<32x32xf32>
    %193 = vector.broadcast %160 : vector<1x32xf32> to vector<32x32xf32>
    %194 = arith.mulf %192, %193 : vector<32x32xf32>
    %195 = vector.broadcast %162 : vector<1x32xf32> to vector<32x32xf32>
    %196 = arith.addf %194, %195 : vector<32x32xf32>
    %cst_102 = arith.constant dense<0.000000e+00> : vector<32x96xf32>
    %197 = tpu.matmul %196, %152, %cst_102 {dimension_numbers = #tpu.dot_dimension_numbers<[1], [0], [0], [1], [0, 0, 1, 1], [], []>} : vector<32x32xf32>, vector<32x96xf32>, vector<32x96xf32> -> vector<32x96xf32>
    %198 = vector.broadcast %174 : vector<1x96xf32> to vector<32x96xf32>
    %199 = arith.addf %197, %198 : vector<32x96xf32>
    %200 = vector.extract_strided_slice %199 {offsets = [0, 0], sizes = [32, 32], strides = [1, 1]} : vector<32x96xf32> to vector<32x32xf32>
    %cst_103 = arith.constant 0.353553385 : f32
    %201 = vector.broadcast %cst_103 : f32 to vector<32x32xf32>
    %202 = arith.mulf %200, %201 : vector<32x32xf32>
    %203 = vector.shape_cast %202 : vector<32x32xf32> to vector<4x8x32xf32>
    %204 = vector.extract_strided_slice %199 {offsets = [0, 32], sizes = [32, 32], strides = [1, 1]} : vector<32x96xf32> to vector<32x32xf32>
    %205 = vector.shape_cast %204 : vector<32x32xf32> to vector<4x8x32xf32>
    %206 = vector.extract_strided_slice %199 {offsets = [0, 64], sizes = [32, 32], strides = [1, 1]} : vector<32x96xf32> to vector<32x32xf32>
    %207 = vector.shape_cast %206 : vector<32x32xf32> to vector<4x8x32xf32>
    %208 = vector.extract_strided_slice %203 {offsets = [0, 0, 0], sizes = [4, 8, 8], strides = [1, 1, 1]} : vector<4x8x32xf32> to vector<4x8x8xf32>
    %209 = vector.extract_strided_slice %205 {offsets = [0, 0, 0], sizes = [4, 8, 8], strides = [1, 1, 1]} : vector<4x8x32xf32> to vector<4x8x8xf32>
    "tpu.trace_start"() <{level = 10 : i32, message = "bnd,bmd->bnm"}> : () -> ()
    %cst_104 = arith.constant dense<0.000000e+00> : vector<4x8x8xf32>
    %210 = tpu.matmul %208, %209, %cst_104 {dimension_numbers = #tpu.dot_dimension_numbers<[2], [2], [1], [1], [0, 0, 0, 1, 1, 1], [0], [0]>} : vector<4x8x8xf32>, vector<4x8x8xf32>, vector<4x8x8xf32> -> vector<4x8x8xf32>
    "tpu.trace_stop"() : () -> ()
    %211 = vector.extract_strided_slice %203 {offsets = [0, 0, 8], sizes = [4, 8, 8], strides = [1, 1, 1]} : vector<4x8x32xf32> to vector<4x8x8xf32>
    %212 = vector.extract_strided_slice %205 {offsets = [0, 0, 8], sizes = [4, 8, 8], strides = [1, 1, 1]} : vector<4x8x32xf32> to vector<4x8x8xf32>
    "tpu.trace_start"() <{level = 10 : i32, message = "bnd,bmd->bnm"}> : () -> ()
    %cst_105 = arith.constant dense<0.000000e+00> : vector<4x8x8xf32>
    %213 = tpu.matmul %211, %212, %cst_105 {dimension_numbers = #tpu.dot_dimension_numbers<[2], [2], [1], [1], [0, 0, 0, 1, 1, 1], [0], [0]>} : vector<4x8x8xf32>, vector<4x8x8xf32>, vector<4x8x8xf32> -> vector<4x8x8xf32>
    "tpu.trace_stop"() : () -> ()
    %214 = vector.extract_strided_slice %203 {offsets = [0, 0, 16], sizes = [4, 8, 8], strides = [1, 1, 1]} : vector<4x8x32xf32> to vector<4x8x8xf32>
    %215 = vector.extract_strided_slice %205 {offsets = [0, 0, 16], sizes = [4, 8, 8], strides = [1, 1, 1]} : vector<4x8x32xf32> to vector<4x8x8xf32>
    "tpu.trace_start"() <{level = 10 : i32, message = "bnd,bmd->bnm"}> : () -> ()
    %cst_106 = arith.constant dense<0.000000e+00> : vector<4x8x8xf32>
    %216 = tpu.matmul %214, %215, %cst_106 {dimension_numbers = #tpu.dot_dimension_numbers<[2], [2], [1], [1], [0, 0, 0, 1, 1, 1], [0], [0]>} : vector<4x8x8xf32>, vector<4x8x8xf32>, vector<4x8x8xf32> -> vector<4x8x8xf32>
    "tpu.trace_stop"() : () -> ()
    %217 = vector.extract_strided_slice %203 {offsets = [0, 0, 24], sizes = [4, 8, 8], strides = [1, 1, 1]} : vector<4x8x32xf32> to vector<4x8x8xf32>
    %218 = vector.extract_strided_slice %205 {offsets = [0, 0, 24], sizes = [4, 8, 8], strides = [1, 1, 1]} : vector<4x8x32xf32> to vector<4x8x8xf32>
    "tpu.trace_start"() <{level = 10 : i32, message = "bnd,bmd->bnm"}> : () -> ()
    %cst_107 = arith.constant dense<0.000000e+00> : vector<4x8x8xf32>
    %219 = tpu.matmul %217, %218, %cst_107 {dimension_numbers = #tpu.dot_dimension_numbers<[2], [2], [1], [1], [0, 0, 0, 1, 1, 1], [0], [0]>} : vector<4x8x8xf32>, vector<4x8x8xf32>, vector<4x8x8xf32> -> vector<4x8x8xf32>
    "tpu.trace_stop"() : () -> ()
    %220 = vector.shape_cast %210 : vector<4x8x8xf32> to vector<1x4x8x8xf32>
    %221 = vector.shape_cast %213 : vector<4x8x8xf32> to vector<1x4x8x8xf32>
    %222 = vector.shape_cast %216 : vector<4x8x8xf32> to vector<1x4x8x8xf32>
    %223 = vector.shape_cast %219 : vector<4x8x8xf32> to vector<1x4x8x8xf32>
    %224 = tpu.concatenate %220, %221, %222, %223 in 0 : vector<1x4x8x8xf32>, vector<1x4x8x8xf32>, vector<1x4x8x8xf32>, vector<1x4x8x8xf32> -> vector<4x4x8x8xf32>
    %225 = vector.broadcast %5 : vector<1x4x1x8xf32> to vector<4x4x8x8xf32>
    %226 = arith.addf %224, %225 : vector<4x4x8x8xf32>
    %cst_108 = arith.constant dense<0xFF800000> : vector<4x4x8xf32>
    %227 = vector.multi_reduction <maximumf>, %226, %cst_108 [3] : vector<4x4x8x8xf32> to vector<4x4x8xf32>
    %228 = vector.shape_cast %227 : vector<4x4x8xf32> to vector<4x4x8x1xf32>
    %229 = vector.broadcast %228 : vector<4x4x8x1xf32> to vector<4x4x8x8xf32>
    %230 = arith.subf %226, %229 : vector<4x4x8x8xf32>
    %231 = math.exp %230 : vector<4x4x8x8xf32>
    %cst_109 = arith.constant dense<0.000000e+00> : vector<4x4x8xf32>
    %232 = vector.multi_reduction <add>, %231, %cst_109 [3] : vector<4x4x8x8xf32> to vector<4x4x8xf32>
    %233 = vector.shape_cast %232 : vector<4x4x8xf32> to vector<4x4x8x1xf32>
    %234 = tpu.reciprocal %233 {approx = true} : vector<4x4x8x1xf32> -> vector<4x4x8x1xf32>
    %235 = vector.broadcast %234 : vector<4x4x8x1xf32> to vector<4x4x8x8xf32>
    %236 = arith.mulf %231, %235 : vector<4x4x8x8xf32>
    %237 = vector.extract_strided_slice %236 {offsets = [0, 0, 0, 0], sizes = [1, 4, 8, 8], strides = [1, 1, 1, 1]} : vector<4x4x8x8xf32> to vector<1x4x8x8xf32>
    %238 = vector.shape_cast %237 : vector<1x4x8x8xf32> to vector<4x8x8xf32>
    %239 = vector.extract_strided_slice %207 {offsets = [0, 0, 0], sizes = [4, 8, 8], strides = [1, 1, 1]} : vector<4x8x32xf32> to vector<4x8x8xf32>
    "tpu.trace_start"() <{level = 10 : i32, message = "bnm,bmd->bnd"}> : () -> ()
    %cst_110 = arith.constant dense<0.000000e+00> : vector<4x8x8xf32>
    %240 = tpu.matmul %238, %239, %cst_110 {dimension_numbers = #tpu.dot_dimension_numbers<[2], [1], [1], [2], [0, 0, 0, 1, 1, 2], [0], [0]>} : vector<4x8x8xf32>, vector<4x8x8xf32>, vector<4x8x8xf32> -> vector<4x8x8xf32>
    "tpu.trace_stop"() : () -> ()
    %241 = vector.extract_strided_slice %236 {offsets = [1, 0, 0, 0], sizes = [1, 4, 8, 8], strides = [1, 1, 1, 1]} : vector<4x4x8x8xf32> to vector<1x4x8x8xf32>
    %242 = vector.shape_cast %241 : vector<1x4x8x8xf32> to vector<4x8x8xf32>
    %243 = vector.extract_strided_slice %207 {offsets = [0, 0, 8], sizes = [4, 8, 8], strides = [1, 1, 1]} : vector<4x8x32xf32> to vector<4x8x8xf32>
    "tpu.trace_start"() <{level = 10 : i32, message = "bnm,bmd->bnd"}> : () -> ()
    %cst_111 = arith.constant dense<0.000000e+00> : vector<4x8x8xf32>
    %244 = tpu.matmul %242, %243, %cst_111 {dimension_numbers = #tpu.dot_dimension_numbers<[2], [1], [1], [2], [0, 0, 0, 1, 1, 2], [0], [0]>} : vector<4x8x8xf32>, vector<4x8x8xf32>, vector<4x8x8xf32> -> vector<4x8x8xf32>
    "tpu.trace_stop"() : () -> ()
    %245 = vector.extract_strided_slice %236 {offsets = [2, 0, 0, 0], sizes = [1, 4, 8, 8], strides = [1, 1, 1, 1]} : vector<4x4x8x8xf32> to vector<1x4x8x8xf32>
    %246 = vector.shape_cast %245 : vector<1x4x8x8xf32> to vector<4x8x8xf32>
    %247 = vector.extract_strided_slice %207 {offsets = [0, 0, 16], sizes = [4, 8, 8], strides = [1, 1, 1]} : vector<4x8x32xf32> to vector<4x8x8xf32>
    "tpu.trace_start"() <{level = 10 : i32, message = "bnm,bmd->bnd"}> : () -> ()
    %cst_112 = arith.constant dense<0.000000e+00> : vector<4x8x8xf32>
    %248 = tpu.matmul %246, %247, %cst_112 {dimension_numbers = #tpu.dot_dimension_numbers<[2], [1], [1], [2], [0, 0, 0, 1, 1, 2], [0], [0]>} : vector<4x8x8xf32>, vector<4x8x8xf32>, vector<4x8x8xf32> -> vector<4x8x8xf32>
    "tpu.trace_stop"() : () -> ()
    %249 = vector.extract_strided_slice %236 {offsets = [3, 0, 0, 0], sizes = [1, 4, 8, 8], strides = [1, 1, 1, 1]} : vector<4x4x8x8xf32> to vector<1x4x8x8xf32>
    %250 = vector.shape_cast %249 : vector<1x4x8x8xf32> to vector<4x8x8xf32>
    %251 = vector.extract_strided_slice %207 {offsets = [0, 0, 24], sizes = [4, 8, 8], strides = [1, 1, 1]} : vector<4x8x32xf32> to vector<4x8x8xf32>
    "tpu.trace_start"() <{level = 10 : i32, message = "bnm,bmd->bnd"}> : () -> ()
    %cst_113 = arith.constant dense<0.000000e+00> : vector<4x8x8xf32>
    %252 = tpu.matmul %250, %251, %cst_113 {dimension_numbers = #tpu.dot_dimension_numbers<[2], [1], [1], [2], [0, 0, 0, 1, 1, 2], [0], [0]>} : vector<4x8x8xf32>, vector<4x8x8xf32>, vector<4x8x8xf32> -> vector<4x8x8xf32>
    "tpu.trace_stop"() : () -> ()
    %253 = tpu.concatenate %240, %244, %248, %252 in 2 : vector<4x8x8xf32>, vector<4x8x8xf32>, vector<4x8x8xf32>, vector<4x8x8xf32> -> vector<4x8x32xf32>
    %254 = vector.shape_cast %253 : vector<4x8x32xf32> to vector<32x32xf32>
    %cst_114 = arith.constant dense<0.000000e+00> : vector<32x32xf32>
    %255 = tpu.matmul %254, %154, %cst_114 {dimension_numbers = #tpu.dot_dimension_numbers<[1], [0], [0], [1], [0, 0, 1, 1], [], []>} : vector<32x32xf32>, vector<32x32xf32>, vector<32x32xf32> -> vector<32x32xf32>
    %256 = arith.addf %150, %255 : vector<32x32xf32>
    %257 = vector.broadcast %168 : vector<1x32xf32> to vector<32x32xf32>
    %258 = arith.addf %256, %257 : vector<32x32xf32>
    %cst_115 = arith.constant dense<0.000000e+00> : vector<32xf32>
    %259 = vector.multi_reduction <add>, %258, %cst_115 [1] : vector<32x32xf32> to vector<32xf32>
    %260 = vector.shape_cast %259 : vector<32xf32> to vector<32x1xf32>
    %cst_116 = arith.constant 3.200000e+01 : f32
    %261 = vector.broadcast %cst_116 : f32 to vector<32x1xf32>
    %262 = arith.divf %260, %261 : vector<32x1xf32>
    %263 = vector.broadcast %262 : vector<32x1xf32> to vector<32x32xf32>
    %264 = arith.subf %258, %263 : vector<32x32xf32>
    %265 = arith.mulf %264, %264 : vector<32x32xf32>
    %cst_117 = arith.constant dense<0.000000e+00> : vector<32xf32>
    %266 = vector.multi_reduction <add>, %265, %cst_117 [1] : vector<32x32xf32> to vector<32xf32>
    %267 = vector.shape_cast %266 : vector<32xf32> to vector<32x1xf32>
    %cst_118 = arith.constant 3.200000e+01 : f32
    %268 = vector.broadcast %cst_118 : f32 to vector<32x1xf32>
    %269 = arith.divf %267, %268 : vector<32x1xf32>
    %270 = vector.broadcast %262 : vector<32x1xf32> to vector<32x32xf32>
    %271 = arith.subf %258, %270 : vector<32x32xf32>
    %cst_119 = arith.constant 9.99999997E-7 : f32
    %272 = vector.broadcast %cst_119 : f32 to vector<32x1xf32>
    %273 = arith.addf %269, %272 : vector<32x1xf32>
    %274 = math.rsqrt %273 : vector<32x1xf32>
    %275 = vector.broadcast %274 : vector<32x1xf32> to vector<32x32xf32>
    %276 = arith.mulf %271, %275 : vector<32x32xf32>
    %277 = vector.broadcast %164 : vector<1x32xf32> to vector<32x32xf32>
    %278 = arith.mulf %276, %277 : vector<32x32xf32>
    %279 = vector.broadcast %166 : vector<1x32xf32> to vector<32x32xf32>
    %280 = arith.addf %278, %279 : vector<32x32xf32>
    %cst_120 = arith.constant dense<0.000000e+00> : vector<32x128xf32>
    %281 = tpu.matmul %280, %156, %cst_120 {dimension_numbers = #tpu.dot_dimension_numbers<[1], [0], [0], [1], [0, 0, 1, 1], [], []>} : vector<32x32xf32>, vector<32x128xf32>, vector<32x128xf32> -> vector<32x128xf32>
    %282 = vector.broadcast %172 : vector<1x128xf32> to vector<32x128xf32>
    %283 = arith.addf %281, %282 : vector<32x128xf32>
    %cst_121 = arith.constant 5.000000e-01 : f32
    %284 = vector.broadcast %cst_121 : f32 to vector<32x128xf32>
    %285 = arith.mulf %284, %283 : vector<32x128xf32>
    %cst_122 = arith.constant 0.707106769 : f32
    %286 = vector.broadcast %cst_122 : f32 to vector<32x128xf32>
    %287 = arith.mulf %283, %286 : vector<32x128xf32>
    %288 = math.erf %287 : vector<32x128xf32>
    %cst_123 = arith.constant 1.000000e+00 : f32
    %289 = vector.broadcast %cst_123 : f32 to vector<32x128xf32>
    %290 = arith.addf %289, %288 : vector<32x128xf32>
    %291 = arith.mulf %285, %290 : vector<32x128xf32>
    %cst_124 = arith.constant dense<0.000000e+00> : vector<32x32xf32>
    %292 = tpu.matmul %291, %158, %cst_124 {dimension_numbers = #tpu.dot_dimension_numbers<[1], [0], [0], [1], [0, 0, 1, 1], [], []>} : vector<32x128xf32>, vector<128x32xf32>, vector<32x32xf32> -> vector<32x32xf32>
    %293 = arith.addf %258, %292 : vector<32x32xf32>
    %294 = vector.broadcast %170 : vector<1x32xf32> to vector<32x32xf32>
    %295 = arith.addf %293, %294 : vector<32x32xf32>
    %c0_125 = arith.constant 0 : index
    %c0_126 = arith.constant 0 : index
    %296 = vector.load %arg7[%c0_125, %c0_126] : memref<2x32xf32, #tpu.memory_space<vmem>>, vector<1x32xf32>
    %c1_127 = arith.constant 1 : index
    %c0_128 = arith.constant 0 : index
    %297 = vector.load %arg7[%c1_127, %c0_128] : memref<2x32xf32, #tpu.memory_space<vmem>>, vector<1x32xf32>
    %cst_129 = arith.constant dense<0.000000e+00> : vector<32xf32>
    %298 = vector.multi_reduction <add>, %295, %cst_129 [1] : vector<32x32xf32> to vector<32xf32>
    %299 = vector.shape_cast %298 : vector<32xf32> to vector<32x1xf32>
    %cst_130 = arith.constant 3.200000e+01 : f32
    %300 = vector.broadcast %cst_130 : f32 to vector<32x1xf32>
    %301 = arith.divf %299, %300 : vector<32x1xf32>
    %302 = vector.broadcast %301 : vector<32x1xf32> to vector<32x32xf32>
    %303 = arith.subf %295, %302 : vector<32x32xf32>
    %304 = arith.mulf %303, %303 : vector<32x32xf32>
    %cst_131 = arith.constant dense<0.000000e+00> : vector<32xf32>
    %305 = vector.multi_reduction <add>, %304, %cst_131 [1] : vector<32x32xf32> to vector<32xf32>
    %306 = vector.shape_cast %305 : vector<32xf32> to vector<32x1xf32>
    %cst_132 = arith.constant 3.200000e+01 : f32
    %307 = vector.broadcast %cst_132 : f32 to vector<32x1xf32>
    %308 = arith.divf %306, %307 : vector<32x1xf32>
    %309 = vector.broadcast %301 : vector<32x1xf32> to vector<32x32xf32>
    %310 = arith.subf %295, %309 : vector<32x32xf32>
    %cst_133 = arith.constant 9.99999974E-6 : f32
    %311 = vector.broadcast %cst_133 : f32 to vector<32x1xf32>
    %312 = arith.addf %308, %311 : vector<32x1xf32>
    %313 = math.rsqrt %312 : vector<32x1xf32>
    %314 = vector.broadcast %313 : vector<32x1xf32> to vector<32x32xf32>
    %315 = arith.mulf %310, %314 : vector<32x32xf32>
    %316 = vector.broadcast %296 : vector<1x32xf32> to vector<32x32xf32>
    %317 = arith.mulf %315, %316 : vector<32x32xf32>
    %318 = vector.broadcast %297 : vector<1x32xf32> to vector<32x32xf32>
    %319 = arith.addf %317, %318 : vector<32x32xf32>
    %c0_134 = arith.constant 0 : index
    %c0_135 = arith.constant 0 : index
    %320 = vector.load %arg9[%c0_134, %c0_135] : memref<4x128xf32, #tpu.memory_space<vmem>>, vector<1x64xf32>
    %c1_136 = arith.constant 1 : index
    %c0_137 = arith.constant 0 : index
    %321 = vector.load %arg9[%c1_136, %c0_137] : memref<4x128xf32, #tpu.memory_space<vmem>>, vector<1x32xf32>
    %c2_138 = arith.constant 2 : index
    %c0_139 = arith.constant 0 : index
    %322 = vector.load %arg9[%c2_138, %c0_139] : memref<4x128xf32, #tpu.memory_space<vmem>>, vector<1x32xf32>
    %c3_140 = arith.constant 3 : index
    %c0_141 = arith.constant 0 : index
    %323 = vector.load %arg9[%c3_140, %c0_141] : memref<4x128xf32, #tpu.memory_space<vmem>>, vector<1x1xf32>
    %c3_142 = arith.constant 3 : index
    %c1_143 = arith.constant 1 : index
    %324 = vector.load %arg9[%c3_142, %c1_143] : memref<4x128xf32, #tpu.memory_space<vmem>>, vector<1x1xf32>
    %c0_144 = arith.constant 0 : index
    %c0_145 = arith.constant 0 : index
    %325 = vector.load %arg8[%c0_144, %c0_145] : memref<32x64xf32, #tpu.memory_space<vmem>>, vector<32x64xf32>
    %cst_146 = arith.constant dense<0.000000e+00> : vector<32x64xf32>
    %326 = tpu.matmul %319, %325, %cst_146 {dimension_numbers = #tpu.dot_dimension_numbers<[1], [0], [0], [1], [0, 0, 1, 1], [], []>} : vector<32x32xf32>, vector<32x64xf32>, vector<32x64xf32> -> vector<32x64xf32>
    %327 = vector.broadcast %320 : vector<1x64xf32> to vector<32x64xf32>
    %328 = arith.addf %326, %327 : vector<32x64xf32>
    %cst_147 = arith.constant 0.000000e+00 : f32
    %329 = vector.broadcast %cst_147 : f32 to vector<32x64xf32>
    %330 = arith.maximumf %328, %329 : vector<32x64xf32>
    %331 = vector.shape_cast %330 : vector<32x64xf32> to vector<4x8x64xf32>
    %332 = vector.extract_strided_slice %331 {offsets = [0, 0, 0], sizes = [4, 8, 32], strides = [1, 1, 1]} : vector<4x8x64xf32> to vector<4x8x32xf32>
    %333 = vector.shape_cast %321 : vector<1x32xf32> to vector<1x1x32xf32>
    %334 = vector.broadcast %333 : vector<1x1x32xf32> to vector<4x8x32xf32>
    %335 = arith.mulf %332, %334 : vector<4x8x32xf32>
    %cst_148 = arith.constant dense<0.000000e+00> : vector<4x8xf32>
    %336 = vector.multi_reduction <add>, %335, %cst_148 [2] : vector<4x8x32xf32> to vector<4x8xf32>
    %337 = vector.broadcast %323 : vector<1x1xf32> to vector<4x8xf32>
    %338 = arith.addf %336, %337 : vector<4x8xf32>
    %339 = vector.extract_strided_slice %331 {offsets = [0, 0, 32], sizes = [4, 8, 32], strides = [1, 1, 1]} : vector<4x8x64xf32> to vector<4x8x32xf32>
    %340 = vector.shape_cast %322 : vector<1x32xf32> to vector<1x1x32xf32>
    %341 = vector.broadcast %340 : vector<1x1x32xf32> to vector<4x8x32xf32>
    %342 = arith.mulf %339, %341 : vector<4x8x32xf32>
    %cst_149 = arith.constant dense<0.000000e+00> : vector<4x8xf32>
    %343 = vector.multi_reduction <add>, %342, %cst_149 [2] : vector<4x8x32xf32> to vector<4x8xf32>
    %344 = vector.broadcast %324 : vector<1x1xf32> to vector<4x8xf32>
    %345 = arith.addf %343, %344 : vector<4x8xf32>
    %346 = tpu.iota {dimensions = array<i32: 0>} : vector<8x7xi32>
    %347 = tpu.iota {dimensions = array<i32: 1>} : vector<8x7xi32>
    %c1_i32 = arith.constant 1 : i32
    %348 = vector.broadcast %c1_i32 : i32 to vector<8x7xi32>
    %349 = arith.addi %347, %348 : vector<8x7xi32>
    %350 = arith.cmpi eq, %346, %349 : vector<8x7xi32>
    %351 = arith.extui %350 : vector<8x7xi1> to vector<8x7xi32>
    %352 = arith.sitofp %351 : vector<8x7xi32> to vector<8x7xf32>
    %c2_i32 = arith.constant 2 : i32
    %353 = vector.broadcast %c2_i32 : i32 to vector<8x7xi32>
    %354 = arith.addi %347, %353 : vector<8x7xi32>
    %355 = arith.cmpi eq, %346, %354 : vector<8x7xi32>
    %356 = arith.extui %355 : vector<8x7xi1> to vector<8x7xi32>
    %357 = arith.sitofp %356 : vector<8x7xi32> to vector<8x7xf32>
    %cst_150 = arith.constant dense<0.000000e+00> : vector<4x7xf32>
    %358 = tpu.matmul %338, %352, %cst_150 {dimension_numbers = #tpu.dot_dimension_numbers<[1], [0], [0], [1], [0, 0, 1, 1], [], []>} : vector<4x8xf32>, vector<8x7xf32>, vector<4x7xf32> -> vector<4x7xf32>
    %cst_151 = arith.constant dense<0.000000e+00> : vector<4x7xf32>
    %359 = tpu.matmul %345, %357, %cst_151 {dimension_numbers = #tpu.dot_dimension_numbers<[1], [0], [0], [1], [0, 0, 1, 1], [], []>} : vector<4x8xf32>, vector<8x7xf32>, vector<4x7xf32> -> vector<4x7xf32>
    %c0_152 = arith.constant 0 : index
    %c0_153 = arith.constant 0 : index
    %360 = vector.load %arg2[%c0_152, %c0_153] : memref<4x1xf32, #tpu.memory_space<vmem>>, vector<4x1xf32>
    %cst_154 = arith.constant 5.000000e-01 : f32
    %361 = vector.broadcast %cst_154 : f32 to vector<4x1xf32>
    %362 = arith.cmpf ogt, %360, %361 : vector<4x1xf32>
    %363 = vector.shape_cast %362 : vector<4x1xi1> to vector<4x1xi1>
    %364 = vector.broadcast %363 : vector<4x1xi1> to vector<4x7xi1>
    %365 = arith.select %364, %359, %358 : vector<4x7xi1>, vector<4x7xf32>
    %c0_155 = arith.constant 0 : index
    %c0_156 = arith.constant 0 : index
    %366 = vector.load %arg10[%c0_155, %c0_156] : memref<4x7xf32, #tpu.memory_space<vmem>>, vector<4x7xf32>
    tpu.vector_store %arg10[%c0_155, %c0_156], %365 {strides = array<i32>} : memref<4x7xf32, #tpu.memory_space<vmem>>, vector<4x7xf32>,
    return
  }
}

</mosaic_0001>

<llo_original>
// kernel: phylo_tree_forward.1
$region0: #{phylo_tree_forward.1}
  #allocation0 [shape = 'u32[]', space=smem, size = 0x4, offset = 0x4, fixed_abs, tag = 'smem constant byte address 0x4 - core index']
  #allocation1 [shape = 'u32[72,128]{1,0:T(1,128)}', space=vmem, size = 0x9000, scoped, tag = 'internal scratch']
  %s0 = inlined_call_operand.vmem [shape: f32[4,8,17], index: 0, kind: input, shape index: {}]
  %s1 = inlined_call_operand.vmem [shape: f32[4,8], index: 1, kind: input, shape index: {}]
  %s2 = inlined_call_operand.vmem [shape: f32[4,1], index: 2, kind: input, shape index: {}]
  %s3 = inlined_call_operand.vmem [shape: f32[17,32], index: 3, kind: input, shape index: {}]
  %s4 = inlined_call_operand.vmem [shape: f32[2,32,256], index: 4, kind: input, shape index: {}]
  %s5 = inlined_call_operand.vmem [shape: f32[2,128,32], index: 5, kind: input, shape index: {}]
  %s6 = inlined_call_operand.vmem [shape: f32[2,8,128], index: 6, kind: input, shape index: {}]
  %s7 = inlined_call_operand.vmem [shape: f32[2,32], index: 7, kind: input, shape index: {}]
  %s8 = inlined_call_operand.vmem [shape: f32[32,64], index: 8, kind: input, shape index: {}]
  %s9 = inlined_call_operand.vmem [shape: f32[4,128], index: 9, kind: input, shape index: {}]
  %s10 = inlined_call_operand.hbm [shape: f32[4,7], index: 10, kind: output, shape index: {}]
  %s11 = sld [smem:[#allocation0]]
  $region50: #{phylo_tree_forward.1} parent=0
    _
  %s13 = ssub.s32 1, %s11
  %s14 = scalar_select 0, %s13, %s11
  $region1: #{phylo_tree_forward.1} parent=0
    #allocation2 [shape = 'u8[2048]{0}', space=vmem, size = 0x800, scoped, tag = 'output window, operand 0, single buffered']
    #allocation3 [shape = 's32[1]{0}', space=sflag, size = 0x4, scoped, tag = 'scoped memory for phylo_tree_forward.1']
    %15 = vsyncpa [#allocation3], 0
    // Predicated region
    $region2: #{phylo_tree_forward.1} parent=1 // pred_check
      _
    $region3: #{phylo_tree_forward.1} parent=1 // pred_check_branch
      %17 = sbr.rel (0) target = $region5
    $region4: #{phylo_tree_forward.1} parent=1 // pred_region
      _
    $region5: #{phylo_tree_forward.1} parent=1 // pred_fallthru
      _
    // Predicated region
    $region6: #{phylo_tree_forward.1} parent=1 // pred_check
      _
    $region7: #{phylo_tree_forward.1} parent=1 // pred_check_branch
      %19 = sbr.rel (0) target = $region9
    $region8: #{phylo_tree_forward.1} parent=1 // pred_region
      _
    $region9: #{phylo_tree_forward.1} parent=1 // pred_fallthru
      _
    // Predicated region
    $region10: #{phylo_tree_forward.1} parent=1 // pred_check
      _
    $region11: #{phylo_tree_forward.1} parent=1 // pred_check_branch
      %21 = sbr.rel (0) target = $region13
    $region12: #{phylo_tree_forward.1} parent=1 // pred_region
      _
    $region13: #{phylo_tree_forward.1} parent=1 // pred_fallthru
      _
    // Predicated region
    $region14: #{phylo_tree_forward.1} parent=1 // pred_check
      _
    $region15: #{phylo_tree_forward.1} parent=1 // pred_check_branch
      %23 = sbr.rel (0) target = $region17
    $region16: #{phylo_tree_forward.1} parent=1 // pred_region
      _
    $region17: #{phylo_tree_forward.1} parent=1 // pred_fallthru
      _
    // Predicated region
    $region18: #{phylo_tree_forward.1} parent=1 // pred_check
      _
    $region19: #{phylo_tree_forward.1} parent=1 // pred_check_branch
      %25 = sbr.rel (0) target = $region21
    $region20: #{phylo_tree_forward.1} parent=1 // pred_region
      _
    $region21: #{phylo_tree_forward.1} parent=1 // pred_fallthru
      _
    // Predicated region
    $region22: #{phylo_tree_forward.1} parent=1 // pred_check
      _
    $region23: #{phylo_tree_forward.1} parent=1 // pred_check_branch
      %27 = sbr.rel (0) target = $region25
    $region24: #{phylo_tree_forward.1} parent=1 // pred_region
      _
    $region25: #{phylo_tree_forward.1} parent=1 // pred_fallthru
      _
    // Predicated region
    $region26: #{phylo_tree_forward.1} parent=1 // pred_check
      _
    $region27: #{phylo_tree_forward.1} parent=1 // pred_check_branch
      %29 = sbr.rel (0) target = $region29
    $region28: #{phylo_tree_forward.1} parent=1 // pred_region
      _
    $region29: #{phylo_tree_forward.1} parent=1 // pred_fallthru
      _
    // Predicated region
    $region30: #{phylo_tree_forward.1} parent=1 // pred_check
      _
    $region31: #{phylo_tree_forward.1} parent=1 // pred_check_branch
      %31 = sbr.rel (0) target = $region33
    $region32: #{phylo_tree_forward.1} parent=1 // pred_region
      _
    $region33: #{phylo_tree_forward.1} parent=1 // pred_fallthru
      _
    // Predicated region
    $region34: #{phylo_tree_forward.1} parent=1 // pred_check
      _
    $region35: #{phylo_tree_forward.1} parent=1 // pred_check_branch
      %33 = sbr.rel (0) target = $region37
    $region36: #{phylo_tree_forward.1} parent=1 // pred_region
      _
    $region37: #{phylo_tree_forward.1} parent=1 // pred_fallthru
      _
    // Predicated region
    $region38: #{phylo_tree_forward.1} parent=1 // pred_check
      _
    $region39: #{phylo_tree_forward.1} parent=1 // pred_check_branch
      %35 = sbr.rel (0) target = $region41
    $region40: #{phylo_tree_forward.1} parent=1 // pred_region
      _
    $region41: #{phylo_tree_forward.1} parent=1 // pred_fallthru
      _
    %v36 = vld [vmem:[%s0] sm:$0xff]
    %v37 = vld [vmem:[%s0 + $0x8] sm:$0xff]
    %v38 = vld [vmem:[%s0 + $0x10] sm:$0xff]
    %v39 = vld [vmem:[%s0 + $0x18] sm:$0xff]
    %v40 = vld [vmem:[%s3] sm:$0xff]
    %v41 = vld [vmem:[%s3 + $0x8] sm:$0xff]
    %v42 = vld [vmem:[%s3 + $0x10] sm:$0x1]
    %vm43 = vcmask 138240
    %v45 = vsel %vm43, %v36, 0
    %v48 = vsel %vm43, %v37, 0
    %v51 = vsel %vm43, %v38, 0
    %v54 = vsel %vm43, %v39, 0
    %vm56 = vcmask 1040384
    %v58 = vsel %vm56, %v42, 0
    %60 = vmatpush.msra.mxu0 0.0
    %61 = vmatpush.msra.mxu0 0.0
    %62 = vmatpush.msra.mxu0 0.0
    %63 = vmatpush.msra.mxu0 0.0
    %64 = vmatpush.msra.mxu0 0.0
    %65 = vmatpush.msra.mxu0 0.0
    %66 = vmatpush.msra.mxu0 0.0
    %67 = vmatpush.msra.mxu0 0.0
    %68 = vmatpush.msra.mxu0 0.0
    %69 = vmatpush.msra.mxu0 0.0
    %70 = vmatpush.msra.mxu0 0.0
    %71 = vmatpush.msra.mxu0 0.0
    %72 = vmatpush.msra.mxu0 0.0
    %73 = vmatpush.msra.mxu0 %v58
    %74 = vmatpush.msra.mxu0 %v41
    %75 = vmatpush.msra.mxu0 %v40
    %76 = vmatmul.f32.gmra.mxu0 %v45
    %v77 = vpop.f32.mrf.mxu0
    %v78 = vadd.f32 0.0, %v77
    %79 = vmatmul.f32.gmra.mxu0 %v48
    %v80 = vpop.f32.mrf.mxu0
    %v81 = vadd.f32 0.0, %v80
    %82 = vmatmul.f32.gmra.mxu0 %v51
    %v83 = vpop.f32.mrf.mxu0
    %v84 = vadd.f32 0.0, %v83
    %85 = vmatmul.f32.gmra.mxu0 %v54
    %v86 = vpop.f32.mrf.mxu0
    %v87 = vadd.f32 0.0, %v86
    %88 = vdwg.mxu0
    %v89 = vld [vmem:[%s1] sm:$0xf]
    %v91 = vrot.slane %v89, 1
    %v92 = vrot.slane %v89, 2
    %v93 = vrot.slane %v89, 3
    %v94 = vld [vmem:[%s4] sm:$0xff]
    %v95 = vld [vmem:[%s4 + $0x10] sm:$0xff]
    %v96 = vld [vmem:[%s4 + $0x20] sm:$0xff]
    %v97 = vld [vmem:[%s4 + $0x30] sm:$0xff]
    %v98 = vld [vmem:[%s4 + $0x8] sm:$0xff]
    %v99 = vld [vmem:[%s4 + $0x18] sm:$0xff]
    %v100 = vld [vmem:[%s4 + $0x28] sm:$0xff]
    %v101 = vld [vmem:[%s4 + $0x38] sm:$0xff]
    %v102 = vld [vmem:[%s5] sm:$0xff]
    %v103 = vld [vmem:[%s5 + $0x8] sm:$0xff]
    %v104 = vld [vmem:[%s5 + $0x10] sm:$0xff]
    %v105 = vld [vmem:[%s5 + $0x18] sm:$0xff]
    %v106 = vld [vmem:[%s5 + $0x20] sm:$0xff]
    %v107 = vld [vmem:[%s5 + $0x28] sm:$0xff]
    %v108 = vld [vmem:[%s5 + $0x30] sm:$0xff]
    %v109 = vld [vmem:[%s5 + $0x38] sm:$0xff]
    %v110 = vld [vmem:[%s5 + $0x40] sm:$0xff]
    %v111 = vld [vmem:[%s5 + $0x48] sm:$0xff]
    %v112 = vld [vmem:[%s5 + $0x50] sm:$0xff]
    %v113 = vld [vmem:[%s5 + $0x58] sm:$0xff]
    %v114 = vld [vmem:[%s5 + $0x60] sm:$0xff]
    %v115 = vld [vmem:[%s5 + $0x68] sm:$0xff]
    %v116 = vld [vmem:[%s5 + $0x70] sm:$0xff]
    %v117 = vld [vmem:[%s5 + $0x78] sm:$0xff]
    %v118 = vld [vmem:[%s6] sm:$0x1]
    %v119 = vld [vmem:[%s6 + $0x1] sm:$0x1]
    %v120 = vld [vmem:[%s6 + $0x2] sm:$0x1]
    %v121 = vld [vmem:[%s6 + $0x3] sm:$0x1]
    %v122 = vld [vmem:[%s6 + $0x4] sm:$0x1]
    %v123 = vld [vmem:[%s6 + $0x5] sm:$0x1]
    %v124 = vld [vmem:[%s6 + $0x6] sm:$0x1]
    %v125 = vld [vmem:[%s6 + $0x7] sm:$0x1]
    %vm126 = vcmask 261120
    %v127 = vsel %vm126, %v78, 0.0
    %128 = vadd.xlane.f32.xlu0 %v127
    %v129 = vpop.xlane.xlu0 %128
    %v130 = vsel %vm126, %v81, 0.0
    %131 = vadd.xlane.f32.xlu0 %v130
    %v132 = vpop.xlane.xlu0 %131
    %v133 = vsel %vm126, %v84, 0.0
    %134 = vadd.xlane.f32.xlu0 %v133
    %v135 = vpop.xlane.xlu0 %134
    %v136 = vsel %vm126, %v87, 0.0
    %137 = vadd.xlane.f32.xlu0 %v136
    %v138 = vpop.xlane.xlu0 %137
    %v139 = vrcp.pop 32.0
    %v140 = vmul.f32 32.0, %v139
    %v141 = vsub.f32 1.0, %v140
    %v142 = vmul.f32 %v139, %v141
    %v143 = vadd.f32 %v139, %v142
    %vm144 = vweird.f32 %v139
    %v145 = vsel %vm144, %v139, %v143
    %v146 = vmul.f32 %v129, %v145
    %v147 = vmul.f32 %v132, %v145
    %v148 = vmul.f32 %v135, %v145
    %v149 = vmul.f32 %v138, %v145
    %v150 = vsub.f32 %v78, %v146
    %v151 = vsub.f32 %v81, %v147
    %v152 = vsub.f32 %v84, %v148
    %v153 = vsub.f32 %v87, %v149
    %v154 = vmul.f32 %v150, %v150
    %v155 = vmul.f32 %v151, %v151
    %v156 = vmul.f32 %v152, %v152
    %v157 = vmul.f32 %v153, %v153
    %v158 = vsel %vm126, %v154, 0.0
    %159 = vadd.xlane.f32.xlu0 %v158
    %v160 = vpop.xlane.xlu0 %159
    %v161 = vsel %vm126, %v155, 0.0
    %162 = vadd.xlane.f32.xlu0 %v161
    %v163 = vpop.xlane.xlu0 %162
    %v164 = vsel %vm126, %v156, 0.0
    %165 = vadd.xlane.f32.xlu0 %v164
    %v166 = vpop.xlane.xlu0 %165
    %v167 = vsel %vm126, %v157, 0.0
    %168 = vadd.xlane.f32.xlu0 %v167
    %v169 = vpop.xlane.xlu0 %168
    %v170 = vmul.f32 %v160, %v145
    %v171 = vmul.f32 %v163, %v145
    %v172 = vmul.f32 %v166, %v145
    %v173 = vmul.f32 %v169, %v145
    %v174 = vadd.f32 %v170, 1e-06
    %v175 = vadd.f32 %v171, 1e-06
    %v176 = vadd.f32 %v172, 1e-06
    %v177 = vadd.f32 %v173, 1e-06
    %v178 = vrsqrt.pop %v174
    %v179 = vmul.f32 %v178, %v174
    %v180 = vmul.f32 %v179, %v178
    %v181 = vmul.f32 0.5, %v180
    %v182 = vsub.f32 1.5, %v181
    %v183 = vmul.f32 %v178, %v182
    %vm184 = vweird.f32 %v174
    %vm185 = vweird.f32 %v178
    %vm186 = vmor %vm184, %vm185
    %v187 = vsel %vm186, %v178, %v183
    %v188 = vrsqrt.pop %v175
    %v189 = vmul.f32 %v188, %v175
    %v190 = vmul.f32 %v189, %v188
    %v191 = vmul.f32 0.5, %v190
    %v192 = vsub.f32 1.5, %v191
    %v193 = vmul.f32 %v188, %v192
    %vm194 = vweird.f32 %v175
    %vm195 = vweird.f32 %v188
    %vm196 = vmor %vm194, %vm195
    %v197 = vsel %vm196, %v188, %v193
    %v198 = vrsqrt.pop %v176
    %v199 = vmul.f32 %v198, %v176
    %v200 = vmul.f32 %v199, %v198
    %v201 = vmul.f32 0.5, %v200
    %v202 = vsub.f32 1.5, %v201
    %v203 = vmul.f32 %v198, %v202
    %vm204 = vweird.f32 %v176
    %vm205 = vweird.f32 %v198
    %vm206 = vmor %vm204, %vm205
    %v207 = vsel %vm206, %v198, %v203
    %v208 = vrsqrt.pop %v177
    %v209 = vmul.f32 %v208, %v177
    %v210 = vmul.f32 %v209, %v208
    %v211 = vmul.f32 0.5, %v210
    %v212 = vsub.f32 1.5, %v211
    %v213 = vmul.f32 %v208, %v212
    %vm214 = vweird.f32 %v177
    %vm215 = vweird.f32 %v208
    %vm216 = vmor %vm214, %vm215
    %v217 = vsel %vm216, %v208, %v213
    %v218 = vmul.f32 %v150, %v187
    %v219 = vmul.f32 %v151, %v197
    %v220 = vmul.f32 %v152, %v207
    %v221 = vmul.f32 %v153, %v217
    %v222 = vperm.slane %v118, 0
    %v223 = vmul.f32 %v218, %v222
    %v224 = vmul.f32 %v219, %v222
    %v225 = vmul.f32 %v220, %v222
    %v226 = vmul.f32 %v221, %v222
    %v227 = vperm.slane %v119, 0
    %v228 = vadd.f32 %v223, %v227
    %v229 = vadd.f32 %v224, %v227
    %v230 = vadd.f32 %v225, %v227
    %v231 = vadd.f32 %v226, %v227
    %v232 = vperm.slane %v125, 0
    %v234 = vsel %vm126, %v228, 0
    %v237 = vsel %vm126, %v229, 0
    %v240 = vsel %vm126, %v230, 0
    %v243 = vsel %vm126, %v231, 0
    %245 = vmatpush.msra.mxu0 0.0
    %246 = vmatpush.msra.mxu0 0.0
    %247 = vmatpush.msra.mxu0 0.0
    %248 = vmatpush.msra.mxu0 0.0
    %249 = vmatpush.msra.mxu0 0.0
    %250 = vmatpush.msra.mxu0 0.0
    %251 = vmatpush.msra.mxu0 0.0
    %252 = vmatpush.msra.mxu0 0.0
    %253 = vmatpush.msra.mxu0 0.0
    %254 = vmatpush.msra.mxu0 0.0
    %255 = vmatpush.msra.mxu0 0.0
    %256 = vmatpush.msra.mxu0 0.0
    %257 = vmatpush.msra.mxu0 %v97
    %258 = vmatpush.msra.mxu0 %v96
    %259 = vmatpush.msra.mxu0 %v95
    %260 = vmatpush.msra.mxu0 %v94
    %261 = vmatmul.f32.gmra.mxu0 %v234
    %v262 = vpop.f32.mrf.mxu0
    %v263 = vadd.f32 %v232, %v262
    %264 = vmatmul.f32.gmra.mxu0 %v237
    %v265 = vpop.f32.mrf.mxu0
    %v266 = vadd.f32 %v232, %v265
    %267 = vmatmul.f32.gmra.mxu0 %v240
    %v268 = vpop.f32.mrf.mxu0
    %v269 = vadd.f32 %v232, %v268
    %270 = vmatmul.f32.gmra.mxu0 %v243
    %v271 = vpop.f32.mrf.mxu0
    %v272 = vadd.f32 %v232, %v271
    %273 = vdwg.mxu0
    %v274 = vmul.f32 %v263, 0.35355338
    %v275 = vmul.f32 %v266, 0.35355338
    %v276 = vmul.f32 %v269, 0.35355338
    %v277 = vmul.f32 %v272, 0.35355338
    %279 = vrot.lane.b32.xlu0 %v263, 96
    %v280 = vpop.permute.xlu0 %279
    %vm281 = vcmask 64512
    %v283 = vsel %vm281, %v274, 0
    %v285 = vsel %vm281, %v280, 0
    %287 = vmatpush.xpose.msra.mxu0 0.0
    %288 = vmatpush.xpose.msra.mxu0 0.0
    %289 = vmatpush.xpose.msra.mxu0 0.0
    %290 = vmatpush.xpose.msra.mxu0 0.0
    %291 = vmatpush.xpose.msra.mxu0 0.0
    %292 = vmatpush.xpose.msra.mxu0 0.0
    %293 = vmatpush.xpose.msra.mxu0 0.0
    %294 = vmatpush.xpose.msra.mxu0 0.0
    %295 = vmatpush.xpose.msra.mxu0 0.0
    %296 = vmatpush.xpose.msra.mxu0 0.0
    %297 = vmatpush.xpose.msra.mxu0 0.0
    %298 = vmatpush.xpose.msra.mxu0 0.0
    %299 = vmatpush.xpose.msra.mxu0 0.0
    %300 = vmatpush.xpose.msra.mxu0 0.0
    %301 = vmatpush.xpose.msra.mxu0 0.0
    %302 = vmatpush.xpose.msra.mxu0 %v285
    %303 = vmatmul.f32.gmra.mxu0 %v283
    %v304 = vpop.f32.mrf.mxu0
    %v305 = vadd.f32 0.0, %v304
    %306 = vdwg.mxu0
    %308 = vrot.lane.b32.xlu0 %v266, 96
    %v309 = vpop.permute.xlu0 %308
    %v311 = vsel %vm281, %v275, 0
    %v313 = vsel %vm281, %v309, 0
    %315 = vmatpush.xpose.msra.mxu0 0.0
    %316 = vmatpush.xpose.msra.mxu0 0.0
    %317 = vmatpush.xpose.msra.mxu0 0.0
    %318 = vmatpush.xpose.msra.mxu0 0.0
    %319 = vmatpush.xpose.msra.mxu0 0.0
    %320 = vmatpush.xpose.msra.mxu0 0.0
    %321 = vmatpush.xpose.msra.mxu0 0.0
    %322 = vmatpush.xpose.msra.mxu0 0.0
    %323 = vmatpush.xpose.msra.mxu0 0.0
    %324 = vmatpush.xpose.msra.mxu0 0.0
    %325 = vmatpush.xpose.msra.mxu0 0.0
    %326 = vmatpush.xpose.msra.mxu0 0.0
    %327 = vmatpush.xpose.msra.mxu0 0.0
    %328 = vmatpush.xpose.msra.mxu0 0.0
    %329 = vmatpush.xpose.msra.mxu0 0.0
    %330 = vmatpush.xpose.msra.mxu0 %v313
    %331 = vmatmul.f32.gmra.mxu0 %v311
    %v332 = vpop.f32.mrf.mxu0
    %v333 = vadd.f32 0.0, %v332
    %334 = vdwg.mxu0
    %336 = vrot.lane.b32.xlu0 %v269, 96
    %v337 = vpop.permute.xlu0 %336
    %v339 = vsel %vm281, %v276, 0
    %v341 = vsel %vm281, %v337, 0
    %343 = vmatpush.xpose.msra.mxu0 0.0
    %344 = vmatpush.xpose.msra.mxu0 0.0
    %345 = vmatpush.xpose.msra.mxu0 0.0
    %346 = vmatpush.xpose.msra.mxu0 0.0
    %347 = vmatpush.xpose.msra.mxu0 0.0
    %348 = vmatpush.xpose.msra.mxu0 0.0
    %349 = vmatpush.xpose.msra.mxu0 0.0
    %350 = vmatpush.xpose.msra.mxu0 0.0
    %351 = vmatpush.xpose.msra.mxu0 0.0
    %352 = vmatpush.xpose.msra.mxu0 0.0
    %353 = vmatpush.xpose.msra.mxu0 0.0
    %354 = vmatpush.xpose.msra.mxu0 0.0
    %355 = vmatpush.xpose.msra.mxu0 0.0
    %356 = vmatpush.xpose.msra.mxu0 0.0
    %357 = vmatpush.xpose.msra.mxu0 0.0
    %358 = vmatpush.xpose.msra.mxu0 %v341
    %359 = vmatmul.f32.gmra.mxu0 %v339
    %v360 = vpop.f32.mrf.mxu0
    %v361 = vadd.f32 0.0, %v360
    %362 = vdwg.mxu0
    %364 = vrot.lane.b32.xlu0 %v272, 96
    %v365 = vpop.permute.xlu0 %364
    %v367 = vsel %vm281, %v277, 0
    %v369 = vsel %vm281, %v365, 0
    %371 = vmatpush.xpose.msra.mxu0 0.0
    %372 = vmatpush.xpose.msra.mxu0 0.0
    %373 = vmatpush.xpose.msra.mxu0 0.0
    %374 = vmatpush.xpose.msra.mxu0 0.0
    %375 = vmatpush.xpose.msra.mxu0 0.0
    %376 = vmatpush.xpose.msra.mxu0 0.0
    %377 = vmatpush.xpose.msra.mxu0 0.0
    %378 = vmatpush.xpose.msra.mxu0 0.0
    %379 = vmatpush.xpose.msra.mxu0 0.0
    %380 = vmatpush.xpose.msra.mxu0 0.0
    %381 = vmatpush.xpose.msra.mxu0 0.0
    %382 = vmatpush.xpose.msra.mxu0 0.0
    %383 = vmatpush.xpose.msra.mxu0 0.0
    %384 = vmatpush.xpose.msra.mxu0 0.0
    %385 = vmatpush.xpose.msra.mxu0 0.0
    %386 = vmatpush.xpose.msra.mxu0 %v369
    %387 = vmatmul.f32.gmra.mxu0 %v367
    %v388 = vpop.f32.mrf.mxu0
    %v389 = vadd.f32 0.0, %v388
    %390 = vdwg.mxu0
    %391 = vrot.lane.b32.xlu0 %v274, 120
    %v392 = vpop.permute.xlu0 %391
    %393 = vrot.lane.b32.xlu0 %v263, 88
    %v394 = vpop.permute.xlu0 %393
    %v395 = vsel %vm281, %v392, 0
    %v397 = vsel %vm281, %v394, 0
    %399 = vmatpush.xpose.msra.mxu0 0.0
    %400 = vmatpush.xpose.msra.mxu0 0.0
    %401 = vmatpush.xpose.msra.mxu0 0.0
    %402 = vmatpush.xpose.msra.mxu0 0.0
    %403 = vmatpush.xpose.msra.mxu0 0.0
    %404 = vmatpush.xpose.msra.mxu0 0.0
    %405 = vmatpush.xpose.msra.mxu0 0.0
    %406 = vmatpush.xpose.msra.mxu0 0.0
    %407 = vmatpush.xpose.msra.mxu0 0.0
    %408 = vmatpush.xpose.msra.mxu0 0.0
    %409 = vmatpush.xpose.msra.mxu0 0.0
    %410 = vmatpush.xpose.msra.mxu0 0.0
    %411 = vmatpush.xpose.msra.mxu0 0.0
    %412 = vmatpush.xpose.msra.mxu0 0.0
    %413 = vmatpush.xpose.msra.mxu0 0.0
    %414 = vmatpush.xpose.msra.mxu0 %v397
    %415 = vmatmul.f32.gmra.mxu0 %v395
    %v416 = vpop.f32.mrf.mxu0
    %v417 = vadd.f32 0.0, %v416
    %418 = vdwg.mxu0
    %419 = vrot.lane.b32.xlu0 %v275, 120
    %v420 = vpop.permute.xlu0 %419
    %421 = vrot.lane.b32.xlu0 %v266, 88
    %v422 = vpop.permute.xlu0 %421
    %v423 = vsel %vm281, %v420, 0
    %v425 = vsel %vm281, %v422, 0
    %427 = vmatpush.xpose.msra.mxu0 0.0
    %428 = vmatpush.xpose.msra.mxu0 0.0
    %429 = vmatpush.xpose.msra.mxu0 0.0
    %430 = vmatpush.xpose.msra.mxu0 0.0
    %431 = vmatpush.xpose.msra.mxu0 0.0
    %432 = vmatpush.xpose.msra.mxu0 0.0
    %433 = vmatpush.xpose.msra.mxu0 0.0
    %434 = vmatpush.xpose.msra.mxu0 0.0
    %435 = vmatpush.xpose.msra.mxu0 0.0
    %436 = vmatpush.xpose.msra.mxu0 0.0
    %437 = vmatpush.xpose.msra.mxu0 0.0
    %438 = vmatpush.xpose.msra.mxu0 0.0
    %439 = vmatpush.xpose.msra.mxu0 0.0
    %440 = vmatpush.xpose.msra.mxu0 0.0
    %441 = vmatpush.xpose.msra.mxu0 0.0
    %442 = vmatpush.xpose.msra.mxu0 %v425
    %443 = vmatmul.f32.gmra.mxu0 %v423
    %v444 = vpop.f32.mrf.mxu0
    %v445 = vadd.f32 0.0, %v444
    %446 = vdwg.mxu0
    %447 = vrot.lane.b32.xlu0 %v276, 120
    %v448 = vpop.permute.xlu0 %447
    %449 = vrot.lane.b32.xlu0 %v269, 88
    %v450 = vpop.permute.xlu0 %449
    %v451 = vsel %vm281, %v448, 0
    %v453 = vsel %vm281, %v450, 0
    %455 = vmatpush.xpose.msra.mxu0 0.0
    %456 = vmatpush.xpose.msra.mxu0 0.0
    %457 = vmatpush.xpose.msra.mxu0 0.0
    %458 = vmatpush.xpose.msra.mxu0 0.0
    %459 = vmatpush.xpose.msra.mxu0 0.0
    %460 = vmatpush.xpose.msra.mxu0 0.0
    %461 = vmatpush.xpose.msra.mxu0 0.0
    %462 = vmatpush.xpose.msra.mxu0 0.0
    %463 = vmatpush.xpose.msra.mxu0 0.0
    %464 = vmatpush.xpose.msra.mxu0 0.0
    %465 = vmatpush.xpose.msra.mxu0 0.0
    %466 = vmatpush.xpose.msra.mxu0 0.0
    %467 = vmatpush.xpose.msra.mxu0 0.0
    %468 = vmatpush.xpose.msra.mxu0 0.0
    %469 = vmatpush.xpose.msra.mxu0 0.0
    %470 = vmatpush.xpose.msra.mxu0 %v453
    %471 = vmatmul.f32.gmra.mxu0 %v451
    %v472 = vpop.f32.mrf.mxu0
    %v473 = vadd.f32 0.0, %v472
    %474 = vdwg.mxu0
    %475 = vrot.lane.b32.xlu0 %v277, 120
    %v476 = vpop.permute.xlu0 %475
    %477 = vrot.lane.b32.xlu0 %v272, 88
    %v478 = vpop.permute.xlu0 %477
    %v479 = vsel %vm281, %v476, 0
    %v481 = vsel %vm281, %v478, 0
    %483 = vmatpush.xpose.msra.mxu0 0.0
    %484 = vmatpush.xpose.msra.mxu0 0.0
    %485 = vmatpush.xpose.msra.mxu0 0.0
    %486 = vmatpush.xpose.msra.mxu0 0.0
    %487 = vmatpush.xpose.msra.mxu0 0.0
    %488 = vmatpush.xpose.msra.mxu0 0.0
    %489 = vmatpush.xpose.msra.mxu0 0.0
    %490 = vmatpush.xpose.msra.mxu0 0.0
    %491 = vmatpush.xpose.msra.mxu0 0.0
    %492 = vmatpush.xpose.msra.mxu0 0.0
    %493 = vmatpush.xpose.msra.mxu0 0.0
    %494 = vmatpush.xpose.msra.mxu0 0.0
    %495 = vmatpush.xpose.msra.mxu0 0.0
    %496 = vmatpush.xpose.msra.mxu0 0.0
    %497 = vmatpush.xpose.msra.mxu0 0.0
    %498 = vmatpush.xpose.msra.mxu0 %v481
    %499 = vmatmul.f32.gmra.mxu0 %v479
    %v500 = vpop.f32.mrf.mxu0
    %v501 = vadd.f32 0.0, %v500
    %502 = vdwg.mxu0
    %503 = vrot.lane.b32.xlu0 %v274, 112
    %v504 = vpop.permute.xlu0 %503
    %505 = vrot.lane.b32.xlu0 %v263, 80
    %v506 = vpop.permute.xlu0 %505
    %v507 = vsel %vm281, %v504, 0
    %v509 = vsel %vm281, %v506, 0
    %511 = vmatpush.xpose.msra.mxu0 0.0
    %512 = vmatpush.xpose.msra.mxu0 0.0
    %513 = vmatpush.xpose.msra.mxu0 0.0
    %514 = vmatpush.xpose.msra.mxu0 0.0
    %515 = vmatpush.xpose.msra.mxu0 0.0
    %516 = vmatpush.xpose.msra.mxu0 0.0
    %517 = vmatpush.xpose.msra.mxu0 0.0
    %518 = vmatpush.xpose.msra.mxu0 0.0
    %519 = vmatpush.xpose.msra.mxu0 0.0
    %520 = vmatpush.xpose.msra.mxu0 0.0
    %521 = vmatpush.xpose.msra.mxu0 0.0
    %522 = vmatpush.xpose.msra.mxu0 0.0
    %523 = vmatpush.xpose.msra.mxu0 0.0
    %524 = vmatpush.xpose.msra.mxu0 0.0
    %525 = vmatpush.xpose.msra.mxu0 0.0
    %526 = vmatpush.xpose.msra.mxu0 %v509
    %527 = vmatmul.f32.gmra.mxu0 %v507
    %v528 = vpop.f32.mrf.mxu0
    %v529 = vadd.f32 0.0, %v528
    %530 = vdwg.mxu0
    %531 = vrot.lane.b32.xlu0 %v275, 112
    %v532 = vpop.permute.xlu0 %531
    %533 = vrot.lane.b32.xlu0 %v266, 80
    %v534 = vpop.permute.xlu0 %533
    %v535 = vsel %vm281, %v532, 0
    %v537 = vsel %vm281, %v534, 0
    %539 = vmatpush.xpose.msra.mxu0 0.0
    %540 = vmatpush.xpose.msra.mxu0 0.0
    %541 = vmatpush.xpose.msra.mxu0 0.0
    %542 = vmatpush.xpose.msra.mxu0 0.0
    %543 = vmatpush.xpose.msra.mxu0 0.0
    %544 = vmatpush.xpose.msra.mxu0 0.0
    %545 = vmatpush.xpose.msra.mxu0 0.0
    %546 = vmatpush.xpose.msra.mxu0 0.0
    %547 = vmatpush.xpose.msra.mxu0 0.0
    %548 = vmatpush.xpose.msra.mxu0 0.0
    %549 = vmatpush.xpose.msra.mxu0 0.0
    %550 = vmatpush.xpose.msra.mxu0 0.0
    %551 = vmatpush.xpose.msra.mxu0 0.0
    %552 = vmatpush.xpose.msra.mxu0 0.0
    %553 = vmatpush.xpose.msra.mxu0 0.0
    %554 = vmatpush.xpose.msra.mxu0 %v537
    %555 = vmatmul.f32.gmra.mxu0 %v535
    %v556 = vpop.f32.mrf.mxu0
    %v557 = vadd.f32 0.0, %v556
    %558 = vdwg.mxu0
    %559 = vrot.lane.b32.xlu0 %v276, 112
    %v560 = vpop.permute.xlu0 %559
    %561 = vrot.lane.b32.xlu0 %v269, 80
    %v562 = vpop.permute.xlu0 %561
    %v563 = vsel %vm281, %v560, 0
    %v565 = vsel %vm281, %v562, 0
    %567 = vmatpush.xpose.msra.mxu0 0.0
    %568 = vmatpush.xpose.msra.mxu0 0.0
    %569 = vmatpush.xpose.msra.mxu0 0.0
    %570 = vmatpush.xpose.msra.mxu0 0.0
    %571 = vmatpush.xpose.msra.mxu0 0.0
    %572 = vmatpush.xpose.msra.mxu0 0.0
    %573 = vmatpush.xpose.msra.mxu0 0.0
    %574 = vmatpush.xpose.msra.mxu0 0.0
    %575 = vmatpush.xpose.msra.mxu0 0.0
    %576 = vmatpush.xpose.msra.mxu0 0.0
    %577 = vmatpush.xpose.msra.mxu0 0.0
    %578 = vmatpush.xpose.msra.mxu0 0.0
    %579 = vmatpush.xpose.msra.mxu0 0.0
    %580 = vmatpush.xpose.msra.mxu0 0.0
    %581 = vmatpush.xpose.msra.mxu0 0.0
    %582 = vmatpush.xpose.msra.mxu0 %v565
    %583 = vmatmul.f32.gmra.mxu0 %v563
    %v584 = vpop.f32.mrf.mxu0
    %v585 = vadd.f32 0.0, %v584
    %586 = vdwg.mxu0
    %587 = vrot.lane.b32.xlu0 %v277, 112
    %v588 = vpop.permute.xlu0 %587
    %589 = vrot.lane.b32.xlu0 %v272, 80
    %v590 = vpop.permute.xlu0 %589
    %v591 = vsel %vm281, %v588, 0
    %v593 = vsel %vm281, %v590, 0
    %595 = vmatpush.xpose.msra.mxu0 0.0
    %596 = vmatpush.xpose.msra.mxu0 0.0
    %597 = vmatpush.xpose.msra.mxu0 0.0
    %598 = vmatpush.xpose.msra.mxu0 0.0
    %599 = vmatpush.xpose.msra.mxu0 0.0
    %600 = vmatpush.xpose.msra.mxu0 0.0
    %601 = vmatpush.xpose.msra.mxu0 0.0
    %602 = vmatpush.xpose.msra.mxu0 0.0
    %603 = vmatpush.xpose.msra.mxu0 0.0
    %604 = vmatpush.xpose.msra.mxu0 0.0
    %605 = vmatpush.xpose.msra.mxu0 0.0
    %606 = vmatpush.xpose.msra.mxu0 0.0
    %607 = vmatpush.xpose.msra.mxu0 0.0
    %608 = vmatpush.xpose.msra.mxu0 0.0
    %609 = vmatpush.xpose.msra.mxu0 0.0
    %610 = vmatpush.xpose.msra.mxu0 %v593
    %611 = vmatmul.f32.gmra.mxu0 %v591
    %v612 = vpop.f32.mrf.mxu0
    %v613 = vadd.f32 0.0, %v612
    %614 = vdwg.mxu0
    %615 = vrot.lane.b32.xlu0 %v274, 104
    %v616 = vpop.permute.xlu0 %615
    %617 = vrot.lane.b32.xlu0 %v263, 72
    %v618 = vpop.permute.xlu0 %617
    %v619 = vsel %vm281, %v616, 0
    %v621 = vsel %vm281, %v618, 0
    %623 = vmatpush.xpose.msra.mxu0 0.0
    %624 = vmatpush.xpose.msra.mxu0 0.0
    %625 = vmatpush.xpose.msra.mxu0 0.0
    %626 = vmatpush.xpose.msra.mxu0 0.0
    %627 = vmatpush.xpose.msra.mxu0 0.0
    %628 = vmatpush.xpose.msra.mxu0 0.0
    %629 = vmatpush.xpose.msra.mxu0 0.0
    %630 = vmatpush.xpose.msra.mxu0 0.0
    %631 = vmatpush.xpose.msra.mxu0 0.0
    %632 = vmatpush.xpose.msra.mxu0 0.0
    %633 = vmatpush.xpose.msra.mxu0 0.0
    %634 = vmatpush.xpose.msra.mxu0 0.0
    %635 = vmatpush.xpose.msra.mxu0 0.0
    %636 = vmatpush.xpose.msra.mxu0 0.0
    %637 = vmatpush.xpose.msra.mxu0 0.0
    %638 = vmatpush.xpose.msra.mxu0 %v621
    %639 = vmatmul.f32.gmra.mxu0 %v619
    %v640 = vpop.f32.mrf.mxu0
    %v641 = vadd.f32 0.0, %v640
    %642 = vdwg.mxu0
    %643 = vrot.lane.b32.xlu0 %v275, 104
    %v644 = vpop.permute.xlu0 %643
    %645 = vrot.lane.b32.xlu0 %v266, 72
    %v646 = vpop.permute.xlu0 %645
    %v647 = vsel %vm281, %v644, 0
    %v649 = vsel %vm281, %v646, 0
    %651 = vmatpush.xpose.msra.mxu0 0.0
    %652 = vmatpush.xpose.msra.mxu0 0.0
    %653 = vmatpush.xpose.msra.mxu0 0.0
    %654 = vmatpush.xpose.msra.mxu0 0.0
    %655 = vmatpush.xpose.msra.mxu0 0.0
    %656 = vmatpush.xpose.msra.mxu0 0.0
    %657 = vmatpush.xpose.msra.mxu0 0.0
    %658 = vmatpush.xpose.msra.mxu0 0.0
    %659 = vmatpush.xpose.msra.mxu0 0.0
    %660 = vmatpush.xpose.msra.mxu0 0.0
    %661 = vmatpush.xpose.msra.mxu0 0.0
    %662 = vmatpush.xpose.msra.mxu0 0.0
    %663 = vmatpush.xpose.msra.mxu0 0.0
    %664 = vmatpush.xpose.msra.mxu0 0.0
    %665 = vmatpush.xpose.msra.mxu0 0.0
    %666 = vmatpush.xpose.msra.mxu0 %v649
    %667 = vmatmul.f32.gmra.mxu0 %v647
    %v668 = vpop.f32.mrf.mxu0
    %v669 = vadd.f32 0.0, %v668
    %670 = vdwg.mxu0
    %671 = vrot.lane.b32.xlu0 %v276, 104
    %v672 = vpop.permute.xlu0 %671
    %673 = vrot.lane.b32.xlu0 %v269, 72
    %v674 = vpop.permute.xlu0 %673
    %v675 = vsel %vm281, %v672, 0
    %v677 = vsel %vm281, %v674, 0
    %679 = vmatpush.xpose.msra.mxu0 0.0
    %680 = vmatpush.xpose.msra.mxu0 0.0
    %681 = vmatpush.xpose.msra.mxu0 0.0
    %682 = vmatpush.xpose.msra.mxu0 0.0
    %683 = vmatpush.xpose.msra.mxu0 0.0
    %684 = vmatpush.xpose.msra.mxu0 0.0
    %685 = vmatpush.xpose.msra.mxu0 0.0
    %686 = vmatpush.xpose.msra.mxu0 0.0
    %687 = vmatpush.xpose.msra.mxu0 0.0
    %688 = vmatpush.xpose.msra.mxu0 0.0
    %689 = vmatpush.xpose.msra.mxu0 0.0
    %690 = vmatpush.xpose.msra.mxu0 0.0
    %691 = vmatpush.xpose.msra.mxu0 0.0
    %692 = vmatpush.xpose.msra.mxu0 0.0
    %693 = vmatpush.xpose.msra.mxu0 0.0
    %694 = vmatpush.xpose.msra.mxu0 %v677
    %695 = vmatmul.f32.gmra.mxu0 %v675
    %v696 = vpop.f32.mrf.mxu0
    %v697 = vadd.f32 0.0, %v696
    %698 = vdwg.mxu0
    %699 = vrot.lane.b32.xlu0 %v277, 104
    %v700 = vpop.permute.xlu0 %699
    %701 = vrot.lane.b32.xlu0 %v272, 72
    %v702 = vpop.permute.xlu0 %701
    %v703 = vsel %vm281, %v700, 0
    %v705 = vsel %vm281, %v702, 0
    %707 = vmatpush.xpose.msra.mxu0 0.0
    %708 = vmatpush.xpose.msra.mxu0 0.0
    %709 = vmatpush.xpose.msra.mxu0 0.0
    %710 = vmatpush.xpose.msra.mxu0 0.0
    %711 = vmatpush.xpose.msra.mxu0 0.0
    %712 = vmatpush.xpose.msra.mxu0 0.0
    %713 = vmatpush.xpose.msra.mxu0 0.0
    %714 = vmatpush.xpose.msra.mxu0 0.0
    %715 = vmatpush.xpose.msra.mxu0 0.0
    %716 = vmatpush.xpose.msra.mxu0 0.0
    %717 = vmatpush.xpose.msra.mxu0 0.0
    %718 = vmatpush.xpose.msra.mxu0 0.0
    %719 = vmatpush.xpose.msra.mxu0 0.0
    %720 = vmatpush.xpose.msra.mxu0 0.0
    %721 = vmatpush.xpose.msra.mxu0 0.0
    %722 = vmatpush.xpose.msra.mxu0 %v705
    %723 = vmatmul.f32.gmra.mxu0 %v703
    %v724 = vpop.f32.mrf.mxu0
    %v725 = vadd.f32 0.0, %v724
    %726 = vdwg.mxu0
    %v727 = vperm.slane %v89, 0
    %v728 = vperm.slane %v91, 0
    %v729 = vperm.slane %v92, 0
    %v730 = vperm.slane %v93, 0
    %v735 = vadd.f32 %v305, %v727
    %v736 = vadd.f32 %v333, %v728
    %v737 = vadd.f32 %v361, %v729
    %v738 = vadd.f32 %v389, %v730
    %v739 = vadd.f32 %v417, %v727
    %v740 = vadd.f32 %v445, %v728
    %v741 = vadd.f32 %v473, %v729
    %v742 = vadd.f32 %v501, %v730
    %v743 = vadd.f32 %v529, %v727
    %v744 = vadd.f32 %v557, %v728
    %v745 = vadd.f32 %v585, %v729
    %v746 = vadd.f32 %v613, %v730
    %v747 = vadd.f32 %v641, %v727
    %v748 = vadd.f32 %v669, %v728
    %v749 = vadd.f32 %v697, %v729
    %v750 = vadd.f32 %v725, %v730
    %v751 = vsel %vm281, %v735, -inf
    %752 = vmax.xlane.f32.xlu0 %v751
    %v753 = vpop.xlane.xlu0 %752
    %v754 = vsel %vm281, %v736, -inf
    %755 = vmax.xlane.f32.xlu0 %v754
    %v756 = vpop.xlane.xlu0 %755
    %v757 = vsel %vm281, %v737, -inf
    %758 = vmax.xlane.f32.xlu0 %v757
    %v759 = vpop.xlane.xlu0 %758
    %v760 = vsel %vm281, %v738, -inf
    %761 = vmax.xlane.f32.xlu0 %v760
    %v762 = vpop.xlane.xlu0 %761
    %v763 = vsel %vm281, %v739, -inf
    %764 = vmax.xlane.f32.xlu0 %v763
    %v765 = vpop.xlane.xlu0 %764
    %v766 = vsel %vm281, %v740, -inf
    %767 = vmax.xlane.f32.xlu0 %v766
    %v768 = vpop.xlane.xlu0 %767
    %v769 = vsel %vm281, %v741, -inf
    %770 = vmax.xlane.f32.xlu0 %v769
    %v771 = vpop.xlane.xlu0 %770
    %v772 = vsel %vm281, %v742, -inf
    %773 = vmax.xlane.f32.xlu0 %v772
    %v774 = vpop.xlane.xlu0 %773
    %v775 = vsel %vm281, %v743, -inf
    %776 = vmax.xlane.f32.xlu0 %v775
    %v777 = vpop.xlane.xlu0 %776
    %v778 = vsel %vm281, %v744, -inf
    %779 = vmax.xlane.f32.xlu0 %v778
    %v780 = vpop.xlane.xlu0 %779
    %v781 = vsel %vm281, %v745, -inf
    %782 = vmax.xlane.f32.xlu0 %v781
    %v783 = vpop.xlane.xlu0 %782
    %v784 = vsel %vm281, %v746, -inf
    %785 = vmax.xlane.f32.xlu0 %v784
    %v786 = vpop.xlane.xlu0 %785
    %v787 = vsel %vm281, %v747, -inf
    %788 = vmax.xlane.f32.xlu0 %v787
    %v789 = vpop.xlane.xlu0 %788
    %v790 = vsel %vm281, %v748, -inf
    %791 = vmax.xlane.f32.xlu0 %v790
    %v792 = vpop.xlane.xlu0 %791
    %v793 = vsel %vm281, %v749, -inf
    %794 = vmax.xlane.f32.xlu0 %v793
    %v795 = vpop.xlane.xlu0 %794
    %v796 = vsel %vm281, %v750, -inf
    %797 = vmax.xlane.f32.xlu0 %v796
    %v798 = vpop.xlane.xlu0 %797
    %v799 = vsub.f32 %v735, %v753
    %v800 = vsub.f32 %v736, %v756
    %v801 = vsub.f32 %v737, %v759
    %v802 = vsub.f32 %v738, %v762
    %v803 = vsub.f32 %v739, %v765
    %v804 = vsub.f32 %v740, %v768
    %v805 = vsub.f32 %v741, %v771
    %v806 = vsub.f32 %v742, %v774
    %v807 = vsub.f32 %v743, %v777
    %v808 = vsub.f32 %v744, %v780
    %v809 = vsub.f32 %v745, %v783
    %v810 = vsub.f32 %v746, %v786
    %v811 = vsub.f32 %v747, %v789
    %v812 = vsub.f32 %v748, %v792
    %v813 = vsub.f32 %v749, %v795
    %v814 = vsub.f32 %v750, %v798
    %v815 = vmul.f32 %v799, 1.442695
    %v816 = vpow.pop %v815
    %v817 = vmul.f32 %v800, 1.442695
    %v818 = vpow.pop %v817
    %v819 = vmul.f32 %v801, 1.442695
    %v820 = vpow.pop %v819
    %v821 = vmul.f32 %v802, 1.442695
    %v822 = vpow.pop %v821
    %v823 = vmul.f32 %v803, 1.442695
    %v824 = vpow.pop %v823
    %v825 = vmul.f32 %v804, 1.442695
    %v826 = vpow.pop %v825
    %v827 = vmul.f32 %v805, 1.442695
    %v828 = vpow.pop %v827
    %v829 = vmul.f32 %v806, 1.442695
    %v830 = vpow.pop %v829
    %v831 = vmul.f32 %v807, 1.442695
    %v832 = vpow.pop %v831
    %v833 = vmul.f32 %v808, 1.442695
    %v834 = vpow.pop %v833
    %v835 = vmul.f32 %v809, 1.442695
    %v836 = vpow.pop %v835
    %v837 = vmul.f32 %v810, 1.442695
    %v838 = vpow.pop %v837
    %v839 = vmul.f32 %v811, 1.442695
    %v840 = vpow.pop %v839
    %v841 = vmul.f32 %v812, 1.442695
    %v842 = vpow.pop %v841
    %v843 = vmul.f32 %v813, 1.442695
    %v844 = vpow.pop %v843
    %v845 = vmul.f32 %v814, 1.442695
    %v846 = vpow.pop %v845
    %v847 = vsel %vm281, %v816, 0.0
    %848 = vadd.xlane.f32.xlu0 %v847
    %v849 = vpop.xlane.xlu0 %848
    %v850 = vsel %vm281, %v818, 0.0
    %851 = vadd.xlane.f32.xlu0 %v850
    %v852 = vpop.xlane.xlu0 %851
    %v853 = vsel %vm281, %v820, 0.0
    %854 = vadd.xlane.f32.xlu0 %v853
    %v855 = vpop.xlane.xlu0 %854
    %v856 = vsel %vm281, %v822, 0.0
    %857 = vadd.xlane.f32.xlu0 %v856
    %v858 = vpop.xlane.xlu0 %857
    %v859 = vsel %vm281, %v824, 0.0
    %860 = vadd.xlane.f32.xlu0 %v859
    %v861 = vpop.xlane.xlu0 %860
    %v862 = vsel %vm281, %v826, 0.0
    %863 = vadd.xlane.f32.xlu0 %v862
    %v864 = vpop.xlane.xlu0 %863
    %v865 = vsel %vm281, %v828, 0.0
    %866 = vadd.xlane.f32.xlu0 %v865
    %v867 = vpop.xlane.xlu0 %866
    %v868 = vsel %vm281, %v830, 0.0
    %869 = vadd.xlane.f32.xlu0 %v868
    %v870 = vpop.xlane.xlu0 %869
    %v871 = vsel %vm281, %v832, 0.0
    %872 = vadd.xlane.f32.xlu0 %v871
    %v873 = vpop.xlane.xlu0 %872
    %v874 = vsel %vm281, %v834, 0.0
    %875 = vadd.xlane.f32.xlu0 %v874
    %v876 = vpop.xlane.xlu0 %875
    %v877 = vsel %vm281, %v836, 0.0
    %878 = vadd.xlane.f32.xlu0 %v877
    %v879 = vpop.xlane.xlu0 %878
    %v880 = vsel %vm281, %v838, 0.0
    %881 = vadd.xlane.f32.xlu0 %v880
    %v882 = vpop.xlane.xlu0 %881
    %v883 = vsel %vm281, %v840, 0.0
    %884 = vadd.xlane.f32.xlu0 %v883
    %v885 = vpop.xlane.xlu0 %884
    %v886 = vsel %vm281, %v842, 0.0
    %887 = vadd.xlane.f32.xlu0 %v886
    %v888 = vpop.xlane.xlu0 %887
    %v889 = vsel %vm281, %v844, 0.0
    %890 = vadd.xlane.f32.xlu0 %v889
    %v891 = vpop.xlane.xlu0 %890
    %v892 = vsel %vm281, %v846, 0.0
    %893 = vadd.xlane.f32.xlu0 %v892
    %v894 = vpop.xlane.xlu0 %893
    %v895 = vrcp.pop %v849
    %v896 = vrcp.pop %v852
    %v897 = vrcp.pop %v855
    %v898 = vrcp.pop %v858
    %v899 = vrcp.pop %v861
    %v900 = vrcp.pop %v864
    %v901 = vrcp.pop %v867
    %v902 = vrcp.pop %v870
    %v903 = vrcp.pop %v873
    %v904 = vrcp.pop %v876
    %v905 = vrcp.pop %v879
    %v906 = vrcp.pop %v882
    %v907 = vrcp.pop %v885
    %v908 = vrcp.pop %v888
    %v909 = vrcp.pop %v891
    %v910 = vrcp.pop %v894
    %v911 = vmul.f32 %v816, %v895
    %v912 = vmul.f32 %v818, %v896
    %v913 = vmul.f32 %v820, %v897
    %v914 = vmul.f32 %v822, %v898
    %v915 = vmul.f32 %v824, %v899
    %v916 = vmul.f32 %v826, %v900
    %v917 = vmul.f32 %v828, %v901
    %v918 = vmul.f32 %v830, %v902
    %v919 = vmul.f32 %v832, %v903
    %v920 = vmul.f32 %v834, %v904
    %v921 = vmul.f32 %v836, %v905
    %v922 = vmul.f32 %v838, %v906
    %v923 = vmul.f32 %v840, %v907
    %v924 = vmul.f32 %v842, %v908
    %v925 = vmul.f32 %v844, %v909
    %v926 = vmul.f32 %v846, %v910
    %927 = vrot.lane.b32.xlu0 %v263, 64
    %v928 = vpop.permute.xlu0 %927
    %v931 = vsel %vm281, %v911, 0
    %933 = vmatpush.msra.mxu0 0.0
    %934 = vmatpush.msra.mxu0 0.0
    %935 = vmatpush.msra.mxu0 0.0
    %936 = vmatpush.msra.mxu0 0.0
    %937 = vmatpush.msra.mxu0 0.0
    %938 = vmatpush.msra.mxu0 0.0
    %939 = vmatpush.msra.mxu0 0.0
    %940 = vmatpush.msra.mxu0 0.0
    %941 = vmatpush.msra.mxu0 0.0
    %942 = vmatpush.msra.mxu0 0.0
    %943 = vmatpush.msra.mxu0 0.0
    %944 = vmatpush.msra.mxu0 0.0
    %945 = vmatpush.msra.mxu0 0.0
    %946 = vmatpush.msra.mxu0 0.0
    %947 = vmatpush.msra.mxu0 0.0
    %948 = vmatpush.msra.mxu0 %v928
    %949 = vmatmul.f32.gmra.mxu0 %v931
    %v950 = vpop.f32.mrf.mxu0
    %v951 = vadd.f32 0.0, %v950
    %952 = vdwg.mxu0
    %953 = vrot.lane.b32.xlu0 %v266, 64
    %v954 = vpop.permute.xlu0 %953
    %v957 = vsel %vm281, %v912, 0
    %959 = vmatpush.msra.mxu0 0.0
    %960 = vmatpush.msra.mxu0 0.0
    %961 = vmatpush.msra.mxu0 0.0
    %962 = vmatpush.msra.mxu0 0.0
    %963 = vmatpush.msra.mxu0 0.0
    %964 = vmatpush.msra.mxu0 0.0
    %965 = vmatpush.msra.mxu0 0.0
    %966 = vmatpush.msra.mxu0 0.0
    %967 = vmatpush.msra.mxu0 0.0
    %968 = vmatpush.msra.mxu0 0.0
    %969 = vmatpush.msra.mxu0 0.0
    %970 = vmatpush.msra.mxu0 0.0
    %971 = vmatpush.msra.mxu0 0.0
    %972 = vmatpush.msra.mxu0 0.0
    %973 = vmatpush.msra.mxu0 0.0
    %974 = vmatpush.msra.mxu0 %v954
    %975 = vmatmul.f32.gmra.mxu0 %v957
    %v976 = vpop.f32.mrf.mxu0
    %v977 = vadd.f32 0.0, %v976
    %978 = vdwg.mxu0
    %979 = vrot.lane.b32.xlu0 %v269, 64
    %v980 = vpop.permute.xlu0 %979
    %v983 = vsel %vm281, %v913, 0
    %985 = vmatpush.msra.mxu0 0.0
    %986 = vmatpush.msra.mxu0 0.0
    %987 = vmatpush.msra.mxu0 0.0
    %988 = vmatpush.msra.mxu0 0.0
    %989 = vmatpush.msra.mxu0 0.0
    %990 = vmatpush.msra.mxu0 0.0
    %991 = vmatpush.msra.mxu0 0.0
    %992 = vmatpush.msra.mxu0 0.0
    %993 = vmatpush.msra.mxu0 0.0
    %994 = vmatpush.msra.mxu0 0.0
    %995 = vmatpush.msra.mxu0 0.0
    %996 = vmatpush.msra.mxu0 0.0
    %997 = vmatpush.msra.mxu0 0.0
    %998 = vmatpush.msra.mxu0 0.0
    %999 = vmatpush.msra.mxu0 0.0
    %1000 = vmatpush.msra.mxu0 %v980
    %1001 = vmatmul.f32.gmra.mxu0 %v983
    %v1002 = vpop.f32.mrf.mxu0
    %v1003 = vadd.f32 0.0, %v1002
    %1004 = vdwg.mxu0
    %1005 = vrot.lane.b32.xlu0 %v272, 64
    %v1006 = vpop.permute.xlu0 %1005
    %v1009 = vsel %vm281, %v914, 0
    %1011 = vmatpush.msra.mxu0 0.0
    %1012 = vmatpush.msra.mxu0 0.0
    %1013 = vmatpush.msra.mxu0 0.0
    %1014 = vmatpush.msra.mxu0 0.0
    %1015 = vmatpush.msra.mxu0 0.0
    %1016 = vmatpush.msra.mxu0 0.0
    %1017 = vmatpush.msra.mxu0 0.0
    %1018 = vmatpush.msra.mxu0 0.0
    %1019 = vmatpush.msra.mxu0 0.0
    %1020 = vmatpush.msra.mxu0 0.0
    %1021 = vmatpush.msra.mxu0 0.0
    %1022 = vmatpush.msra.mxu0 0.0
    %1023 = vmatpush.msra.mxu0 0.0
    %1024 = vmatpush.msra.mxu0 0.0
    %1025 = vmatpush.msra.mxu0 0.0
    %1026 = vmatpush.msra.mxu0 %v1006
    %1027 = vmatmul.f32.gmra.mxu0 %v1009
    %v1028 = vpop.f32.mrf.mxu0
    %v1029 = vadd.f32 0.0, %v1028
    %1030 = vdwg.mxu0
    %1031 = vrot.lane.b32.xlu0 %v263, 56
    %v1032 = vpop.permute.xlu0 %1031
    %v1035 = vsel %vm281, %v915, 0
    %1037 = vmatpush.msra.mxu0 0.0
    %1038 = vmatpush.msra.mxu0 0.0
    %1039 = vmatpush.msra.mxu0 0.0
    %1040 = vmatpush.msra.mxu0 0.0
    %1041 = vmatpush.msra.mxu0 0.0
    %1042 = vmatpush.msra.mxu0 0.0
    %1043 = vmatpush.msra.mxu0 0.0
    %1044 = vmatpush.msra.mxu0 0.0
    %1045 = vmatpush.msra.mxu0 0.0
    %1046 = vmatpush.msra.mxu0 0.0
    %1047 = vmatpush.msra.mxu0 0.0
    %1048 = vmatpush.msra.mxu0 0.0
    %1049 = vmatpush.msra.mxu0 0.0
    %1050 = vmatpush.msra.mxu0 0.0
    %1051 = vmatpush.msra.mxu0 0.0
    %1052 = vmatpush.msra.mxu0 %v1032
    %1053 = vmatmul.f32.gmra.mxu0 %v1035
    %v1054 = vpop.f32.mrf.mxu0
    %v1055 = vadd.f32 0.0, %v1054
    %1056 = vdwg.mxu0
    %1057 = vrot.lane.b32.xlu0 %v266, 56
    %v1058 = vpop.permute.xlu0 %1057
    %v1061 = vsel %vm281, %v916, 0
    %1063 = vmatpush.msra.mxu0 0.0
    %1064 = vmatpush.msra.mxu0 0.0
    %1065 = vmatpush.msra.mxu0 0.0
    %1066 = vmatpush.msra.mxu0 0.0
    %1067 = vmatpush.msra.mxu0 0.0
    %1068 = vmatpush.msra.mxu0 0.0
    %1069 = vmatpush.msra.mxu0 0.0
    %1070 = vmatpush.msra.mxu0 0.0
    %1071 = vmatpush.msra.mxu0 0.0
    %1072 = vmatpush.msra.mxu0 0.0
    %1073 = vmatpush.msra.mxu0 0.0
    %1074 = vmatpush.msra.mxu0 0.0
    %1075 = vmatpush.msra.mxu0 0.0
    %1076 = vmatpush.msra.mxu0 0.0
    %1077 = vmatpush.msra.mxu0 0.0
    %1078 = vmatpush.msra.mxu0 %v1058
    %1079 = vmatmul.f32.gmra.mxu0 %v1061
    %v1080 = vpop.f32.mrf.mxu0
    %v1081 = vadd.f32 0.0, %v1080
    %1082 = vdwg.mxu0
    %1083 = vrot.lane.b32.xlu0 %v269, 56
    %v1084 = vpop.permute.xlu0 %1083
    %v1087 = vsel %vm281, %v917, 0
    %1089 = vmatpush.msra.mxu0 0.0
    %1090 = vmatpush.msra.mxu0 0.0
    %1091 = vmatpush.msra.mxu0 0.0
    %1092 = vmatpush.msra.mxu0 0.0
    %1093 = vmatpush.msra.mxu0 0.0
    %1094 = vmatpush.msra.mxu0 0.0
    %1095 = vmatpush.msra.mxu0 0.0
    %1096 = vmatpush.msra.mxu0 0.0
    %1097 = vmatpush.msra.mxu0 0.0
    %1098 = vmatpush.msra.mxu0 0.0
    %1099 = vmatpush.msra.mxu0 0.0
    %1100 = vmatpush.msra.mxu0 0.0
    %1101 = vmatpush.msra.mxu0 0.0
    %1102 = vmatpush.msra.mxu0 0.0
    %1103 = vmatpush.msra.mxu0 0.0
    %1104 = vmatpush.msra.mxu0 %v1084
    %1105 = vmatmul.f32.gmra.mxu0 %v1087
    %v1106 = vpop.f32.mrf.mxu0
    %v1107 = vadd.f32 0.0, %v1106
    %1108 = vdwg.mxu0
    %1109 = vrot.lane.b32.xlu0 %v272, 56
    %v1110 = vpop.permute.xlu0 %1109
    %v1113 = vsel %vm281, %v918, 0
    %1115 = vmatpush.msra.mxu0 0.0
    %1116 = vmatpush.msra.mxu0 0.0
    %1117 = vmatpush.msra.mxu0 0.0
    %1118 = vmatpush.msra.mxu0 0.0
    %1119 = vmatpush.msra.mxu0 0.0
    %1120 = vmatpush.msra.mxu0 0.0
    %1121 = vmatpush.msra.mxu0 0.0
    %1122 = vmatpush.msra.mxu0 0.0
    %1123 = vmatpush.msra.mxu0 0.0
    %1124 = vmatpush.msra.mxu0 0.0
    %1125 = vmatpush.msra.mxu0 0.0
    %1126 = vmatpush.msra.mxu0 0.0
    %1127 = vmatpush.msra.mxu0 0.0
    %1128 = vmatpush.msra.mxu0 0.0
    %1129 = vmatpush.msra.mxu0 0.0
    %1130 = vmatpush.msra.mxu0 %v1110
    %1131 = vmatmul.f32.gmra.mxu0 %v1113
    %v1132 = vpop.f32.mrf.mxu0
    %v1133 = vadd.f32 0.0, %v1132
    %1134 = vdwg.mxu0
    %1135 = vrot.lane.b32.xlu0 %v263, 48
    %v1136 = vpop.permute.xlu0 %1135
    %v1139 = vsel %vm281, %v919, 0
    %1141 = vmatpush.msra.mxu0 0.0
    %1142 = vmatpush.msra.mxu0 0.0
    %1143 = vmatpush.msra.mxu0 0.0
    %1144 = vmatpush.msra.mxu0 0.0
    %1145 = vmatpush.msra.mxu0 0.0
    %1146 = vmatpush.msra.mxu0 0.0
    %1147 = vmatpush.msra.mxu0 0.0
    %1148 = vmatpush.msra.mxu0 0.0
    %1149 = vmatpush.msra.mxu0 0.0
    %1150 = vmatpush.msra.mxu0 0.0
    %1151 = vmatpush.msra.mxu0 0.0
    %1152 = vmatpush.msra.mxu0 0.0
    %1153 = vmatpush.msra.mxu0 0.0
    %1154 = vmatpush.msra.mxu0 0.0
    %1155 = vmatpush.msra.mxu0 0.0
    %1156 = vmatpush.msra.mxu0 %v1136
    %1157 = vmatmul.f32.gmra.mxu0 %v1139
    %v1158 = vpop.f32.mrf.mxu0
    %v1159 = vadd.f32 0.0, %v1158
    %1160 = vdwg.mxu0
    %1161 = vrot.lane.b32.xlu0 %v266, 48
    %v1162 = vpop.permute.xlu0 %1161
    %v1165 = vsel %vm281, %v920, 0
    %1167 = vmatpush.msra.mxu0 0.0
    %1168 = vmatpush.msra.mxu0 0.0
    %1169 = vmatpush.msra.mxu0 0.0
    %1170 = vmatpush.msra.mxu0 0.0
    %1171 = vmatpush.msra.mxu0 0.0
    %1172 = vmatpush.msra.mxu0 0.0
    %1173 = vmatpush.msra.mxu0 0.0
    %1174 = vmatpush.msra.mxu0 0.0
    %1175 = vmatpush.msra.mxu0 0.0
    %1176 = vmatpush.msra.mxu0 0.0
    %1177 = vmatpush.msra.mxu0 0.0
    %1178 = vmatpush.msra.mxu0 0.0
    %1179 = vmatpush.msra.mxu0 0.0
    %1180 = vmatpush.msra.mxu0 0.0
    %1181 = vmatpush.msra.mxu0 0.0
    %1182 = vmatpush.msra.mxu0 %v1162
    %1183 = vmatmul.f32.gmra.mxu0 %v1165
    %v1184 = vpop.f32.mrf.mxu0
    %v1185 = vadd.f32 0.0, %v1184
    %1186 = vdwg.mxu0
    %1187 = vrot.lane.b32.xlu0 %v269, 48
    %v1188 = vpop.permute.xlu0 %1187
    %v1191 = vsel %vm281, %v921, 0
    %1193 = vmatpush.msra.mxu0 0.0
    %1194 = vmatpush.msra.mxu0 0.0
    %1195 = vmatpush.msra.mxu0 0.0
    %1196 = vmatpush.msra.mxu0 0.0
    %1197 = vmatpush.msra.mxu0 0.0
    %1198 = vmatpush.msra.mxu0 0.0
    %1199 = vmatpush.msra.mxu0 0.0
    %1200 = vmatpush.msra.mxu0 0.0
    %1201 = vmatpush.msra.mxu0 0.0
    %1202 = vmatpush.msra.mxu0 0.0
    %1203 = vmatpush.msra.mxu0 0.0
    %1204 = vmatpush.msra.mxu0 0.0
    %1205 = vmatpush.msra.mxu0 0.0
    %1206 = vmatpush.msra.mxu0 0.0
    %1207 = vmatpush.msra.mxu0 0.0
    %1208 = vmatpush.msra.mxu0 %v1188
    %1209 = vmatmul.f32.gmra.mxu0 %v1191
    %v1210 = vpop.f32.mrf.mxu0
    %v1211 = vadd.f32 0.0, %v1210
    %1212 = vdwg.mxu0
    %1213 = vrot.lane.b32.xlu0 %v272, 48
    %v1214 = vpop.permute.xlu0 %1213
    %v1217 = vsel %vm281, %v922, 0
    %1219 = vmatpush.msra.mxu0 0.0
    %1220 = vmatpush.msra.mxu0 0.0
    %1221 = vmatpush.msra.mxu0 0.0
    %1222 = vmatpush.msra.mxu0 0.0
    %1223 = vmatpush.msra.mxu0 0.0
    %1224 = vmatpush.msra.mxu0 0.0
    %1225 = vmatpush.msra.mxu0 0.0
    %1226 = vmatpush.msra.mxu0 0.0
    %1227 = vmatpush.msra.mxu0 0.0
    %1228 = vmatpush.msra.mxu0 0.0
    %1229 = vmatpush.msra.mxu0 0.0
    %1230 = vmatpush.msra.mxu0 0.0
    %1231 = vmatpush.msra.mxu0 0.0
    %1232 = vmatpush.msra.mxu0 0.0
    %1233 = vmatpush.msra.mxu0 0.0
    %1234 = vmatpush.msra.mxu0 %v1214
    %1235 = vmatmul.f32.gmra.mxu0 %v1217
    %v1236 = vpop.f32.mrf.mxu0
    %v1237 = vadd.f32 0.0, %v1236
    %1238 = vdwg.mxu0
    %1239 = vrot.lane.b32.xlu0 %v263, 40
    %v1240 = vpop.permute.xlu0 %1239
    %v1243 = vsel %vm281, %v923, 0
    %1245 = vmatpush.msra.mxu0 0.0
    %1246 = vmatpush.msra.mxu0 0.0
    %1247 = vmatpush.msra.mxu0 0.0
    %1248 = vmatpush.msra.mxu0 0.0
    %1249 = vmatpush.msra.mxu0 0.0
    %1250 = vmatpush.msra.mxu0 0.0
    %1251 = vmatpush.msra.mxu0 0.0
    %1252 = vmatpush.msra.mxu0 0.0
    %1253 = vmatpush.msra.mxu0 0.0
    %1254 = vmatpush.msra.mxu0 0.0
    %1255 = vmatpush.msra.mxu0 0.0
    %1256 = vmatpush.msra.mxu0 0.0
    %1257 = vmatpush.msra.mxu0 0.0
    %1258 = vmatpush.msra.mxu0 0.0
    %1259 = vmatpush.msra.mxu0 0.0
    %1260 = vmatpush.msra.mxu0 %v1240
    %1261 = vmatmul.f32.gmra.mxu0 %v1243
    %v1262 = vpop.f32.mrf.mxu0
    %v1263 = vadd.f32 0.0, %v1262
    %1264 = vdwg.mxu0
    %1265 = vrot.lane.b32.xlu0 %v266, 40
    %v1266 = vpop.permute.xlu0 %1265
    %v1269 = vsel %vm281, %v924, 0
    %1271 = vmatpush.msra.mxu0 0.0
    %1272 = vmatpush.msra.mxu0 0.0
    %1273 = vmatpush.msra.mxu0 0.0
    %1274 = vmatpush.msra.mxu0 0.0
    %1275 = vmatpush.msra.mxu0 0.0
    %1276 = vmatpush.msra.mxu0 0.0
    %1277 = vmatpush.msra.mxu0 0.0
    %1278 = vmatpush.msra.mxu0 0.0
    %1279 = vmatpush.msra.mxu0 0.0
    %1280 = vmatpush.msra.mxu0 0.0
    %1281 = vmatpush.msra.mxu0 0.0
    %1282 = vmatpush.msra.mxu0 0.0
    %1283 = vmatpush.msra.mxu0 0.0
    %1284 = vmatpush.msra.mxu0 0.0
    %1285 = vmatpush.msra.mxu0 0.0
    %1286 = vmatpush.msra.mxu0 %v1266
    %1287 = vmatmul.f32.gmra.mxu0 %v1269
    %v1288 = vpop.f32.mrf.mxu0
    %v1289 = vadd.f32 0.0, %v1288
    %1290 = vdwg.mxu0
    %1291 = vrot.lane.b32.xlu0 %v269, 40
    %v1292 = vpop.permute.xlu0 %1291
    %v1295 = vsel %vm281, %v925, 0
    %1297 = vmatpush.msra.mxu0 0.0
    %1298 = vmatpush.msra.mxu0 0.0
    %1299 = vmatpush.msra.mxu0 0.0
    %1300 = vmatpush.msra.mxu0 0.0
    %1301 = vmatpush.msra.mxu0 0.0
    %1302 = vmatpush.msra.mxu0 0.0
    %1303 = vmatpush.msra.mxu0 0.0
    %1304 = vmatpush.msra.mxu0 0.0
    %1305 = vmatpush.msra.mxu0 0.0
    %1306 = vmatpush.msra.mxu0 0.0
    %1307 = vmatpush.msra.mxu0 0.0
    %1308 = vmatpush.msra.mxu0 0.0
    %1309 = vmatpush.msra.mxu0 0.0
    %1310 = vmatpush.msra.mxu0 0.0
    %1311 = vmatpush.msra.mxu0 0.0
    %1312 = vmatpush.msra.mxu0 %v1292
    %1313 = vmatmul.f32.gmra.mxu0 %v1295
    %v1314 = vpop.f32.mrf.mxu0
    %v1315 = vadd.f32 0.0, %v1314
    %1316 = vdwg.mxu0
    %1317 = vrot.lane.b32.xlu0 %v272, 40
    %v1318 = vpop.permute.xlu0 %1317
    %v1321 = vsel %vm281, %v926, 0
    %1323 = vmatpush.msra.mxu0 0.0
    %1324 = vmatpush.msra.mxu0 0.0
    %1325 = vmatpush.msra.mxu0 0.0
    %1326 = vmatpush.msra.mxu0 0.0
    %1327 = vmatpush.msra.mxu0 0.0
    %1328 = vmatpush.msra.mxu0 0.0
    %1329 = vmatpush.msra.mxu0 0.0
    %1330 = vmatpush.msra.mxu0 0.0
    %1331 = vmatpush.msra.mxu0 0.0
    %1332 = vmatpush.msra.mxu0 0.0
    %1333 = vmatpush.msra.mxu0 0.0
    %1334 = vmatpush.msra.mxu0 0.0
    %1335 = vmatpush.msra.mxu0 0.0
    %1336 = vmatpush.msra.mxu0 0.0
    %1337 = vmatpush.msra.mxu0 0.0
    %1338 = vmatpush.msra.mxu0 %v1318
    %1339 = vmatmul.f32.gmra.mxu0 %v1321
    %v1340 = vpop.f32.mrf.mxu0
    %v1341 = vadd.f32 0.0, %v1340
    %1342 = vdwg.mxu0
    %1347 = vrot.lane.b32.xlu0 %v1055, 8
    %v1348 = vpop.permute.xlu0 %1347
    %1349 = vrot.lane.b32.xlu0 %v1081, 8
    %v1350 = vpop.permute.xlu0 %1349
    %1351 = vrot.lane.b32.xlu0 %v1107, 8
    %v1352 = vpop.permute.xlu0 %1351
    %1353 = vrot.lane.b32.xlu0 %v1133, 8
    %v1354 = vpop.permute.xlu0 %1353
    %1363 = vrot.lane.b32.xlu0 %v1159, 16
    %v1364 = vpop.permute.xlu0 %1363
    %1365 = vrot.lane.b32.xlu0 %v1185, 16
    %v1366 = vpop.permute.xlu0 %1365
    %1367 = vrot.lane.b32.xlu0 %v1211, 16
    %v1368 = vpop.permute.xlu0 %1367
    %1369 = vrot.lane.b32.xlu0 %v1237, 16
    %v1370 = vpop.permute.xlu0 %1369
    %1379 = vrot.lane.b32.xlu0 %v1263, 24
    %v1380 = vpop.permute.xlu0 %1379
    %1381 = vrot.lane.b32.xlu0 %v1289, 24
    %v1382 = vpop.permute.xlu0 %1381
    %1383 = vrot.lane.b32.xlu0 %v1315, 24
    %v1384 = vpop.permute.xlu0 %1383
    %1385 = vrot.lane.b32.xlu0 %v1341, 24
    %v1386 = vpop.permute.xlu0 %1385
    %v1391 = vsel %vm281, %v951, %v1348
    %v1392 = vsel %vm281, %v977, %v1350
    %v1393 = vsel %vm281, %v1003, %v1352
    %v1394 = vsel %vm281, %v1029, %v1354
    %vm1395 = vcmask 130048
    %v1396 = vsel %vm1395, %v1391, %v1364
    %v1397 = vsel %vm1395, %v1392, %v1366
    %v1398 = vsel %vm1395, %v1393, %v1368
    %v1399 = vsel %vm1395, %v1394, %v1370
    %vm1400 = vcmask 195584
    %v1401 = vsel %vm1400, %v1396, %v1380
    %v1402 = vsel %vm1400, %v1397, %v1382
    %v1403 = vsel %vm1400, %v1398, %v1384
    %v1404 = vsel %vm1400, %v1399, %v1386
    %1409 = vrot.lane.b32.xlu0 %v94, 32
    %v1410 = vpop.permute.xlu0 %1409
    %1411 = vrot.lane.b32.xlu0 %v95, 32
    %v1412 = vpop.permute.xlu0 %1411
    %1413 = vrot.lane.b32.xlu0 %v96, 32
    %v1414 = vpop.permute.xlu0 %1413
    %1415 = vrot.lane.b32.xlu0 %v97, 32
    %v1416 = vpop.permute.xlu0 %1415
    %v1422 = vsel %vm126, %v1401, 0
    %v1425 = vsel %vm126, %v1402, 0
    %v1428 = vsel %vm126, %v1403, 0
    %v1431 = vsel %vm126, %v1404, 0
    %1433 = vmatpush.msra.mxu0 0.0
    %1434 = vmatpush.msra.mxu0 0.0
    %1435 = vmatpush.msra.mxu0 0.0
    %1436 = vmatpush.msra.mxu0 0.0
    %1437 = vmatpush.msra.mxu0 0.0
    %1438 = vmatpush.msra.mxu0 0.0
    %1439 = vmatpush.msra.mxu0 0.0
    %1440 = vmatpush.msra.mxu0 0.0
    %1441 = vmatpush.msra.mxu0 0.0
    %1442 = vmatpush.msra.mxu0 0.0
    %1443 = vmatpush.msra.mxu0 0.0
    %1444 = vmatpush.msra.mxu0 0.0
    %1445 = vmatpush.msra.mxu0 %v1416
    %1446 = vmatpush.msra.mxu0 %v1414
    %1447 = vmatpush.msra.mxu0 %v1412
    %1448 = vmatpush.msra.mxu0 %v1410
    %1449 = vmatmul.f32.gmra.mxu0 %v1422
    %v1450 = vpop.f32.mrf.mxu0
    %v1451 = vadd.f32 0.0, %v1450
    %1452 = vmatmul.f32.gmra.mxu0 %v1425
    %v1453 = vpop.f32.mrf.mxu0
    %v1454 = vadd.f32 0.0, %v1453
    %1455 = vmatmul.f32.gmra.mxu0 %v1428
    %v1456 = vpop.f32.mrf.mxu0
    %v1457 = vadd.f32 0.0, %v1456
    %1458 = vmatmul.f32.gmra.mxu0 %v1431
    %v1459 = vpop.f32.mrf.mxu0
    %v1460 = vadd.f32 0.0, %v1459
    %1461 = vdwg.mxu0
    %v1462 = vadd.f32 %v78, %v1451
    %v1463 = vadd.f32 %v81, %v1454
    %v1464 = vadd.f32 %v84, %v1457
    %v1465 = vadd.f32 %v87, %v1460
    %v1466 = vperm.slane %v122, 0
    %v1467 = vadd.f32 %v1462, %v1466
    %v1468 = vadd.f32 %v1463, %v1466
    %v1469 = vadd.f32 %v1464, %v1466
    %v1470 = vadd.f32 %v1465, %v1466
    %v1471 = vsel %vm126, %v1467, 0.0
    %1472 = vadd.xlane.f32.xlu0 %v1471
    %v1473 = vpop.xlane.xlu0 %1472
    %v1474 = vsel %vm126, %v1468, 0.0
    %1475 = vadd.xlane.f32.xlu0 %v1474
    %v1476 = vpop.xlane.xlu0 %1475
    %v1477 = vsel %vm126, %v1469, 0.0
    %1478 = vadd.xlane.f32.xlu0 %v1477
    %v1479 = vpop.xlane.xlu0 %1478
    %v1480 = vsel %vm126, %v1470, 0.0
    %1481 = vadd.xlane.f32.xlu0 %v1480
    %v1482 = vpop.xlane.xlu0 %1481
    %v1483 = vmul.f32 %v1473, %v145
    %v1484 = vmul.f32 %v1476, %v145
    %v1485 = vmul.f32 %v1479, %v145
    %v1486 = vmul.f32 %v1482, %v145
    %v1487 = vsub.f32 %v1467, %v1483
    %v1488 = vsub.f32 %v1468, %v1484
    %v1489 = vsub.f32 %v1469, %v1485
    %v1490 = vsub.f32 %v1470, %v1486
    %v1491 = vmul.f32 %v1487, %v1487
    %v1492 = vmul.f32 %v1488, %v1488
    %v1493 = vmul.f32 %v1489, %v1489
    %v1494 = vmul.f32 %v1490, %v1490
    %v1495 = vsel %vm126, %v1491, 0.0
    %1496 = vadd.xlane.f32.xlu0 %v1495
    %v1497 = vpop.xlane.xlu0 %1496
    %v1498 = vsel %vm126, %v1492, 0.0
    %1499 = vadd.xlane.f32.xlu0 %v1498
    %v1500 = vpop.xlane.xlu0 %1499
    %v1501 = vsel %vm126, %v1493, 0.0
    %1502 = vadd.xlane.f32.xlu0 %v1501
    %v1503 = vpop.xlane.xlu0 %1502
    %v1504 = vsel %vm126, %v1494, 0.0
    %1505 = vadd.xlane.f32.xlu0 %v1504
    %v1506 = vpop.xlane.xlu0 %1505
    %v1507 = vmul.f32 %v1497, %v145
    %v1508 = vmul.f32 %v1500, %v145
    %v1509 = vmul.f32 %v1503, %v145
    %v1510 = vmul.f32 %v1506, %v145
    %v1511 = vadd.f32 %v1507, 1e-06
    %v1512 = vadd.f32 %v1508, 1e-06
    %v1513 = vadd.f32 %v1509, 1e-06
    %v1514 = vadd.f32 %v1510, 1e-06
    %v1515 = vrsqrt.pop %v1511
    %v1516 = vmul.f32 %v1515, %v1511
    %v1517 = vmul.f32 %v1516, %v1515
    %v1518 = vmul.f32 0.5, %v1517
    %v1519 = vsub.f32 1.5, %v1518
    %v1520 = vmul.f32 %v1515, %v1519
    %vm1521 = vweird.f32 %v1511
    %vm1522 = vweird.f32 %v1515
    %vm1523 = vmor %vm1521, %vm1522
    %v1524 = vsel %vm1523, %v1515, %v1520
    %v1525 = vrsqrt.pop %v1512
    %v1526 = vmul.f32 %v1525, %v1512
    %v1527 = vmul.f32 %v1526, %v1525
    %v1528 = vmul.f32 0.5, %v1527
    %v1529 = vsub.f32 1.5, %v1528
    %v1530 = vmul.f32 %v1525, %v1529
    %vm1531 = vweird.f32 %v1512
    %vm1532 = vweird.f32 %v1525
    %vm1533 = vmor %vm1531, %vm1532
    %v1534 = vsel %vm1533, %v1525, %v1530
    %v1535 = vrsqrt.pop %v1513
    %v1536 = vmul.f32 %v1535, %v1513
    %v1537 = vmul.f32 %v1536, %v1535
    %v1538 = vmul.f32 0.5, %v1537
    %v1539 = vsub.f32 1.5, %v1538
    %v1540 = vmul.f32 %v1535, %v1539
    %vm1541 = vweird.f32 %v1513
    %vm1542 = vweird.f32 %v1535
    %vm1543 = vmor %vm1541, %vm1542
    %v1544 = vsel %vm1543, %v1535, %v1540
    %v1545 = vrsqrt.pop %v1514
    %v1546 = vmul.f32 %v1545, %v1514
    %v1547 = vmul.f32 %v1546, %v1545
    %v1548 = vmul.f32 0.5, %v1547
    %v1549 = vsub.f32 1.5, %v1548
    %v1550 = vmul.f32 %v1545, %v1549
    %vm1551 = vweird.f32 %v1514
    %vm1552 = vweird.f32 %v1545
    %vm1553 = vmor %vm1551, %vm1552
    %v1554 = vsel %vm1553, %v1545, %v1550
    %v1555 = vmul.f32 %v1487, %v1524
    %v1556 = vmul.f32 %v1488, %v1534
    %v1557 = vmul.f32 %v1489, %v1544
    %v1558 = vmul.f32 %v1490, %v1554
    %v1559 = vperm.slane %v120, 0
    %v1560 = vmul.f32 %v1555, %v1559
    %v1561 = vmul.f32 %v1556, %v1559
    %v1562 = vmul.f32 %v1557, %v1559
    %v1563 = vmul.f32 %v1558, %v1559
    %v1564 = vperm.slane %v121, 0
    %v1565 = vadd.f32 %v1560, %v1564
    %v1566 = vadd.f32 %v1561, %v1564
    %v1567 = vadd.f32 %v1562, %v1564
    %v1568 = vadd.f32 %v1563, %v1564
    %v1569 = vperm.slane %v124, 0
    %v1571 = vsel %vm126, %v1565, 0
    %v1574 = vsel %vm126, %v1566, 0
    %v1577 = vsel %vm126, %v1567, 0
    %v1580 = vsel %vm126, %v1568, 0
    %1582 = vmatpush.msra.mxu0 0.0
    %1583 = vmatpush.msra.mxu0 0.0
    %1584 = vmatpush.msra.mxu0 0.0
    %1585 = vmatpush.msra.mxu0 0.0
    %1586 = vmatpush.msra.mxu0 0.0
    %1587 = vmatpush.msra.mxu0 0.0
    %1588 = vmatpush.msra.mxu0 0.0
    %1589 = vmatpush.msra.mxu0 0.0
    %1590 = vmatpush.msra.mxu0 0.0
    %1591 = vmatpush.msra.mxu0 0.0
    %1592 = vmatpush.msra.mxu0 0.0
    %1593 = vmatpush.msra.mxu0 0.0
    %1594 = vmatpush.msra.mxu0 %v101
    %1595 = vmatpush.msra.mxu0 %v100
    %1596 = vmatpush.msra.mxu0 %v99
    %1597 = vmatpush.msra.mxu0 %v98
    %1598 = vmatmul.f32.gmra.mxu0 %v1571
    %v1599 = vpop.f32.mrf.mxu0
    %v1600 = vadd.f32 %v1569, %v1599
    %1601 = vmatmul.f32.gmra.mxu0 %v1574
    %v1602 = vpop.f32.mrf.mxu0
    %v1603 = vadd.f32 %v1569, %v1602
    %1604 = vmatmul.f32.gmra.mxu0 %v1577
    %v1605 = vpop.f32.mrf.mxu0
    %v1606 = vadd.f32 %v1569, %v1605
    %1607 = vmatmul.f32.gmra.mxu0 %v1580
    %v1608 = vpop.f32.mrf.mxu0
    %v1609 = vadd.f32 %v1569, %v1608
    %1610 = vdwg.mxu0
    %v1611 = vmul.f32 %v1600, 0.5
    %v1612 = vmul.f32 %v1603, 0.5
    %v1613 = vmul.f32 %v1606, 0.5
    %v1614 = vmul.f32 %v1609, 0.5
    %v1615 = vmul.f32 %v1600, 0.70710677
    %v1616 = vmul.f32 %v1603, 0.70710677
    %v1617 = vmul.f32 %v1606, 0.70710677
    %v1618 = vmul.f32 %v1609, 0.70710677
    %v1619 = vmul.f32 %v1615, %v1615
    %v1620 = vmin.f32 16.0, %v1619
    %v1621 = vmul.f32 %v1620, 2.1237322e-06
    %v1622 = vadd.f32 %v1621, 0.00028619796
    %v1623 = vmul.f32 %v1620, %v1622
    %v1624 = vadd.f32 %v1623, 0.0036580483
    %v1625 = vmul.f32 %v1620, %v1624
    %v1626 = vadd.f32 %v1625, 0.05243302
    %v1627 = vmul.f32 %v1620, %v1626
    %v1628 = vadd.f32 %v1627, 0.18741608
    %v1629 = vmul.f32 %v1620, %v1628
    %v1630 = vadd.f32 %v1629, 1.1283791
    %v1631 = vmul.f32 %v1615, %v1630
    %v1632 = vmul.f32 %v1620, 3.8918573e-05
    %v1633 = vadd.f32 %v1632, 0.001143296
    %v1634 = vmul.f32 %v1620, %v1633
    %v1635 = vadd.f32 %v1634, 0.014752088
    %v1636 = vmul.f32 %v1620, %v1635
    %v1637 = vadd.f32 %v1636, 0.112945676
    %v1638 = vmul.f32 %v1620, %v1637
    %v1639 = vadd.f32 %v1638, 0.4994258
    %v1640 = vmul.f32 %v1620, %v1639
    %v1641 = vadd.f32 %v1640, 1.0
    %v1642 = vrcp.pop %v1641
    %v1643 = vmul.f32 %v1641, %v1642
    %v1644 = vsub.f32 1.0, %v1643
    %v1645 = vmul.f32 %v1642, %v1644
    %v1646 = vadd.f32 %v1642, %v1645
    %vm1647 = vweird.f32 %v1641
    %vm1648 = vweird.f32 %v1642
    %vm1649 = vmor %vm1647, %vm1648
    %v1650 = vsel %vm1649, %v1642, %v1646
    %v1651 = vand.u32 2147483647, %v1641
    %vm1652 = vcmp.eq.f32.partialorder %v1651, 8.507059e+37
    %v1653 = vand.u32 %v1641, 2147483648
    %v1654 = vor.u32 1.1754944e-38, %v1653
    %v1655 = vsel %vm1652, %v1654, %v1650
    %v1656 = vmul.f32 %v1631, %v1655
    %v1657 = vmin.f32 %v1656, 1.0
    %v1658 = vmax.f32 %v1657, -1.0
    %v1659 = vmul.f32 %v1616, %v1616
    %v1660 = vmin.f32 16.0, %v1659
    %v1661 = vmul.f32 %v1660, 2.1237322e-06
    %v1662 = vadd.f32 %v1661, 0.00028619796
    %v1663 = vmul.f32 %v1660, %v1662
    %v1664 = vadd.f32 %v1663, 0.0036580483
    %v1665 = vmul.f32 %v1660, %v1664
    %v1666 = vadd.f32 %v1665, 0.05243302
    %v1667 = vmul.f32 %v1660, %v1666
    %v1668 = vadd.f32 %v1667, 0.18741608
    %v1669 = vmul.f32 %v1660, %v1668
    %v1670 = vadd.f32 %v1669, 1.1283791
    %v1671 = vmul.f32 %v1616, %v1670
    %v1672 = vmul.f32 %v1660, 3.8918573e-05
    %v1673 = vadd.f32 %v1672, 0.001143296
    %v1674 = vmul.f32 %v1660, %v1673
    %v1675 = vadd.f32 %v1674, 0.014752088
    %v1676 = vmul.f32 %v1660, %v1675
    %v1677 = vadd.f32 %v1676, 0.112945676
    %v1678 = vmul.f32 %v1660, %v1677
    %v1679 = vadd.f32 %v1678, 0.4994258
    %v1680 = vmul.f32 %v1660, %v1679
    %v1681 = vadd.f32 %v1680, 1.0
    %v1682 = vrcp.pop %v1681
    %v1683 = vmul.f32 %v1681, %v1682
    %v1684 = vsub.f32 1.0, %v1683
    %v1685 = vmul.f32 %v1682, %v1684
    %v1686 = vadd.f32 %v1682, %v1685
    %vm1687 = vweird.f32 %v1681
    %vm1688 = vweird.f32 %v1682
    %vm1689 = vmor %vm1687, %vm1688
    %v1690 = vsel %vm1689, %v1682, %v1686
    %v1691 = vand.u32 2147483647, %v1681
    %vm1692 = vcmp.eq.f32.partialorder %v1691, 8.507059e+37
    %v1693 = vand.u32 %v1681, 2147483648
    %v1694 = vor.u32 1.1754944e-38, %v1693
    %v1695 = vsel %vm1692, %v1694, %v1690
    %v1696 = vmul.f32 %v1671, %v1695
    %v1697 = vmin.f32 %v1696, 1.0
    %v1698 = vmax.f32 %v1697, -1.0
    %v1699 = vmul.f32 %v1617, %v1617
    %v1700 = vmin.f32 16.0, %v1699
    %v1701 = vmul.f32 %v1700, 2.1237322e-06
    %v1702 = vadd.f32 %v1701, 0.00028619796
    %v1703 = vmul.f32 %v1700, %v1702
    %v1704 = vadd.f32 %v1703, 0.0036580483
    %v1705 = vmul.f32 %v1700, %v1704
    %v1706 = vadd.f32 %v1705, 0.05243302
    %v1707 = vmul.f32 %v1700, %v1706
    %v1708 = vadd.f32 %v1707, 0.18741608
    %v1709 = vmul.f32 %v1700, %v1708
    %v1710 = vadd.f32 %v1709, 1.1283791
    %v1711 = vmul.f32 %v1617, %v1710
    %v1712 = vmul.f32 %v1700, 3.8918573e-05
    %v1713 = vadd.f32 %v1712, 0.001143296
    %v1714 = vmul.f32 %v1700, %v1713
    %v1715 = vadd.f32 %v1714, 0.014752088
    %v1716 = vmul.f32 %v1700, %v1715
    %v1717 = vadd.f32 %v1716, 0.112945676
    %v1718 = vmul.f32 %v1700, %v1717
    %v1719 = vadd.f32 %v1718, 0.4994258
    %v1720 = vmul.f32 %v1700, %v1719
    %v1721 = vadd.f32 %v1720, 1.0
    %v1722 = vrcp.pop %v1721
    %v1723 = vmul.f32 %v1721, %v1722
    %v1724 = vsub.f32 1.0, %v1723
    %v1725 = vmul.f32 %v1722, %v1724
    %v1726 = vadd.f32 %v1722, %v1725
    %vm1727 = vweird.f32 %v1721
    %vm1728 = vweird.f32 %v1722
    %vm1729 = vmor %vm1727, %vm1728
    %v1730 = vsel %vm1729, %v1722, %v1726
    %v1731 = vand.u32 2147483647, %v1721
    %vm1732 = vcmp.eq.f32.partialorder %v1731, 8.507059e+37
    %v1733 = vand.u32 %v1721, 2147483648
    %v1734 = vor.u32 1.1754944e-38, %v1733
    %v1735 = vsel %vm1732, %v1734, %v1730
    %v1736 = vmul.f32 %v1711, %v1735
    %v1737 = vmin.f32 %v1736, 1.0
    %v1738 = vmax.f32 %v1737, -1.0
    %v1739 = vmul.f32 %v1618, %v1618
    %v1740 = vmin.f32 16.0, %v1739
    %v1741 = vmul.f32 %v1740, 2.1237322e-06
    %v1742 = vadd.f32 %v1741, 0.00028619796
    %v1743 = vmul.f32 %v1740, %v1742
    %v1744 = vadd.f32 %v1743, 0.0036580483
    %v1745 = vmul.f32 %v1740, %v1744
    %v1746 = vadd.f32 %v1745, 0.05243302
    %v1747 = vmul.f32 %v1740, %v1746
    %v1748 = vadd.f32 %v1747, 0.18741608
    %v1749 = vmul.f32 %v1740, %v1748
    %v1750 = vadd.f32 %v1749, 1.1283791
    %v1751 = vmul.f32 %v1618, %v1750
    %v1752 = vmul.f32 %v1740, 3.8918573e-05
    %v1753 = vadd.f32 %v1752, 0.001143296
    %v1754 = vmul.f32 %v1740, %v1753
    %v1755 = vadd.f32 %v1754, 0.014752088
    %v1756 = vmul.f32 %v1740, %v1755
    %v1757 = vadd.f32 %v1756, 0.112945676
    %v1758 = vmul.f32 %v1740, %v1757
    %v1759 = vadd.f32 %v1758, 0.4994258
    %v1760 = vmul.f32 %v1740, %v1759
    %v1761 = vadd.f32 %v1760, 1.0
    %v1762 = vrcp.pop %v1761
    %v1763 = vmul.f32 %v1761, %v1762
    %v1764 = vsub.f32 1.0, %v1763
    %v1765 = vmul.f32 %v1762, %v1764
    %v1766 = vadd.f32 %v1762, %v1765
    %vm1767 = vweird.f32 %v1761
    %vm1768 = vweird.f32 %v1762
    %vm1769 = vmor %vm1767, %vm1768
    %v1770 = vsel %vm1769, %v1762, %v1766
    %v1771 = vand.u32 2147483647, %v1761
    %vm1772 = vcmp.eq.f32.partialorder %v1771, 8.507059e+37
    %v1773 = vand.u32 %v1761, 2147483648
    %v1774 = vor.u32 1.1754944e-38, %v1773
    %v1775 = vsel %vm1772, %v1774, %v1770
    %v1776 = vmul.f32 %v1751, %v1775
    %v1777 = vmin.f32 %v1776, 1.0
    %v1778 = vmax.f32 %v1777, -1.0
    %v1779 = vadd.f32 %v1658, 1.0
    %v1780 = vadd.f32 %v1698, 1.0
    %v1781 = vadd.f32 %v1738, 1.0
    %v1782 = vadd.f32 %v1778, 1.0
    %v1783 = vmul.f32 %v1611, %v1779
    %v1784 = vmul.f32 %v1612, %v1780
    %v1785 = vmul.f32 %v1613, %v1781
    %v1786 = vmul.f32 %v1614, %v1782
    %1787 = vmatpush.msra.mxu0 %v117
    %1788 = vmatpush.msra.mxu0 %v116
    %1789 = vmatpush.msra.mxu0 %v115
    %1790 = vmatpush.msra.mxu0 %v114
    %1791 = vmatpush.msra.mxu0 %v113
    %1792 = vmatpush.msra.mxu0 %v112
    %1793 = vmatpush.msra.mxu0 %v111
    %1794 = vmatpush.msra.mxu0 %v110
    %1795 = vmatpush.msra.mxu0 %v109
    %1796 = vmatpush.msra.mxu0 %v108
    %1797 = vmatpush.msra.mxu0 %v107
    %1798 = vmatpush.msra.mxu0 %v106
    %1799 = vmatpush.msra.mxu0 %v105
    %1800 = vmatpush.msra.mxu0 %v104
    %1801 = vmatpush.msra.mxu0 %v103
    %1802 = vmatpush.msra.mxu0 %v102
    %1803 = vmatmul.f32.gmra.mxu0 %v1783
    %v1804 = vpop.f32.mrf.mxu0
    %v1805 = vadd.f32 0.0, %v1804
    %1806 = vmatmul.f32.gmra.mxu0 %v1784
    %v1807 = vpop.f32.mrf.mxu0
    %v1808 = vadd.f32 0.0, %v1807
    %1809 = vmatmul.f32.gmra.mxu0 %v1785
    %v1810 = vpop.f32.mrf.mxu0
    %v1811 = vadd.f32 0.0, %v1810
    %1812 = vmatmul.f32.gmra.mxu0 %v1786
    %v1813 = vpop.f32.mrf.mxu0
    %v1814 = vadd.f32 0.0, %v1813
    %1815 = vdwg.mxu0
    %v1816 = vadd.f32 %v1467, %v1805
    %v1817 = vadd.f32 %v1468, %v1808
    %v1818 = vadd.f32 %v1469, %v1811
    %v1819 = vadd.f32 %v1470, %v1814
    %v1820 = vperm.slane %v123, 0
    %v1821 = vadd.f32 %v1816, %v1820
    %v1822 = vadd.f32 %v1817, %v1820
    %v1823 = vadd.f32 %v1818, %v1820
    %v1824 = vadd.f32 %v1819, %v1820
    %s1825 = scalar_lea.vmem %s4, 64
    %v1826 = vld [vmem:[%s1825] sm:$0xff]
    %v1827 = vld [vmem:[%s1825 + $0x10] sm:$0xff]
    %v1828 = vld [vmem:[%s1825 + $0x20] sm:$0xff]
    %v1829 = vld [vmem:[%s1825 + $0x30] sm:$0xff]
    %v1830 = vld [vmem:[%s1825 + $0x8] sm:$0xff]
    %v1831 = vld [vmem:[%s1825 + $0x18] sm:$0xff]
    %v1832 = vld [vmem:[%s1825 + $0x28] sm:$0xff]
    %v1833 = vld [vmem:[%s1825 + $0x38] sm:$0xff]
    %s1834 = scalar_lea.vmem %s5, 128
    %v1835 = vld [vmem:[%s1834] sm:$0xff]
    %v1836 = vld [vmem:[%s1834 + $0x8] sm:$0xff]
    %v1837 = vld [vmem:[%s1834 + $0x10] sm:$0xff]
    %v1838 = vld [vmem:[%s1834 + $0x18] sm:$0xff]
    %v1839 = vld [vmem:[%s1834 + $0x20] sm:$0xff]
    %v1840 = vld [vmem:[%s1834 + $0x28] sm:$0xff]
    %v1841 = vld [vmem:[%s1834 + $0x30] sm:$0xff]
    %v1842 = vld [vmem:[%s1834 + $0x38] sm:$0xff]
    %v1843 = vld [vmem:[%s1834 + $0x40] sm:$0xff]
    %v1844 = vld [vmem:[%s1834 + $0x48] sm:$0xff]
    %v1845 = vld [vmem:[%s1834 + $0x50] sm:$0xff]
    %v1846 = vld [vmem:[%s1834 + $0x58] sm:$0xff]
    %v1847 = vld [vmem:[%s1834 + $0x60] sm:$0xff]
    %v1848 = vld [vmem:[%s1834 + $0x68] sm:$0xff]
    %v1849 = vld [vmem:[%s1834 + $0x70] sm:$0xff]
    %v1850 = vld [vmem:[%s1834 + $0x78] sm:$0xff]
    %s1851 = scalar_lea.vmem %s6, 8
    %v1852 = vld [vmem:[%s1851] sm:$0x1]
    %v1853 = vld [vmem:[%s1851 + $0x1] sm:$0x1]
    %v1854 = vld [vmem:[%s1851 + $0x2] sm:$0x1]
    %v1855 = vld [vmem:[%s1851 + $0x3] sm:$0x1]
    %v1856 = vld [vmem:[%s1851 + $0x4] sm:$0x1]
    %v1857 = vld [vmem:[%s1851 + $0x5] sm:$0x1]
    %v1858 = vld [vmem:[%s1851 + $0x6] sm:$0x1]
    %v1859 = vld [vmem:[%s1851 + $0x7] sm:$0x1]
    %v1860 = vsel %vm126, %v1821, 0.0
    %1861 = vadd.xlane.f32.xlu0 %v1860
    %v1862 = vpop.xlane.xlu0 %1861
    %v1863 = vsel %vm126, %v1822, 0.0
    %1864 = vadd.xlane.f32.xlu0 %v1863
    %v1865 = vpop.xlane.xlu0 %1864
    %v1866 = vsel %vm126, %v1823, 0.0
    %1867 = vadd.xlane.f32.xlu0 %v1866
    %v1868 = vpop.xlane.xlu0 %1867
    %v1869 = vsel %vm126, %v1824, 0.0
    %1870 = vadd.xlane.f32.xlu0 %v1869
    %v1871 = vpop.xlane.xlu0 %1870
    %v1872 = vmul.f32 %v1862, %v145
    %v1873 = vmul.f32 %v1865, %v145
    %v1874 = vmul.f32 %v1868, %v145
    %v1875 = vmul.f32 %v1871, %v145
    %v1876 = vsub.f32 %v1821, %v1872
    %v1877 = vsub.f32 %v1822, %v1873
    %v1878 = vsub.f32 %v1823, %v1874
    %v1879 = vsub.f32 %v1824, %v1875
    %v1880 = vmul.f32 %v1876, %v1876
    %v1881 = vmul.f32 %v1877, %v1877
    %v1882 = vmul.f32 %v1878, %v1878
    %v1883 = vmul.f32 %v1879, %v1879
    %v1884 = vsel %vm126, %v1880, 0.0
    %1885 = vadd.xlane.f32.xlu0 %v1884
    %v1886 = vpop.xlane.xlu0 %1885
    %v1887 = vsel %vm126, %v1881, 0.0
    %1888 = vadd.xlane.f32.xlu0 %v1887
    %v1889 = vpop.xlane.xlu0 %1888
    %v1890 = vsel %vm126, %v1882, 0.0
    %1891 = vadd.xlane.f32.xlu0 %v1890
    %v1892 = vpop.xlane.xlu0 %1891
    %v1893 = vsel %vm126, %v1883, 0.0
    %1894 = vadd.xlane.f32.xlu0 %v1893
    %v1895 = vpop.xlane.xlu0 %1894
    %v1896 = vmul.f32 %v1886, %v145
    %v1897 = vmul.f32 %v1889, %v145
    %v1898 = vmul.f32 %v1892, %v145
    %v1899 = vmul.f32 %v1895, %v145
    %v1900 = vadd.f32 %v1896, 1e-06
    %v1901 = vadd.f32 %v1897, 1e-06
    %v1902 = vadd.f32 %v1898, 1e-06
    %v1903 = vadd.f32 %v1899, 1e-06
    %v1904 = vrsqrt.pop %v1900
    %v1905 = vmul.f32 %v1904, %v1900
    %v1906 = vmul.f32 %v1905, %v1904
    %v1907 = vmul.f32 0.5, %v1906
    %v1908 = vsub.f32 1.5, %v1907
    %v1909 = vmul.f32 %v1904, %v1908
    %vm1910 = vweird.f32 %v1900
    %vm1911 = vweird.f32 %v1904
    %vm1912 = vmor %vm1910, %vm1911
    %v1913 = vsel %vm1912, %v1904, %v1909
    %v1914 = vrsqrt.pop %v1901
    %v1915 = vmul.f32 %v1914, %v1901
    %v1916 = vmul.f32 %v1915, %v1914
    %v1917 = vmul.f32 0.5, %v1916
    %v1918 = vsub.f32 1.5, %v1917
    %v1919 = vmul.f32 %v1914, %v1918
    %vm1920 = vweird.f32 %v1901
    %vm1921 = vweird.f32 %v1914
    %vm1922 = vmor %vm1920, %vm1921
    %v1923 = vsel %vm1922, %v1914, %v1919
    %v1924 = vrsqrt.pop %v1902
    %v1925 = vmul.f32 %v1924, %v1902
    %v1926 = vmul.f32 %v1925, %v1924
    %v1927 = vmul.f32 0.5, %v1926
    %v1928 = vsub.f32 1.5, %v1927
    %v1929 = vmul.f32 %v1924, %v1928
    %vm1930 = vweird.f32 %v1902
    %vm1931 = vweird.f32 %v1924
    %vm1932 = vmor %vm1930, %vm1931
    %v1933 = vsel %vm1932, %v1924, %v1929
    %v1934 = vrsqrt.pop %v1903
    %v1935 = vmul.f32 %v1934, %v1903
    %v1936 = vmul.f32 %v1935, %v1934
    %v1937 = vmul.f32 0.5, %v1936
    %v1938 = vsub.f32 1.5, %v1937
    %v1939 = vmul.f32 %v1934, %v1938
    %vm1940 = vweird.f32 %v1903
    %vm1941 = vweird.f32 %v1934
    %vm1942 = vmor %vm1940, %vm1941
    %v1943 = vsel %vm1942, %v1934, %v1939
    %v1944 = vmul.f32 %v1876, %v1913
    %v1945 = vmul.f32 %v1877, %v1923
    %v1946 = vmul.f32 %v1878, %v1933
    %v1947 = vmul.f32 %v1879, %v1943
    %v1948 = vperm.slane %v1852, 0
    %v1949 = vmul.f32 %v1944, %v1948
    %v1950 = vmul.f32 %v1945, %v1948
    %v1951 = vmul.f32 %v1946, %v1948
    %v1952 = vmul.f32 %v1947, %v1948
    %v1953 = vperm.slane %v1853, 0
    %v1954 = vadd.f32 %v1949, %v1953
    %v1955 = vadd.f32 %v1950, %v1953
    %v1956 = vadd.f32 %v1951, %v1953
    %v1957 = vadd.f32 %v1952, %v1953
    %v1958 = vperm.slane %v1859, 0
    %v1960 = vsel %vm126, %v1954, 0
    %v1963 = vsel %vm126, %v1955, 0
    %v1966 = vsel %vm126, %v1956, 0
    %v1969 = vsel %vm126, %v1957, 0
    %1971 = vmatpush.msra.mxu0 0.0
    %1972 = vmatpush.msra.mxu0 0.0
    %1973 = vmatpush.msra.mxu0 0.0
    %1974 = vmatpush.msra.mxu0 0.0
    %1975 = vmatpush.msra.mxu0 0.0
    %1976 = vmatpush.msra.mxu0 0.0
    %1977 = vmatpush.msra.mxu0 0.0
    %1978 = vmatpush.msra.mxu0 0.0
    %1979 = vmatpush.msra.mxu0 0.0
    %1980 = vmatpush.msra.mxu0 0.0
    %1981 = vmatpush.msra.mxu0 0.0
    %1982 = vmatpush.msra.mxu0 0.0
    %1983 = vmatpush.msra.mxu0 %v1829
    %1984 = vmatpush.msra.mxu0 %v1828
    %1985 = vmatpush.msra.mxu0 %v1827
    %1986 = vmatpush.msra.mxu0 %v1826
    %1987 = vmatmul.f32.gmra.mxu0 %v1960
    %v1988 = vpop.f32.mrf.mxu0
    %v1989 = vadd.f32 %v1958, %v1988
    %1990 = vmatmul.f32.gmra.mxu0 %v1963
    %v1991 = vpop.f32.mrf.mxu0
    %v1992 = vadd.f32 %v1958, %v1991
    %1993 = vmatmul.f32.gmra.mxu0 %v1966
    %v1994 = vpop.f32.mrf.mxu0
    %v1995 = vadd.f32 %v1958, %v1994
    %1996 = vmatmul.f32.gmra.mxu0 %v1969
    %v1997 = vpop.f32.mrf.mxu0
    %v1998 = vadd.f32 %v1958, %v1997
    %1999 = vdwg.mxu0
    %v2000 = vmul.f32 %v1989, 0.35355338
    %v2001 = vmul.f32 %v1992, 0.35355338
    %v2002 = vmul.f32 %v1995, 0.35355338
    %v2003 = vmul.f32 %v1998, 0.35355338
    %2005 = vrot.lane.b32.xlu0 %v1989, 96
    %v2006 = vpop.permute.xlu0 %2005
    %v2008 = vsel %vm281, %v2000, 0
    %v2010 = vsel %vm281, %v2006, 0
    %2012 = vmatpush.xpose.msra.mxu0 0.0
    %2013 = vmatpush.xpose.msra.mxu0 0.0
    %2014 = vmatpush.xpose.msra.mxu0 0.0
    %2015 = vmatpush.xpose.msra.mxu0 0.0
    %2016 = vmatpush.xpose.msra.mxu0 0.0
    %2017 = vmatpush.xpose.msra.mxu0 0.0
    %2018 = vmatpush.xpose.msra.mxu0 0.0
    %2019 = vmatpush.xpose.msra.mxu0 0.0
    %2020 = vmatpush.xpose.msra.mxu0 0.0
    %2021 = vmatpush.xpose.msra.mxu0 0.0
    %2022 = vmatpush.xpose.msra.mxu0 0.0
    %2023 = vmatpush.xpose.msra.mxu0 0.0
    %2024 = vmatpush.xpose.msra.mxu0 0.0
    %2025 = vmatpush.xpose.msra.mxu0 0.0
    %2026 = vmatpush.xpose.msra.mxu0 0.0
    %2027 = vmatpush.xpose.msra.mxu0 %v2010
    %2028 = vmatmul.f32.gmra.mxu0 %v2008
    %v2029 = vpop.f32.mrf.mxu0
    %v2030 = vadd.f32 0.0, %v2029
    %2031 = vdwg.mxu0
    %2033 = vrot.lane.b32.xlu0 %v1992, 96
    %v2034 = vpop.permute.xlu0 %2033
    %v2036 = vsel %vm281, %v2001, 0
    %v2038 = vsel %vm281, %v2034, 0
    %2040 = vmatpush.xpose.msra.mxu0 0.0
    %2041 = vmatpush.xpose.msra.mxu0 0.0
    %2042 = vmatpush.xpose.msra.mxu0 0.0
    %2043 = vmatpush.xpose.msra.mxu0 0.0
    %2044 = vmatpush.xpose.msra.mxu0 0.0
    %2045 = vmatpush.xpose.msra.mxu0 0.0
    %2046 = vmatpush.xpose.msra.mxu0 0.0
    %2047 = vmatpush.xpose.msra.mxu0 0.0
    %2048 = vmatpush.xpose.msra.mxu0 0.0
    %2049 = vmatpush.xpose.msra.mxu0 0.0
    %2050 = vmatpush.xpose.msra.mxu0 0.0
    %2051 = vmatpush.xpose.msra.mxu0 0.0
    %2052 = vmatpush.xpose.msra.mxu0 0.0
    %2053 = vmatpush.xpose.msra.mxu0 0.0
    %2054 = vmatpush.xpose.msra.mxu0 0.0
    %2055 = vmatpush.xpose.msra.mxu0 %v2038
    %2056 = vmatmul.f32.gmra.mxu0 %v2036
    %v2057 = vpop.f32.mrf.mxu0
    %v2058 = vadd.f32 0.0, %v2057
    %2059 = vdwg.mxu0
    %2061 = vrot.lane.b32.xlu0 %v1995, 96
    %v2062 = vpop.permute.xlu0 %2061
    %v2064 = vsel %vm281, %v2002, 0
    %v2066 = vsel %vm281, %v2062, 0
    %2068 = vmatpush.xpose.msra.mxu0 0.0
    %2069 = vmatpush.xpose.msra.mxu0 0.0
    %2070 = vmatpush.xpose.msra.mxu0 0.0
    %2071 = vmatpush.xpose.msra.mxu0 0.0
    %2072 = vmatpush.xpose.msra.mxu0 0.0
    %2073 = vmatpush.xpose.msra.mxu0 0.0
    %2074 = vmatpush.xpose.msra.mxu0 0.0
    %2075 = vmatpush.xpose.msra.mxu0 0.0
    %2076 = vmatpush.xpose.msra.mxu0 0.0
    %2077 = vmatpush.xpose.msra.mxu0 0.0
    %2078 = vmatpush.xpose.msra.mxu0 0.0
    %2079 = vmatpush.xpose.msra.mxu0 0.0
    %2080 = vmatpush.xpose.msra.mxu0 0.0
    %2081 = vmatpush.xpose.msra.mxu0 0.0
    %2082 = vmatpush.xpose.msra.mxu0 0.0
    %2083 = vmatpush.xpose.msra.mxu0 %v2066
    %2084 = vmatmul.f32.gmra.mxu0 %v2064
    %v2085 = vpop.f32.mrf.mxu0
    %v2086 = vadd.f32 0.0, %v2085
    %2087 = vdwg.mxu0
    %2089 = vrot.lane.b32.xlu0 %v1998, 96
    %v2090 = vpop.permute.xlu0 %2089
    %v2092 = vsel %vm281, %v2003, 0
    %v2094 = vsel %vm281, %v2090, 0
    %2096 = vmatpush.xpose.msra.mxu0 0.0
    %2097 = vmatpush.xpose.msra.mxu0 0.0
    %2098 = vmatpush.xpose.msra.mxu0 0.0
    %2099 = vmatpush.xpose.msra.mxu0 0.0
    %2100 = vmatpush.xpose.msra.mxu0 0.0
    %2101 = vmatpush.xpose.msra.mxu0 0.0
    %2102 = vmatpush.xpose.msra.mxu0 0.0
    %2103 = vmatpush.xpose.msra.mxu0 0.0
    %2104 = vmatpush.xpose.msra.mxu0 0.0
    %2105 = vmatpush.xpose.msra.mxu0 0.0
    %2106 = vmatpush.xpose.msra.mxu0 0.0
    %2107 = vmatpush.xpose.msra.mxu0 0.0
    %2108 = vmatpush.xpose.msra.mxu0 0.0
    %2109 = vmatpush.xpose.msra.mxu0 0.0
    %2110 = vmatpush.xpose.msra.mxu0 0.0
    %2111 = vmatpush.xpose.msra.mxu0 %v2094
    %2112 = vmatmul.f32.gmra.mxu0 %v2092
    %v2113 = vpop.f32.mrf.mxu0
    %v2114 = vadd.f32 0.0, %v2113
    %2115 = vdwg.mxu0
    %2116 = vrot.lane.b32.xlu0 %v2000, 120
    %v2117 = vpop.permute.xlu0 %2116
    %2118 = vrot.lane.b32.xlu0 %v1989, 88
    %v2119 = vpop.permute.xlu0 %2118
    %v2120 = vsel %vm281, %v2117, 0
    %v2122 = vsel %vm281, %v2119, 0
    %2124 = vmatpush.xpose.msra.mxu0 0.0
    %2125 = vmatpush.xpose.msra.mxu0 0.0
    %2126 = vmatpush.xpose.msra.mxu0 0.0
    %2127 = vmatpush.xpose.msra.mxu0 0.0
    %2128 = vmatpush.xpose.msra.mxu0 0.0
    %2129 = vmatpush.xpose.msra.mxu0 0.0
    %2130 = vmatpush.xpose.msra.mxu0 0.0
    %2131 = vmatpush.xpose.msra.mxu0 0.0
    %2132 = vmatpush.xpose.msra.mxu0 0.0
    %2133 = vmatpush.xpose.msra.mxu0 0.0
    %2134 = vmatpush.xpose.msra.mxu0 0.0
    %2135 = vmatpush.xpose.msra.mxu0 0.0
    %2136 = vmatpush.xpose.msra.mxu0 0.0
    %2137 = vmatpush.xpose.msra.mxu0 0.0
    %2138 = vmatpush.xpose.msra.mxu0 0.0
    %2139 = vmatpush.xpose.msra.mxu0 %v2122
    %2140 = vmatmul.f32.gmra.mxu0 %v2120
    %v2141 = vpop.f32.mrf.mxu0
    %v2142 = vadd.f32 0.0, %v2141
    %2143 = vdwg.mxu0
    %2144 = vrot.lane.b32.xlu0 %v2001, 120
    %v2145 = vpop.permute.xlu0 %2144
    %2146 = vrot.lane.b32.xlu0 %v1992, 88
    %v2147 = vpop.permute.xlu0 %2146
    %v2148 = vsel %vm281, %v2145, 0
    %v2150 = vsel %vm281, %v2147, 0
    %2152 = vmatpush.xpose.msra.mxu0 0.0
    %2153 = vmatpush.xpose.msra.mxu0 0.0
    %2154 = vmatpush.xpose.msra.mxu0 0.0
    %2155 = vmatpush.xpose.msra.mxu0 0.0
    %2156 = vmatpush.xpose.msra.mxu0 0.0
    %2157 = vmatpush.xpose.msra.mxu0 0.0
    %2158 = vmatpush.xpose.msra.mxu0 0.0
    %2159 = vmatpush.xpose.msra.mxu0 0.0
    %2160 = vmatpush.xpose.msra.mxu0 0.0
    %2161 = vmatpush.xpose.msra.mxu0 0.0
    %2162 = vmatpush.xpose.msra.mxu0 0.0
    %2163 = vmatpush.xpose.msra.mxu0 0.0
    %2164 = vmatpush.xpose.msra.mxu0 0.0
    %2165 = vmatpush.xpose.msra.mxu0 0.0
    %2166 = vmatpush.xpose.msra.mxu0 0.0
    %2167 = vmatpush.xpose.msra.mxu0 %v2150
    %2168 = vmatmul.f32.gmra.mxu0 %v2148
    %v2169 = vpop.f32.mrf.mxu0
    %v2170 = vadd.f32 0.0, %v2169
    %2171 = vdwg.mxu0
    %2172 = vrot.lane.b32.xlu0 %v2002, 120
    %v2173 = vpop.permute.xlu0 %2172
    %2174 = vrot.lane.b32.xlu0 %v1995, 88
    %v2175 = vpop.permute.xlu0 %2174
    %v2176 = vsel %vm281, %v2173, 0
    %v2178 = vsel %vm281, %v2175, 0
    %2180 = vmatpush.xpose.msra.mxu0 0.0
    %2181 = vmatpush.xpose.msra.mxu0 0.0
    %2182 = vmatpush.xpose.msra.mxu0 0.0
    %2183 = vmatpush.xpose.msra.mxu0 0.0
    %2184 = vmatpush.xpose.msra.mxu0 0.0
    %2185 = vmatpush.xpose.msra.mxu0 0.0
    %2186 = vmatpush.xpose.msra.mxu0 0.0
    %2187 = vmatpush.xpose.msra.mxu0 0.0
    %2188 = vmatpush.xpose.msra.mxu0 0.0
    %2189 = vmatpush.xpose.msra.mxu0 0.0
    %2190 = vmatpush.xpose.msra.mxu0 0.0
    %2191 = vmatpush.xpose.msra.mxu0 0.0
    %2192 = vmatpush.xpose.msra.mxu0 0.0
    %2193 = vmatpush.xpose.msra.mxu0 0.0
    %2194 = vmatpush.xpose.msra.mxu0 0.0
    %2195 = vmatpush.xpose.msra.mxu0 %v2178
    %2196 = vmatmul.f32.gmra.mxu0 %v2176
    %v2197 = vpop.f32.mrf.mxu0
    %v2198 = vadd.f32 0.0, %v2197
    %2199 = vdwg.mxu0
    %2200 = vrot.lane.b32.xlu0 %v2003, 120
    %v2201 = vpop.permute.xlu0 %2200
    %2202 = vrot.lane.b32.xlu0 %v1998, 88
    %v2203 = vpop.permute.xlu0 %2202
    %v2204 = vsel %vm281, %v2201, 0
    %v2206 = vsel %vm281, %v2203, 0
    %2208 = vmatpush.xpose.msra.mxu0 0.0
    %2209 = vmatpush.xpose.msra.mxu0 0.0
    %2210 = vmatpush.xpose.msra.mxu0 0.0
    %2211 = vmatpush.xpose.msra.mxu0 0.0
    %2212 = vmatpush.xpose.msra.mxu0 0.0
    %2213 = vmatpush.xpose.msra.mxu0 0.0
    %2214 = vmatpush.xpose.msra.mxu0 0.0
    %2215 = vmatpush.xpose.msra.mxu0 0.0
    %2216 = vmatpush.xpose.msra.mxu0 0.0
    %2217 = vmatpush.xpose.msra.mxu0 0.0
    %2218 = vmatpush.xpose.msra.mxu0 0.0
    %2219 = vmatpush.xpose.msra.mxu0 0.0
    %2220 = vmatpush.xpose.msra.mxu0 0.0
    %2221 = vmatpush.xpose.msra.mxu0 0.0
    %2222 = vmatpush.xpose.msra.mxu0 0.0
    %2223 = vmatpush.xpose.msra.mxu0 %v2206
    %2224 = vmatmul.f32.gmra.mxu0 %v2204
    %v2225 = vpop.f32.mrf.mxu0
    %v2226 = vadd.f32 0.0, %v2225
    %2227 = vdwg.mxu0
    %2228 = vrot.lane.b32.xlu0 %v2000, 112
    %v2229 = vpop.permute.xlu0 %2228
    %2230 = vrot.lane.b32.xlu0 %v1989, 80
    %v2231 = vpop.permute.xlu0 %2230
    %v2232 = vsel %vm281, %v2229, 0
    %v2234 = vsel %vm281, %v2231, 0
    %2236 = vmatpush.xpose.msra.mxu0 0.0
    %2237 = vmatpush.xpose.msra.mxu0 0.0
    %2238 = vmatpush.xpose.msra.mxu0 0.0
    %2239 = vmatpush.xpose.msra.mxu0 0.0
    %2240 = vmatpush.xpose.msra.mxu0 0.0
    %2241 = vmatpush.xpose.msra.mxu0 0.0
    %2242 = vmatpush.xpose.msra.mxu0 0.0
    %2243 = vmatpush.xpose.msra.mxu0 0.0
    %2244 = vmatpush.xpose.msra.mxu0 0.0
    %2245 = vmatpush.xpose.msra.mxu0 0.0
    %2246 = vmatpush.xpose.msra.mxu0 0.0
    %2247 = vmatpush.xpose.msra.mxu0 0.0
    %2248 = vmatpush.xpose.msra.mxu0 0.0
    %2249 = vmatpush.xpose.msra.mxu0 0.0
    %2250 = vmatpush.xpose.msra.mxu0 0.0
    %2251 = vmatpush.xpose.msra.mxu0 %v2234
    %2252 = vmatmul.f32.gmra.mxu0 %v2232
    %v2253 = vpop.f32.mrf.mxu0
    %v2254 = vadd.f32 0.0, %v2253
    %2255 = vdwg.mxu0
    %2256 = vrot.lane.b32.xlu0 %v2001, 112
    %v2257 = vpop.permute.xlu0 %2256
    %2258 = vrot.lane.b32.xlu0 %v1992, 80
    %v2259 = vpop.permute.xlu0 %2258
    %v2260 = vsel %vm281, %v2257, 0
    %v2262 = vsel %vm281, %v2259, 0
    %2264 = vmatpush.xpose.msra.mxu0 0.0
    %2265 = vmatpush.xpose.msra.mxu0 0.0
    %2266 = vmatpush.xpose.msra.mxu0 0.0
    %2267 = vmatpush.xpose.msra.mxu0 0.0
    %2268 = vmatpush.xpose.msra.mxu0 0.0
    %2269 = vmatpush.xpose.msra.mxu0 0.0
    %2270 = vmatpush.xpose.msra.mxu0 0.0
    %2271 = vmatpush.xpose.msra.mxu0 0.0
    %2272 = vmatpush.xpose.msra.mxu0 0.0
    %2273 = vmatpush.xpose.msra.mxu0 0.0
    %2274 = vmatpush.xpose.msra.mxu0 0.0
    %2275 = vmatpush.xpose.msra.mxu0 0.0
    %2276 = vmatpush.xpose.msra.mxu0 0.0
    %2277 = vmatpush.xpose.msra.mxu0 0.0
    %2278 = vmatpush.xpose.msra.mxu0 0.0
    %2279 = vmatpush.xpose.msra.mxu0 %v2262
    %2280 = vmatmul.f32.gmra.mxu0 %v2260
    %v2281 = vpop.f32.mrf.mxu0
    %v2282 = vadd.f32 0.0, %v2281
    %2283 = vdwg.mxu0
    %2284 = vrot.lane.b32.xlu0 %v2002, 112
    %v2285 = vpop.permute.xlu0 %2284
    %2286 = vrot.lane.b32.xlu0 %v1995, 80
    %v2287 = vpop.permute.xlu0 %2286
    %v2288 = vsel %vm281, %v2285, 0
    %v2290 = vsel %vm281, %v2287, 0
    %2292 = vmatpush.xpose.msra.mxu0 0.0
    %2293 = vmatpush.xpose.msra.mxu0 0.0
    %2294 = vmatpush.xpose.msra.mxu0 0.0
    %2295 = vmatpush.xpose.msra.mxu0 0.0
    %2296 = vmatpush.xpose.msra.mxu0 0.0
    %2297 = vmatpush.xpose.msra.mxu0 0.0
    %2298 = vmatpush.xpose.msra.mxu0 0.0
    %2299 = vmatpush.xpose.msra.mxu0 0.0
    %2300 = vmatpush.xpose.msra.mxu0 0.0
    %2301 = vmatpush.xpose.msra.mxu0 0.0
    %2302 = vmatpush.xpose.msra.mxu0 0.0
    %2303 = vmatpush.xpose.msra.mxu0 0.0
    %2304 = vmatpush.xpose.msra.mxu0 0.0
    %2305 = vmatpush.xpose.msra.mxu0 0.0
    %2306 = vmatpush.xpose.msra.mxu0 0.0
    %2307 = vmatpush.xpose.msra.mxu0 %v2290
    %2308 = vmatmul.f32.gmra.mxu0 %v2288
    %v2309 = vpop.f32.mrf.mxu0
    %v2310 = vadd.f32 0.0, %v2309
    %2311 = vdwg.mxu0
    %2312 = vrot.lane.b32.xlu0 %v2003, 112
    %v2313 = vpop.permute.xlu0 %2312
    %2314 = vrot.lane.b32.xlu0 %v1998, 80
    %v2315 = vpop.permute.xlu0 %2314
    %v2316 = vsel %vm281, %v2313, 0
    %v2318 = vsel %vm281, %v2315, 0
    %2320 = vmatpush.xpose.msra.mxu0 0.0
    %2321 = vmatpush.xpose.msra.mxu0 0.0
    %2322 = vmatpush.xpose.msra.mxu0 0.0
    %2323 = vmatpush.xpose.msra.mxu0 0.0
    %2324 = vmatpush.xpose.msra.mxu0 0.0
    %2325 = vmatpush.xpose.msra.mxu0 0.0
    %2326 = vmatpush.xpose.msra.mxu0 0.0
    %2327 = vmatpush.xpose.msra.mxu0 0.0
    %2328 = vmatpush.xpose.msra.mxu0 0.0
    %2329 = vmatpush.xpose.msra.mxu0 0.0
    %2330 = vmatpush.xpose.msra.mxu0 0.0
    %2331 = vmatpush.xpose.msra.mxu0 0.0
    %2332 = vmatpush.xpose.msra.mxu0 0.0
    %2333 = vmatpush.xpose.msra.mxu0 0.0
    %2334 = vmatpush.xpose.msra.mxu0 0.0
    %2335 = vmatpush.xpose.msra.mxu0 %v2318
    %2336 = vmatmul.f32.gmra.mxu0 %v2316
    %v2337 = vpop.f32.mrf.mxu0
    %v2338 = vadd.f32 0.0, %v2337
    %2339 = vdwg.mxu0
    %2340 = vrot.lane.b32.xlu0 %v2000, 104
    %v2341 = vpop.permute.xlu0 %2340
    %2342 = vrot.lane.b32.xlu0 %v1989, 72
    %v2343 = vpop.permute.xlu0 %2342
    %v2344 = vsel %vm281, %v2341, 0
    %v2346 = vsel %vm281, %v2343, 0
    %2348 = vmatpush.xpose.msra.mxu0 0.0
    %2349 = vmatpush.xpose.msra.mxu0 0.0
    %2350 = vmatpush.xpose.msra.mxu0 0.0
    %2351 = vmatpush.xpose.msra.mxu0 0.0
    %2352 = vmatpush.xpose.msra.mxu0 0.0
    %2353 = vmatpush.xpose.msra.mxu0 0.0
    %2354 = vmatpush.xpose.msra.mxu0 0.0
    %2355 = vmatpush.xpose.msra.mxu0 0.0
    %2356 = vmatpush.xpose.msra.mxu0 0.0
    %2357 = vmatpush.xpose.msra.mxu0 0.0
    %2358 = vmatpush.xpose.msra.mxu0 0.0
    %2359 = vmatpush.xpose.msra.mxu0 0.0
    %2360 = vmatpush.xpose.msra.mxu0 0.0
    %2361 = vmatpush.xpose.msra.mxu0 0.0
    %2362 = vmatpush.xpose.msra.mxu0 0.0
    %2363 = vmatpush.xpose.msra.mxu0 %v2346
    %2364 = vmatmul.f32.gmra.mxu0 %v2344
    %v2365 = vpop.f32.mrf.mxu0
    %v2366 = vadd.f32 0.0, %v2365
    %2367 = vdwg.mxu0
    %2368 = vrot.lane.b32.xlu0 %v2001, 104
    %v2369 = vpop.permute.xlu0 %2368
    %2370 = vrot.lane.b32.xlu0 %v1992, 72
    %v2371 = vpop.permute.xlu0 %2370
    %v2372 = vsel %vm281, %v2369, 0
    %v2374 = vsel %vm281, %v2371, 0
    %2376 = vmatpush.xpose.msra.mxu0 0.0
    %2377 = vmatpush.xpose.msra.mxu0 0.0
    %2378 = vmatpush.xpose.msra.mxu0 0.0
    %2379 = vmatpush.xpose.msra.mxu0 0.0
    %2380 = vmatpush.xpose.msra.mxu0 0.0
    %2381 = vmatpush.xpose.msra.mxu0 0.0
    %2382 = vmatpush.xpose.msra.mxu0 0.0
    %2383 = vmatpush.xpose.msra.mxu0 0.0
    %2384 = vmatpush.xpose.msra.mxu0 0.0
    %2385 = vmatpush.xpose.msra.mxu0 0.0
    %2386 = vmatpush.xpose.msra.mxu0 0.0
    %2387 = vmatpush.xpose.msra.mxu0 0.0
    %2388 = vmatpush.xpose.msra.mxu0 0.0
    %2389 = vmatpush.xpose.msra.mxu0 0.0
    %2390 = vmatpush.xpose.msra.mxu0 0.0
    %2391 = vmatpush.xpose.msra.mxu0 %v2374
    %2392 = vmatmul.f32.gmra.mxu0 %v2372
    %v2393 = vpop.f32.mrf.mxu0
    %v2394 = vadd.f32 0.0, %v2393
    %2395 = vdwg.mxu0
    %2396 = vrot.lane.b32.xlu0 %v2002, 104
    %v2397 = vpop.permute.xlu0 %2396
    %2398 = vrot.lane.b32.xlu0 %v1995, 72
    %v2399 = vpop.permute.xlu0 %2398
    %v2400 = vsel %vm281, %v2397, 0
    %v2402 = vsel %vm281, %v2399, 0
    %2404 = vmatpush.xpose.msra.mxu0 0.0
    %2405 = vmatpush.xpose.msra.mxu0 0.0
    %2406 = vmatpush.xpose.msra.mxu0 0.0
    %2407 = vmatpush.xpose.msra.mxu0 0.0
    %2408 = vmatpush.xpose.msra.mxu0 0.0
    %2409 = vmatpush.xpose.msra.mxu0 0.0
    %2410 = vmatpush.xpose.msra.mxu0 0.0
    %2411 = vmatpush.xpose.msra.mxu0 0.0
    %2412 = vmatpush.xpose.msra.mxu0 0.0
    %2413 = vmatpush.xpose.msra.mxu0 0.0
    %2414 = vmatpush.xpose.msra.mxu0 0.0
    %2415 = vmatpush.xpose.msra.mxu0 0.0
    %2416 = vmatpush.xpose.msra.mxu0 0.0
    %2417 = vmatpush.xpose.msra.mxu0 0.0
    %2418 = vmatpush.xpose.msra.mxu0 0.0
    %2419 = vmatpush.xpose.msra.mxu0 %v2402
    %2420 = vmatmul.f32.gmra.mxu0 %v2400
    %v2421 = vpop.f32.mrf.mxu0
    %v2422 = vadd.f32 0.0, %v2421
    %2423 = vdwg.mxu0
    %2424 = vrot.lane.b32.xlu0 %v2003, 104
    %v2425 = vpop.permute.xlu0 %2424
    %2426 = vrot.lane.b32.xlu0 %v1998, 72
    %v2427 = vpop.permute.xlu0 %2426
    %v2428 = vsel %vm281, %v2425, 0
    %v2430 = vsel %vm281, %v2427, 0
    %2432 = vmatpush.xpose.msra.mxu0 0.0
    %2433 = vmatpush.xpose.msra.mxu0 0.0
    %2434 = vmatpush.xpose.msra.mxu0 0.0
    %2435 = vmatpush.xpose.msra.mxu0 0.0
    %2436 = vmatpush.xpose.msra.mxu0 0.0
    %2437 = vmatpush.xpose.msra.mxu0 0.0
    %2438 = vmatpush.xpose.msra.mxu0 0.0
    %2439 = vmatpush.xpose.msra.mxu0 0.0
    %2440 = vmatpush.xpose.msra.mxu0 0.0
    %2441 = vmatpush.xpose.msra.mxu0 0.0
    %2442 = vmatpush.xpose.msra.mxu0 0.0
    %2443 = vmatpush.xpose.msra.mxu0 0.0
    %2444 = vmatpush.xpose.msra.mxu0 0.0
    %2445 = vmatpush.xpose.msra.mxu0 0.0
    %2446 = vmatpush.xpose.msra.mxu0 0.0
    %2447 = vmatpush.xpose.msra.mxu0 %v2430
    %2448 = vmatmul.f32.gmra.mxu0 %v2428
    %v2449 = vpop.f32.mrf.mxu0
    %v2450 = vadd.f32 0.0, %v2449
    %2451 = vdwg.mxu0
    %v2452 = vadd.f32 %v2030, %v727
    %v2453 = vadd.f32 %v2058, %v728
    %v2454 = vadd.f32 %v2086, %v729
    %v2455 = vadd.f32 %v2114, %v730
    %v2456 = vadd.f32 %v2142, %v727
    %v2457 = vadd.f32 %v2170, %v728
    %v2458 = vadd.f32 %v2198, %v729
    %v2459 = vadd.f32 %v2226, %v730
    %v2460 = vadd.f32 %v2254, %v727
    %v2461 = vadd.f32 %v2282, %v728
    %v2462 = vadd.f32 %v2310, %v729
    %v2463 = vadd.f32 %v2338, %v730
    %v2464 = vadd.f32 %v2366, %v727
    %v2465 = vadd.f32 %v2394, %v728
    %v2466 = vadd.f32 %v2422, %v729
    %v2467 = vadd.f32 %v2450, %v730
    %v2468 = vsel %vm281, %v2452, -inf
    %2469 = vmax.xlane.f32.xlu0 %v2468
    %v2470 = vpop.xlane.xlu0 %2469
    %v2471 = vsel %vm281, %v2453, -inf
    %2472 = vmax.xlane.f32.xlu0 %v2471
    %v2473 = vpop.xlane.xlu0 %2472
    %v2474 = vsel %vm281, %v2454, -inf
    %2475 = vmax.xlane.f32.xlu0 %v2474
    %v2476 = vpop.xlane.xlu0 %2475
    %v2477 = vsel %vm281, %v2455, -inf
    %2478 = vmax.xlane.f32.xlu0 %v2477
    %v2479 = vpop.xlane.xlu0 %2478
    %v2480 = vsel %vm281, %v2456, -inf
    %2481 = vmax.xlane.f32.xlu0 %v2480
    %v2482 = vpop.xlane.xlu0 %2481
    %v2483 = vsel %vm281, %v2457, -inf
    %2484 = vmax.xlane.f32.xlu0 %v2483
    %v2485 = vpop.xlane.xlu0 %2484
    %v2486 = vsel %vm281, %v2458, -inf
    %2487 = vmax.xlane.f32.xlu0 %v2486
    %v2488 = vpop.xlane.xlu0 %2487
    %v2489 = vsel %vm281, %v2459, -inf
    %2490 = vmax.xlane.f32.xlu0 %v2489
    %v2491 = vpop.xlane.xlu0 %2490
    %v2492 = vsel %vm281, %v2460, -inf
    %2493 = vmax.xlane.f32.xlu0 %v2492
    %v2494 = vpop.xlane.xlu0 %2493
    %v2495 = vsel %vm281, %v2461, -inf
    %2496 = vmax.xlane.f32.xlu0 %v2495
    %v2497 = vpop.xlane.xlu0 %2496
    %v2498 = vsel %vm281, %v2462, -inf
    %2499 = vmax.xlane.f32.xlu0 %v2498
    %v2500 = vpop.xlane.xlu0 %2499
    %v2501 = vsel %vm281, %v2463, -inf
    %2502 = vmax.xlane.f32.xlu0 %v2501
    %v2503 = vpop.xlane.xlu0 %2502
    %v2504 = vsel %vm281, %v2464, -inf
    %2505 = vmax.xlane.f32.xlu0 %v2504
    %v2506 = vpop.xlane.xlu0 %2505
    %v2507 = vsel %vm281, %v2465, -inf
    %2508 = vmax.xlane.f32.xlu0 %v2507
    %v2509 = vpop.xlane.xlu0 %2508
    %v2510 = vsel %vm281, %v2466, -inf
    %2511 = vmax.xlane.f32.xlu0 %v2510
    %v2512 = vpop.xlane.xlu0 %2511
    %v2513 = vsel %vm281, %v2467, -inf
    %2514 = vmax.xlane.f32.xlu0 %v2513
    %v2515 = vpop.xlane.xlu0 %2514
    %v2516 = vsub.f32 %v2452, %v2470
    %v2517 = vsub.f32 %v2453, %v2473
    %v2518 = vsub.f32 %v2454, %v2476
    %v2519 = vsub.f32 %v2455, %v2479
    %v2520 = vsub.f32 %v2456, %v2482
    %v2521 = vsub.f32 %v2457, %v2485
    %v2522 = vsub.f32 %v2458, %v2488
    %v2523 = vsub.f32 %v2459, %v2491
    %v2524 = vsub.f32 %v2460, %v2494
    %v2525 = vsub.f32 %v2461, %v2497
    %v2526 = vsub.f32 %v2462, %v2500
    %v2527 = vsub.f32 %v2463, %v2503
    %v2528 = vsub.f32 %v2464, %v2506
    %v2529 = vsub.f32 %v2465, %v2509
    %v2530 = vsub.f32 %v2466, %v2512
    %v2531 = vsub.f32 %v2467, %v2515
    %v2532 = vmul.f32 %v2516, 1.442695
    %v2533 = vpow.pop %v2532
    %v2534 = vmul.f32 %v2517, 1.442695
    %v2535 = vpow.pop %v2534
    %v2536 = vmul.f32 %v2518, 1.442695
    %v2537 = vpow.pop %v2536
    %v2538 = vmul.f32 %v2519, 1.442695
    %v2539 = vpow.pop %v2538
    %v2540 = vmul.f32 %v2520, 1.442695
    %v2541 = vpow.pop %v2540
    %v2542 = vmul.f32 %v2521, 1.442695
    %v2543 = vpow.pop %v2542
    %v2544 = vmul.f32 %v2522, 1.442695
    %v2545 = vpow.pop %v2544
    %v2546 = vmul.f32 %v2523, 1.442695
    %v2547 = vpow.pop %v2546
    %v2548 = vmul.f32 %v2524, 1.442695
    %v2549 = vpow.pop %v2548
    %v2550 = vmul.f32 %v2525, 1.442695
    %v2551 = vpow.pop %v2550
    %v2552 = vmul.f32 %v2526, 1.442695
    %v2553 = vpow.pop %v2552
    %v2554 = vmul.f32 %v2527, 1.442695
    %v2555 = vpow.pop %v2554
    %v2556 = vmul.f32 %v2528, 1.442695
    %v2557 = vpow.pop %v2556
    %v2558 = vmul.f32 %v2529, 1.442695
    %v2559 = vpow.pop %v2558
    %v2560 = vmul.f32 %v2530, 1.442695
    %v2561 = vpow.pop %v2560
    %v2562 = vmul.f32 %v2531, 1.442695
    %v2563 = vpow.pop %v2562
    %v2564 = vsel %vm281, %v2533, 0.0
    %2565 = vadd.xlane.f32.xlu0 %v2564
    %v2566 = vpop.xlane.xlu0 %2565
    %v2567 = vsel %vm281, %v2535, 0.0
    %2568 = vadd.xlane.f32.xlu0 %v2567
    %v2569 = vpop.xlane.xlu0 %2568
    %v2570 = vsel %vm281, %v2537, 0.0
    %2571 = vadd.xlane.f32.xlu0 %v2570
    %v2572 = vpop.xlane.xlu0 %2571
    %v2573 = vsel %vm281, %v2539, 0.0
    %2574 = vadd.xlane.f32.xlu0 %v2573
    %v2575 = vpop.xlane.xlu0 %2574
    %v2576 = vsel %vm281, %v2541, 0.0
    %2577 = vadd.xlane.f32.xlu0 %v2576
    %v2578 = vpop.xlane.xlu0 %2577
    %v2579 = vsel %vm281, %v2543, 0.0
    %2580 = vadd.xlane.f32.xlu0 %v2579
    %v2581 = vpop.xlane.xlu0 %2580
    %v2582 = vsel %vm281, %v2545, 0.0
    %2583 = vadd.xlane.f32.xlu0 %v2582
    %v2584 = vpop.xlane.xlu0 %2583
    %v2585 = vsel %vm281, %v2547, 0.0
    %2586 = vadd.xlane.f32.xlu0 %v2585
    %v2587 = vpop.xlane.xlu0 %2586
    %v2588 = vsel %vm281, %v2549, 0.0
    %2589 = vadd.xlane.f32.xlu0 %v2588
    %v2590 = vpop.xlane.xlu0 %2589
    %v2591 = vsel %vm281, %v2551, 0.0
    %2592 = vadd.xlane.f32.xlu0 %v2591
    %v2593 = vpop.xlane.xlu0 %2592
    %v2594 = vsel %vm281, %v2553, 0.0
    %2595 = vadd.xlane.f32.xlu0 %v2594
    %v2596 = vpop.xlane.xlu0 %2595
    %v2597 = vsel %vm281, %v2555, 0.0
    %2598 = vadd.xlane.f32.xlu0 %v2597
    %v2599 = vpop.xlane.xlu0 %2598
    %v2600 = vsel %vm281, %v2557, 0.0
    %2601 = vadd.xlane.f32.xlu0 %v2600
    %v2602 = vpop.xlane.xlu0 %2601
    %v2603 = vsel %vm281, %v2559, 0.0
    %2604 = vadd.xlane.f32.xlu0 %v2603
    %v2605 = vpop.xlane.xlu0 %2604
    %v2606 = vsel %vm281, %v2561, 0.0
    %2607 = vadd.xlane.f32.xlu0 %v2606
    %v2608 = vpop.xlane.xlu0 %2607
    %v2609 = vsel %vm281, %v2563, 0.0
    %2610 = vadd.xlane.f32.xlu0 %v2609
    %v2611 = vpop.xlane.xlu0 %2610
    %v2612 = vrcp.pop %v2566
    %v2613 = vrcp.pop %v2569
    %v2614 = vrcp.pop %v2572
    %v2615 = vrcp.pop %v2575
    %v2616 = vrcp.pop %v2578
    %v2617 = vrcp.pop %v2581
    %v2618 = vrcp.pop %v2584
    %v2619 = vrcp.pop %v2587
    %v2620 = vrcp.pop %v2590
    %v2621 = vrcp.pop %v2593
    %v2622 = vrcp.pop %v2596
    %v2623 = vrcp.pop %v2599
    %v2624 = vrcp.pop %v2602
    %v2625 = vrcp.pop %v2605
    %v2626 = vrcp.pop %v2608
    %v2627 = vrcp.pop %v2611
    %v2628 = vmul.f32 %v2533, %v2612
    %v2629 = vmul.f32 %v2535, %v2613
    %v2630 = vmul.f32 %v2537, %v2614
    %v2631 = vmul.f32 %v2539, %v2615
    %v2632 = vmul.f32 %v2541, %v2616
    %v2633 = vmul.f32 %v2543, %v2617
    %v2634 = vmul.f32 %v2545, %v2618
    %v2635 = vmul.f32 %v2547, %v2619
    %v2636 = vmul.f32 %v2549, %v2620
    %v2637 = vmul.f32 %v2551, %v2621
    %v2638 = vmul.f32 %v2553, %v2622
    %v2639 = vmul.f32 %v2555, %v2623
    %v2640 = vmul.f32 %v2557, %v2624
    %v2641 = vmul.f32 %v2559, %v2625
    %v2642 = vmul.f32 %v2561, %v2626
    %v2643 = vmul.f32 %v2563, %v2627
    %2644 = vrot.lane.b32.xlu0 %v1989, 64
    %v2645 = vpop.permute.xlu0 %2644
    %v2648 = vsel %vm281, %v2628, 0
    %2650 = vmatpush.msra.mxu0 0.0
    %2651 = vmatpush.msra.mxu0 0.0
    %2652 = vmatpush.msra.mxu0 0.0
    %2653 = vmatpush.msra.mxu0 0.0
    %2654 = vmatpush.msra.mxu0 0.0
    %2655 = vmatpush.msra.mxu0 0.0
    %2656 = vmatpush.msra.mxu0 0.0
    %2657 = vmatpush.msra.mxu0 0.0
    %2658 = vmatpush.msra.mxu0 0.0
    %2659 = vmatpush.msra.mxu0 0.0
    %2660 = vmatpush.msra.mxu0 0.0
    %2661 = vmatpush.msra.mxu0 0.0
    %2662 = vmatpush.msra.mxu0 0.0
    %2663 = vmatpush.msra.mxu0 0.0
    %2664 = vmatpush.msra.mxu0 0.0
    %2665 = vmatpush.msra.mxu0 %v2645
    %2666 = vmatmul.f32.gmra.mxu0 %v2648
    %v2667 = vpop.f32.mrf.mxu0
    %v2668 = vadd.f32 0.0, %v2667
    %2669 = vdwg.mxu0
    %2670 = vrot.lane.b32.xlu0 %v1992, 64
    %v2671 = vpop.permute.xlu0 %2670
    %v2674 = vsel %vm281, %v2629, 0
    %2676 = vmatpush.msra.mxu0 0.0
    %2677 = vmatpush.msra.mxu0 0.0
    %2678 = vmatpush.msra.mxu0 0.0
    %2679 = vmatpush.msra.mxu0 0.0
    %2680 = vmatpush.msra.mxu0 0.0
    %2681 = vmatpush.msra.mxu0 0.0
    %2682 = vmatpush.msra.mxu0 0.0
    %2683 = vmatpush.msra.mxu0 0.0
    %2684 = vmatpush.msra.mxu0 0.0
    %2685 = vmatpush.msra.mxu0 0.0
    %2686 = vmatpush.msra.mxu0 0.0
    %2687 = vmatpush.msra.mxu0 0.0
    %2688 = vmatpush.msra.mxu0 0.0
    %2689 = vmatpush.msra.mxu0 0.0
    %2690 = vmatpush.msra.mxu0 0.0
    %2691 = vmatpush.msra.mxu0 %v2671
    %2692 = vmatmul.f32.gmra.mxu0 %v2674
    %v2693 = vpop.f32.mrf.mxu0
    %v2694 = vadd.f32 0.0, %v2693
    %2695 = vdwg.mxu0
    %2696 = vrot.lane.b32.xlu0 %v1995, 64
    %v2697 = vpop.permute.xlu0 %2696
    %v2700 = vsel %vm281, %v2630, 0
    %2702 = vmatpush.msra.mxu0 0.0
    %2703 = vmatpush.msra.mxu0 0.0
    %2704 = vmatpush.msra.mxu0 0.0
    %2705 = vmatpush.msra.mxu0 0.0
    %2706 = vmatpush.msra.mxu0 0.0
    %2707 = vmatpush.msra.mxu0 0.0
    %2708 = vmatpush.msra.mxu0 0.0
    %2709 = vmatpush.msra.mxu0 0.0
    %2710 = vmatpush.msra.mxu0 0.0
    %2711 = vmatpush.msra.mxu0 0.0
    %2712 = vmatpush.msra.mxu0 0.0
    %2713 = vmatpush.msra.mxu0 0.0
    %2714 = vmatpush.msra.mxu0 0.0
    %2715 = vmatpush.msra.mxu0 0.0
    %2716 = vmatpush.msra.mxu0 0.0
    %2717 = vmatpush.msra.mxu0 %v2697
    %2718 = vmatmul.f32.gmra.mxu0 %v2700
    %v2719 = vpop.f32.mrf.mxu0
    %v2720 = vadd.f32 0.0, %v2719
    %2721 = vdwg.mxu0
    %2722 = vrot.lane.b32.xlu0 %v1998, 64
    %v2723 = vpop.permute.xlu0 %2722
    %v2726 = vsel %vm281, %v2631, 0
    %2728 = vmatpush.msra.mxu0 0.0
    %2729 = vmatpush.msra.mxu0 0.0
    %2730 = vmatpush.msra.mxu0 0.0
    %2731 = vmatpush.msra.mxu0 0.0
    %2732 = vmatpush.msra.mxu0 0.0
    %2733 = vmatpush.msra.mxu0 0.0
    %2734 = vmatpush.msra.mxu0 0.0
    %2735 = vmatpush.msra.mxu0 0.0
    %2736 = vmatpush.msra.mxu0 0.0
    %2737 = vmatpush.msra.mxu0 0.0
    %2738 = vmatpush.msra.mxu0 0.0
    %2739 = vmatpush.msra.mxu0 0.0
    %2740 = vmatpush.msra.mxu0 0.0
    %2741 = vmatpush.msra.mxu0 0.0
    %2742 = vmatpush.msra.mxu0 0.0
    %2743 = vmatpush.msra.mxu0 %v2723
    %2744 = vmatmul.f32.gmra.mxu0 %v2726
    %v2745 = vpop.f32.mrf.mxu0
    %v2746 = vadd.f32 0.0, %v2745
    %2747 = vdwg.mxu0
    %2748 = vrot.lane.b32.xlu0 %v1989, 56
    %v2749 = vpop.permute.xlu0 %2748
    %v2752 = vsel %vm281, %v2632, 0
    %2754 = vmatpush.msra.mxu0 0.0
    %2755 = vmatpush.msra.mxu0 0.0
    %2756 = vmatpush.msra.mxu0 0.0
    %2757 = vmatpush.msra.mxu0 0.0
    %2758 = vmatpush.msra.mxu0 0.0
    %2759 = vmatpush.msra.mxu0 0.0
    %2760 = vmatpush.msra.mxu0 0.0
    %2761 = vmatpush.msra.mxu0 0.0
    %2762 = vmatpush.msra.mxu0 0.0
    %2763 = vmatpush.msra.mxu0 0.0
    %2764 = vmatpush.msra.mxu0 0.0
    %2765 = vmatpush.msra.mxu0 0.0
    %2766 = vmatpush.msra.mxu0 0.0
    %2767 = vmatpush.msra.mxu0 0.0
    %2768 = vmatpush.msra.mxu0 0.0
    %2769 = vmatpush.msra.mxu0 %v2749
    %2770 = vmatmul.f32.gmra.mxu0 %v2752
    %v2771 = vpop.f32.mrf.mxu0
    %v2772 = vadd.f32 0.0, %v2771
    %2773 = vdwg.mxu0
    %2774 = vrot.lane.b32.xlu0 %v1992, 56
    %v2775 = vpop.permute.xlu0 %2774
    %v2778 = vsel %vm281, %v2633, 0
    %2780 = vmatpush.msra.mxu0 0.0
    %2781 = vmatpush.msra.mxu0 0.0
    %2782 = vmatpush.msra.mxu0 0.0
    %2783 = vmatpush.msra.mxu0 0.0
    %2784 = vmatpush.msra.mxu0 0.0
    %2785 = vmatpush.msra.mxu0 0.0
    %2786 = vmatpush.msra.mxu0 0.0
    %2787 = vmatpush.msra.mxu0 0.0
    %2788 = vmatpush.msra.mxu0 0.0
    %2789 = vmatpush.msra.mxu0 0.0
    %2790 = vmatpush.msra.mxu0 0.0
    %2791 = vmatpush.msra.mxu0 0.0
    %2792 = vmatpush.msra.mxu0 0.0
    %2793 = vmatpush.msra.mxu0 0.0
    %2794 = vmatpush.msra.mxu0 0.0
    %2795 = vmatpush.msra.mxu0 %v2775
    %2796 = vmatmul.f32.gmra.mxu0 %v2778
    %v2797 = vpop.f32.mrf.mxu0
    %v2798 = vadd.f32 0.0, %v2797
    %2799 = vdwg.mxu0
    %2800 = vrot.lane.b32.xlu0 %v1995, 56
    %v2801 = vpop.permute.xlu0 %2800
    %v2804 = vsel %vm281, %v2634, 0
    %2806 = vmatpush.msra.mxu0 0.0
    %2807 = vmatpush.msra.mxu0 0.0
    %2808 = vmatpush.msra.mxu0 0.0
    %2809 = vmatpush.msra.mxu0 0.0
    %2810 = vmatpush.msra.mxu0 0.0
    %2811 = vmatpush.msra.mxu0 0.0
    %2812 = vmatpush.msra.mxu0 0.0
    %2813 = vmatpush.msra.mxu0 0.0
    %2814 = vmatpush.msra.mxu0 0.0
    %2815 = vmatpush.msra.mxu0 0.0
    %2816 = vmatpush.msra.mxu0 0.0
    %2817 = vmatpush.msra.mxu0 0.0
    %2818 = vmatpush.msra.mxu0 0.0
    %2819 = vmatpush.msra.mxu0 0.0
    %2820 = vmatpush.msra.mxu0 0.0
    %2821 = vmatpush.msra.mxu0 %v2801
    %2822 = vmatmul.f32.gmra.mxu0 %v2804
    %v2823 = vpop.f32.mrf.mxu0
    %v2824 = vadd.f32 0.0, %v2823
    %2825 = vdwg.mxu0
    %2826 = vrot.lane.b32.xlu0 %v1998, 56
    %v2827 = vpop.permute.xlu0 %2826
    %v2830 = vsel %vm281, %v2635, 0
    %2832 = vmatpush.msra.mxu0 0.0
    %2833 = vmatpush.msra.mxu0 0.0
    %2834 = vmatpush.msra.mxu0 0.0
    %2835 = vmatpush.msra.mxu0 0.0
    %2836 = vmatpush.msra.mxu0 0.0
    %2837 = vmatpush.msra.mxu0 0.0
    %2838 = vmatpush.msra.mxu0 0.0
    %2839 = vmatpush.msra.mxu0 0.0
    %2840 = vmatpush.msra.mxu0 0.0
    %2841 = vmatpush.msra.mxu0 0.0
    %2842 = vmatpush.msra.mxu0 0.0
    %2843 = vmatpush.msra.mxu0 0.0
    %2844 = vmatpush.msra.mxu0 0.0
    %2845 = vmatpush.msra.mxu0 0.0
    %2846 = vmatpush.msra.mxu0 0.0
    %2847 = vmatpush.msra.mxu0 %v2827
    %2848 = vmatmul.f32.gmra.mxu0 %v2830
    %v2849 = vpop.f32.mrf.mxu0
    %v2850 = vadd.f32 0.0, %v2849
    %2851 = vdwg.mxu0
    %2852 = vrot.lane.b32.xlu0 %v1989, 48
    %v2853 = vpop.permute.xlu0 %2852
    %v2856 = vsel %vm281, %v2636, 0
    %2858 = vmatpush.msra.mxu0 0.0
    %2859 = vmatpush.msra.mxu0 0.0
    %2860 = vmatpush.msra.mxu0 0.0
    %2861 = vmatpush.msra.mxu0 0.0
    %2862 = vmatpush.msra.mxu0 0.0
    %2863 = vmatpush.msra.mxu0 0.0
    %2864 = vmatpush.msra.mxu0 0.0
    %2865 = vmatpush.msra.mxu0 0.0
    %2866 = vmatpush.msra.mxu0 0.0
    %2867 = vmatpush.msra.mxu0 0.0
    %2868 = vmatpush.msra.mxu0 0.0
    %2869 = vmatpush.msra.mxu0 0.0
    %2870 = vmatpush.msra.mxu0 0.0
    %2871 = vmatpush.msra.mxu0 0.0
    %2872 = vmatpush.msra.mxu0 0.0
    %2873 = vmatpush.msra.mxu0 %v2853
    %2874 = vmatmul.f32.gmra.mxu0 %v2856
    %v2875 = vpop.f32.mrf.mxu0
    %v2876 = vadd.f32 0.0, %v2875
    %2877 = vdwg.mxu0
    %2878 = vrot.lane.b32.xlu0 %v1992, 48
    %v2879 = vpop.permute.xlu0 %2878
    %v2882 = vsel %vm281, %v2637, 0
    %2884 = vmatpush.msra.mxu0 0.0
    %2885 = vmatpush.msra.mxu0 0.0
    %2886 = vmatpush.msra.mxu0 0.0
    %2887 = vmatpush.msra.mxu0 0.0
    %2888 = vmatpush.msra.mxu0 0.0
    %2889 = vmatpush.msra.mxu0 0.0
    %2890 = vmatpush.msra.mxu0 0.0
    %2891 = vmatpush.msra.mxu0 0.0
    %2892 = vmatpush.msra.mxu0 0.0
    %2893 = vmatpush.msra.mxu0 0.0
    %2894 = vmatpush.msra.mxu0 0.0
    %2895 = vmatpush.msra.mxu0 0.0
    %2896 = vmatpush.msra.mxu0 0.0
    %2897 = vmatpush.msra.mxu0 0.0
    %2898 = vmatpush.msra.mxu0 0.0
    %2899 = vmatpush.msra.mxu0 %v2879
    %2900 = vmatmul.f32.gmra.mxu0 %v2882
    %v2901 = vpop.f32.mrf.mxu0
    %v2902 = vadd.f32 0.0, %v2901
    %2903 = vdwg.mxu0
    %2904 = vrot.lane.b32.xlu0 %v1995, 48
    %v2905 = vpop.permute.xlu0 %2904
    %v2908 = vsel %vm281, %v2638, 0
    %2910 = vmatpush.msra.mxu0 0.0
    %2911 = vmatpush.msra.mxu0 0.0
    %2912 = vmatpush.msra.mxu0 0.0
    %2913 = vmatpush.msra.mxu0 0.0
    %2914 = vmatpush.msra.mxu0 0.0
    %2915 = vmatpush.msra.mxu0 0.0
    %2916 = vmatpush.msra.mxu0 0.0
    %2917 = vmatpush.msra.mxu0 0.0
    %2918 = vmatpush.msra.mxu0 0.0
    %2919 = vmatpush.msra.mxu0 0.0
    %2920 = vmatpush.msra.mxu0 0.0
    %2921 = vmatpush.msra.mxu0 0.0
    %2922 = vmatpush.msra.mxu0 0.0
    %2923 = vmatpush.msra.mxu0 0.0
    %2924 = vmatpush.msra.mxu0 0.0
    %2925 = vmatpush.msra.mxu0 %v2905
    %2926 = vmatmul.f32.gmra.mxu0 %v2908
    %v2927 = vpop.f32.mrf.mxu0
    %v2928 = vadd.f32 0.0, %v2927
    %2929 = vdwg.mxu0
    %2930 = vrot.lane.b32.xlu0 %v1998, 48
    %v2931 = vpop.permute.xlu0 %2930
    %v2934 = vsel %vm281, %v2639, 0
    %2936 = vmatpush.msra.mxu0 0.0
    %2937 = vmatpush.msra.mxu0 0.0
    %2938 = vmatpush.msra.mxu0 0.0
    %2939 = vmatpush.msra.mxu0 0.0
    %2940 = vmatpush.msra.mxu0 0.0
    %2941 = vmatpush.msra.mxu0 0.0
    %2942 = vmatpush.msra.mxu0 0.0
    %2943 = vmatpush.msra.mxu0 0.0
    %2944 = vmatpush.msra.mxu0 0.0
    %2945 = vmatpush.msra.mxu0 0.0
    %2946 = vmatpush.msra.mxu0 0.0
    %2947 = vmatpush.msra.mxu0 0.0
    %2948 = vmatpush.msra.mxu0 0.0
    %2949 = vmatpush.msra.mxu0 0.0
    %2950 = vmatpush.msra.mxu0 0.0
    %2951 = vmatpush.msra.mxu0 %v2931
    %2952 = vmatmul.f32.gmra.mxu0 %v2934
    %v2953 = vpop.f32.mrf.mxu0
    %v2954 = vadd.f32 0.0, %v2953
    %2955 = vdwg.mxu0
    %2956 = vrot.lane.b32.xlu0 %v1989, 40
    %v2957 = vpop.permute.xlu0 %2956
    %v2960 = vsel %vm281, %v2640, 0
    %2962 = vmatpush.msra.mxu0 0.0
    %2963 = vmatpush.msra.mxu0 0.0
    %2964 = vmatpush.msra.mxu0 0.0
    %2965 = vmatpush.msra.mxu0 0.0
    %2966 = vmatpush.msra.mxu0 0.0
    %2967 = vmatpush.msra.mxu0 0.0
    %2968 = vmatpush.msra.mxu0 0.0
    %2969 = vmatpush.msra.mxu0 0.0
    %2970 = vmatpush.msra.mxu0 0.0
    %2971 = vmatpush.msra.mxu0 0.0
    %2972 = vmatpush.msra.mxu0 0.0
    %2973 = vmatpush.msra.mxu0 0.0
    %2974 = vmatpush.msra.mxu0 0.0
    %2975 = vmatpush.msra.mxu0 0.0
    %2976 = vmatpush.msra.mxu0 0.0
    %2977 = vmatpush.msra.mxu0 %v2957
    %2978 = vmatmul.f32.gmra.mxu0 %v2960
    %v2979 = vpop.f32.mrf.mxu0
    %v2980 = vadd.f32 0.0, %v2979
    %2981 = vdwg.mxu0
    %2982 = vrot.lane.b32.xlu0 %v1992, 40
    %v2983 = vpop.permute.xlu0 %2982
    %v2986 = vsel %vm281, %v2641, 0
    %2988 = vmatpush.msra.mxu0 0.0
    %2989 = vmatpush.msra.mxu0 0.0
    %2990 = vmatpush.msra.mxu0 0.0
    %2991 = vmatpush.msra.mxu0 0.0
    %2992 = vmatpush.msra.mxu0 0.0
    %2993 = vmatpush.msra.mxu0 0.0
    %2994 = vmatpush.msra.mxu0 0.0
    %2995 = vmatpush.msra.mxu0 0.0
    %2996 = vmatpush.msra.mxu0 0.0
    %2997 = vmatpush.msra.mxu0 0.0
    %2998 = vmatpush.msra.mxu0 0.0
    %2999 = vmatpush.msra.mxu0 0.0
    %3000 = vmatpush.msra.mxu0 0.0
    %3001 = vmatpush.msra.mxu0 0.0
    %3002 = vmatpush.msra.mxu0 0.0
    %3003 = vmatpush.msra.mxu0 %v2983
    %3004 = vmatmul.f32.gmra.mxu0 %v2986
    %v3005 = vpop.f32.mrf.mxu0
    %v3006 = vadd.f32 0.0, %v3005
    %3007 = vdwg.mxu0
    %3008 = vrot.lane.b32.xlu0 %v1995, 40
    %v3009 = vpop.permute.xlu0 %3008
    %v3012 = vsel %vm281, %v2642, 0
    %3014 = vmatpush.msra.mxu0 0.0
    %3015 = vmatpush.msra.mxu0 0.0
    %3016 = vmatpush.msra.mxu0 0.0
    %3017 = vmatpush.msra.mxu0 0.0
    %3018 = vmatpush.msra.mxu0 0.0
    %3019 = vmatpush.msra.mxu0 0.0
    %3020 = vmatpush.msra.mxu0 0.0
    %3021 = vmatpush.msra.mxu0 0.0
    %3022 = vmatpush.msra.mxu0 0.0
    %3023 = vmatpush.msra.mxu0 0.0
    %3024 = vmatpush.msra.mxu0 0.0
    %3025 = vmatpush.msra.mxu0 0.0
    %3026 = vmatpush.msra.mxu0 0.0
    %3027 = vmatpush.msra.mxu0 0.0
    %3028 = vmatpush.msra.mxu0 0.0
    %3029 = vmatpush.msra.mxu0 %v3009
    %3030 = vmatmul.f32.gmra.mxu0 %v3012
    %v3031 = vpop.f32.mrf.mxu0
    %v3032 = vadd.f32 0.0, %v3031
    %3033 = vdwg.mxu0
    %3034 = vrot.lane.b32.xlu0 %v1998, 40
    %v3035 = vpop.permute.xlu0 %3034
    %v3038 = vsel %vm281, %v2643, 0
    %3040 = vmatpush.msra.mxu0 0.0
    %3041 = vmatpush.msra.mxu0 0.0
    %3042 = vmatpush.msra.mxu0 0.0
    %3043 = vmatpush.msra.mxu0 0.0
    %3044 = vmatpush.msra.mxu0 0.0
    %3045 = vmatpush.msra.mxu0 0.0
    %3046 = vmatpush.msra.mxu0 0.0
    %3047 = vmatpush.msra.mxu0 0.0
    %3048 = vmatpush.msra.mxu0 0.0
    %3049 = vmatpush.msra.mxu0 0.0
    %3050 = vmatpush.msra.mxu0 0.0
    %3051 = vmatpush.msra.mxu0 0.0
    %3052 = vmatpush.msra.mxu0 0.0
    %3053 = vmatpush.msra.mxu0 0.0
    %3054 = vmatpush.msra.mxu0 0.0
    %3055 = vmatpush.msra.mxu0 %v3035
    %3056 = vmatmul.f32.gmra.mxu0 %v3038
    %v3057 = vpop.f32.mrf.mxu0
    %v3058 = vadd.f32 0.0, %v3057
    %3059 = vdwg.mxu0
    %3064 = vrot.lane.b32.xlu0 %v2772, 8
    %v3065 = vpop.permute.xlu0 %3064
    %3066 = vrot.lane.b32.xlu0 %v2798, 8
    %v3067 = vpop.permute.xlu0 %3066
    %3068 = vrot.lane.b32.xlu0 %v2824, 8
    %v3069 = vpop.permute.xlu0 %3068
    %3070 = vrot.lane.b32.xlu0 %v2850, 8
    %v3071 = vpop.permute.xlu0 %3070
    %3080 = vrot.lane.b32.xlu0 %v2876, 16
    %v3081 = vpop.permute.xlu0 %3080
    %3082 = vrot.lane.b32.xlu0 %v2902, 16
    %v3083 = vpop.permute.xlu0 %3082
    %3084 = vrot.lane.b32.xlu0 %v2928, 16
    %v3085 = vpop.permute.xlu0 %3084
    %3086 = vrot.lane.b32.xlu0 %v2954, 16
    %v3087 = vpop.permute.xlu0 %3086
    %3096 = vrot.lane.b32.xlu0 %v2980, 24
    %v3097 = vpop.permute.xlu0 %3096
    %3098 = vrot.lane.b32.xlu0 %v3006, 24
    %v3099 = vpop.permute.xlu0 %3098
    %3100 = vrot.lane.b32.xlu0 %v3032, 24
    %v3101 = vpop.permute.xlu0 %3100
    %3102 = vrot.lane.b32.xlu0 %v3058, 24
    %v3103 = vpop.permute.xlu0 %3102
    %v3108 = vsel %vm281, %v2668, %v3065
    %v3109 = vsel %vm281, %v2694, %v3067
    %v3110 = vsel %vm281, %v2720, %v3069
    %v3111 = vsel %vm281, %v2746, %v3071
    %v3112 = vsel %vm1395, %v3108, %v3081
    %v3113 = vsel %vm1395, %v3109, %v3083
    %v3114 = vsel %vm1395, %v3110, %v3085
    %v3115 = vsel %vm1395, %v3111, %v3087
    %v3116 = vsel %vm1400, %v3112, %v3097
    %v3117 = vsel %vm1400, %v3113, %v3099
    %v3118 = vsel %vm1400, %v3114, %v3101
    %v3119 = vsel %vm1400, %v3115, %v3103
    %3124 = vrot.lane.b32.xlu0 %v1826, 32
    %v3125 = vpop.permute.xlu0 %3124
    %3126 = vrot.lane.b32.xlu0 %v1827, 32
    %v3127 = vpop.permute.xlu0 %3126
    %3128 = vrot.lane.b32.xlu0 %v1828, 32
    %v3129 = vpop.permute.xlu0 %3128
    %3130 = vrot.lane.b32.xlu0 %v1829, 32
    %v3131 = vpop.permute.xlu0 %3130
    %v3137 = vsel %vm126, %v3116, 0
    %v3140 = vsel %vm126, %v3117, 0
    %v3143 = vsel %vm126, %v3118, 0
    %v3146 = vsel %vm126, %v3119, 0
    %3148 = vmatpush.msra.mxu0 0.0
    %3149 = vmatpush.msra.mxu0 0.0
    %3150 = vmatpush.msra.mxu0 0.0
    %3151 = vmatpush.msra.mxu0 0.0
    %3152 = vmatpush.msra.mxu0 0.0
    %3153 = vmatpush.msra.mxu0 0.0
    %3154 = vmatpush.msra.mxu0 0.0
    %3155 = vmatpush.msra.mxu0 0.0
    %3156 = vmatpush.msra.mxu0 0.0
    %3157 = vmatpush.msra.mxu0 0.0
    %3158 = vmatpush.msra.mxu0 0.0
    %3159 = vmatpush.msra.mxu0 0.0
    %3160 = vmatpush.msra.mxu0 %v3131
    %3161 = vmatpush.msra.mxu0 %v3129
    %3162 = vmatpush.msra.mxu0 %v3127
    %3163 = vmatpush.msra.mxu0 %v3125
    %3164 = vmatmul.f32.gmra.mxu0 %v3137
    %v3165 = vpop.f32.mrf.mxu0
    %v3166 = vadd.f32 0.0, %v3165
    %3167 = vmatmul.f32.gmra.mxu0 %v3140
    %v3168 = vpop.f32.mrf.mxu0
    %v3169 = vadd.f32 0.0, %v3168
    %3170 = vmatmul.f32.gmra.mxu0 %v3143
    %v3171 = vpop.f32.mrf.mxu0
    %v3172 = vadd.f32 0.0, %v3171
    %3173 = vmatmul.f32.gmra.mxu0 %v3146
    %v3174 = vpop.f32.mrf.mxu0
    %v3175 = vadd.f32 0.0, %v3174
    %3176 = vdwg.mxu0
    %v3177 = vadd.f32 %v1821, %v3166
    %v3178 = vadd.f32 %v1822, %v3169
    %v3179 = vadd.f32 %v1823, %v3172
    %v3180 = vadd.f32 %v1824, %v3175
    %v3181 = vperm.slane %v1856, 0
    %v3182 = vadd.f32 %v3177, %v3181
    %v3183 = vadd.f32 %v3178, %v3181
    %v3184 = vadd.f32 %v3179, %v3181
    %v3185 = vadd.f32 %v3180, %v3181
    %v3186 = vsel %vm126, %v3182, 0.0
    %3187 = vadd.xlane.f32.xlu0 %v3186
    %v3188 = vpop.xlane.xlu0 %3187
    %v3189 = vsel %vm126, %v3183, 0.0
    %3190 = vadd.xlane.f32.xlu0 %v3189
    %v3191 = vpop.xlane.xlu0 %3190
    %v3192 = vsel %vm126, %v3184, 0.0
    %3193 = vadd.xlane.f32.xlu0 %v3192
    %v3194 = vpop.xlane.xlu0 %3193
    %v3195 = vsel %vm126, %v3185, 0.0
    %3196 = vadd.xlane.f32.xlu0 %v3195
    %v3197 = vpop.xlane.xlu0 %3196
    %v3198 = vmul.f32 %v3188, %v145
    %v3199 = vmul.f32 %v3191, %v145
    %v3200 = vmul.f32 %v3194, %v145
    %v3201 = vmul.f32 %v3197, %v145
    %v3202 = vsub.f32 %v3182, %v3198
    %v3203 = vsub.f32 %v3183, %v3199
    %v3204 = vsub.f32 %v3184, %v3200
    %v3205 = vsub.f32 %v3185, %v3201
    %v3206 = vmul.f32 %v3202, %v3202
    %v3207 = vmul.f32 %v3203, %v3203
    %v3208 = vmul.f32 %v3204, %v3204
    %v3209 = vmul.f32 %v3205, %v3205
    %v3210 = vsel %vm126, %v3206, 0.0
    %3211 = vadd.xlane.f32.xlu0 %v3210
    %v3212 = vpop.xlane.xlu0 %3211
    %v3213 = vsel %vm126, %v3207, 0.0
    %3214 = vadd.xlane.f32.xlu0 %v3213
    %v3215 = vpop.xlane.xlu0 %3214
    %v3216 = vsel %vm126, %v3208, 0.0
    %3217 = vadd.xlane.f32.xlu0 %v3216
    %v3218 = vpop.xlane.xlu0 %3217
    %v3219 = vsel %vm126, %v3209, 0.0
    %3220 = vadd.xlane.f32.xlu0 %v3219
    %v3221 = vpop.xlane.xlu0 %3220
    %v3222 = vmul.f32 %v3212, %v145
    %v3223 = vmul.f32 %v3215, %v145
    %v3224 = vmul.f32 %v3218, %v145
    %v3225 = vmul.f32 %v3221, %v145
    %v3226 = vadd.f32 %v3222, 1e-06
    %v3227 = vadd.f32 %v3223, 1e-06
    %v3228 = vadd.f32 %v3224, 1e-06
    %v3229 = vadd.f32 %v3225, 1e-06
    %v3230 = vrsqrt.pop %v3226
    %v3231 = vmul.f32 %v3230, %v3226
    %v3232 = vmul.f32 %v3231, %v3230
    %v3233 = vmul.f32 0.5, %v3232
    %v3234 = vsub.f32 1.5, %v3233
    %v3235 = vmul.f32 %v3230, %v3234
    %vm3236 = vweird.f32 %v3226
    %vm3237 = vweird.f32 %v3230
    %vm3238 = vmor %vm3236, %vm3237
    %v3239 = vsel %vm3238, %v3230, %v3235
    %v3240 = vrsqrt.pop %v3227
    %v3241 = vmul.f32 %v3240, %v3227
    %v3242 = vmul.f32 %v3241, %v3240
    %v3243 = vmul.f32 0.5, %v3242
    %v3244 = vsub.f32 1.5, %v3243
    %v3245 = vmul.f32 %v3240, %v3244
    %vm3246 = vweird.f32 %v3227
    %vm3247 = vweird.f32 %v3240
    %vm3248 = vmor %vm3246, %vm3247
    %v3249 = vsel %vm3248, %v3240, %v3245
    %v3250 = vrsqrt.pop %v3228
    %v3251 = vmul.f32 %v3250, %v3228
    %v3252 = vmul.f32 %v3251, %v3250
    %v3253 = vmul.f32 0.5, %v3252
    %v3254 = vsub.f32 1.5, %v3253
    %v3255 = vmul.f32 %v3250, %v3254
    %vm3256 = vweird.f32 %v3228
    %vm3257 = vweird.f32 %v3250
    %vm3258 = vmor %vm3256, %vm3257
    %v3259 = vsel %vm3258, %v3250, %v3255
    %v3260 = vrsqrt.pop %v3229
    %v3261 = vmul.f32 %v3260, %v3229
    %v3262 = vmul.f32 %v3261, %v3260
    %v3263 = vmul.f32 0.5, %v3262
    %v3264 = vsub.f32 1.5, %v3263
    %v3265 = vmul.f32 %v3260, %v3264
    %vm3266 = vweird.f32 %v3229
    %vm3267 = vweird.f32 %v3260
    %vm3268 = vmor %vm3266, %vm3267
    %v3269 = vsel %vm3268, %v3260, %v3265
    %v3270 = vmul.f32 %v3202, %v3239
    %v3271 = vmul.f32 %v3203, %v3249
    %v3272 = vmul.f32 %v3204, %v3259
    %v3273 = vmul.f32 %v3205, %v3269
    %v3274 = vperm.slane %v1854, 0
    %v3275 = vmul.f32 %v3270, %v3274
    %v3276 = vmul.f32 %v3271, %v3274
    %v3277 = vmul.f32 %v3272, %v3274
    %v3278 = vmul.f32 %v3273, %v3274
    %v3279 = vperm.slane %v1855, 0
    %v3280 = vadd.f32 %v3275, %v3279
    %v3281 = vadd.f32 %v3276, %v3279
    %v3282 = vadd.f32 %v3277, %v3279
    %v3283 = vadd.f32 %v3278, %v3279
    %v3284 = vperm.slane %v1858, 0
    %v3286 = vsel %vm126, %v3280, 0
    %v3289 = vsel %vm126, %v3281, 0
    %v3292 = vsel %vm126, %v3282, 0
    %v3295 = vsel %vm126, %v3283, 0
    %3297 = vmatpush.msra.mxu0 0.0
    %3298 = vmatpush.msra.mxu0 0.0
    %3299 = vmatpush.msra.mxu0 0.0
    %3300 = vmatpush.msra.mxu0 0.0
    %3301 = vmatpush.msra.mxu0 0.0
    %3302 = vmatpush.msra.mxu0 0.0
    %3303 = vmatpush.msra.mxu0 0.0
    %3304 = vmatpush.msra.mxu0 0.0
    %3305 = vmatpush.msra.mxu0 0.0
    %3306 = vmatpush.msra.mxu0 0.0
    %3307 = vmatpush.msra.mxu0 0.0
    %3308 = vmatpush.msra.mxu0 0.0
    %3309 = vmatpush.msra.mxu0 %v1833
    %3310 = vmatpush.msra.mxu0 %v1832
    %3311 = vmatpush.msra.mxu0 %v1831
    %3312 = vmatpush.msra.mxu0 %v1830
    %3313 = vmatmul.f32.gmra.mxu0 %v3286
    %v3314 = vpop.f32.mrf.mxu0
    %v3315 = vadd.f32 %v3284, %v3314
    %3316 = vmatmul.f32.gmra.mxu0 %v3289
    %v3317 = vpop.f32.mrf.mxu0
    %v3318 = vadd.f32 %v3284, %v3317
    %3319 = vmatmul.f32.gmra.mxu0 %v3292
    %v3320 = vpop.f32.mrf.mxu0
    %v3321 = vadd.f32 %v3284, %v3320
    %3322 = vmatmul.f32.gmra.mxu0 %v3295
    %v3323 = vpop.f32.mrf.mxu0
    %v3324 = vadd.f32 %v3284, %v3323
    %3325 = vdwg.mxu0
    %v3326 = vmul.f32 %v3315, 0.5
    %v3327 = vmul.f32 %v3318, 0.5
    %v3328 = vmul.f32 %v3321, 0.5
    %v3329 = vmul.f32 %v3324, 0.5
    %v3330 = vmul.f32 %v3315, 0.70710677
    %v3331 = vmul.f32 %v3318, 0.70710677
    %v3332 = vmul.f32 %v3321, 0.70710677
    %v3333 = vmul.f32 %v3324, 0.70710677
    %v3334 = vmul.f32 %v3330, %v3330
    %v3335 = vmin.f32 16.0, %v3334
    %v3336 = vmul.f32 %v3335, 2.1237322e-06
    %v3337 = vadd.f32 %v3336, 0.00028619796
    %v3338 = vmul.f32 %v3335, %v3337
    %v3339 = vadd.f32 %v3338, 0.0036580483
    %v3340 = vmul.f32 %v3335, %v3339
    %v3341 = vadd.f32 %v3340, 0.05243302
    %v3342 = vmul.f32 %v3335, %v3341
    %v3343 = vadd.f32 %v3342, 0.18741608
    %v3344 = vmul.f32 %v3335, %v3343
    %v3345 = vadd.f32 %v3344, 1.1283791
    %v3346 = vmul.f32 %v3330, %v3345
    %v3347 = vmul.f32 %v3335, 3.8918573e-05
    %v3348 = vadd.f32 %v3347, 0.001143296
    %v3349 = vmul.f32 %v3335, %v3348
    %v3350 = vadd.f32 %v3349, 0.014752088
    %v3351 = vmul.f32 %v3335, %v3350
    %v3352 = vadd.f32 %v3351, 0.112945676
    %v3353 = vmul.f32 %v3335, %v3352
    %v3354 = vadd.f32 %v3353, 0.4994258
    %v3355 = vmul.f32 %v3335, %v3354
    %v3356 = vadd.f32 %v3355, 1.0
    %v3357 = vrcp.pop %v3356
    %v3358 = vmul.f32 %v3356, %v3357
    %v3359 = vsub.f32 1.0, %v3358
    %v3360 = vmul.f32 %v3357, %v3359
    %v3361 = vadd.f32 %v3357, %v3360
    %vm3362 = vweird.f32 %v3356
    %vm3363 = vweird.f32 %v3357
    %vm3364 = vmor %vm3362, %vm3363
    %v3365 = vsel %vm3364, %v3357, %v3361
    %v3366 = vand.u32 2147483647, %v3356
    %vm3367 = vcmp.eq.f32.partialorder %v3366, 8.507059e+37
    %v3368 = vand.u32 %v3356, 2147483648
    %v3369 = vor.u32 1.1754944e-38, %v3368
    %v3370 = vsel %vm3367, %v3369, %v3365
    %v3371 = vmul.f32 %v3346, %v3370
    %v3372 = vmin.f32 %v3371, 1.0
    %v3373 = vmax.f32 %v3372, -1.0
    %v3374 = vmul.f32 %v3331, %v3331
    %v3375 = vmin.f32 16.0, %v3374
    %v3376 = vmul.f32 %v3375, 2.1237322e-06
    %v3377 = vadd.f32 %v3376, 0.00028619796
    %v3378 = vmul.f32 %v3375, %v3377
    %v3379 = vadd.f32 %v3378, 0.0036580483
    %v3380 = vmul.f32 %v3375, %v3379
    %v3381 = vadd.f32 %v3380, 0.05243302
    %v3382 = vmul.f32 %v3375, %v3381
    %v3383 = vadd.f32 %v3382, 0.18741608
    %v3384 = vmul.f32 %v3375, %v3383
    %v3385 = vadd.f32 %v3384, 1.1283791
    %v3386 = vmul.f32 %v3331, %v3385
    %v3387 = vmul.f32 %v3375, 3.8918573e-05
    %v3388 = vadd.f32 %v3387, 0.001143296
    %v3389 = vmul.f32 %v3375, %v3388
    %v3390 = vadd.f32 %v3389, 0.014752088
    %v3391 = vmul.f32 %v3375, %v3390
    %v3392 = vadd.f32 %v3391, 0.112945676
    %v3393 = vmul.f32 %v3375, %v3392
    %v3394 = vadd.f32 %v3393, 0.4994258
    %v3395 = vmul.f32 %v3375, %v3394
    %v3396 = vadd.f32 %v3395, 1.0
    %v3397 = vrcp.pop %v3396
    %v3398 = vmul.f32 %v3396, %v3397
    %v3399 = vsub.f32 1.0, %v3398
    %v3400 = vmul.f32 %v3397, %v3399
    %v3401 = vadd.f32 %v3397, %v3400
    %vm3402 = vweird.f32 %v3396
    %vm3403 = vweird.f32 %v3397
    %vm3404 = vmor %vm3402, %vm3403
    %v3405 = vsel %vm3404, %v3397, %v3401
    %v3406 = vand.u32 2147483647, %v3396
    %vm3407 = vcmp.eq.f32.partialorder %v3406, 8.507059e+37
    %v3408 = vand.u32 %v3396, 2147483648
    %v3409 = vor.u32 1.1754944e-38, %v3408
    %v3410 = vsel %vm3407, %v3409, %v3405
    %v3411 = vmul.f32 %v3386, %v3410
    %v3412 = vmin.f32 %v3411, 1.0
    %v3413 = vmax.f32 %v3412, -1.0
    %v3414 = vmul.f32 %v3332, %v3332
    %v3415 = vmin.f32 16.0, %v3414
    %v3416 = vmul.f32 %v3415, 2.1237322e-06
    %v3417 = vadd.f32 %v3416, 0.00028619796
    %v3418 = vmul.f32 %v3415, %v3417
    %v3419 = vadd.f32 %v3418, 0.0036580483
    %v3420 = vmul.f32 %v3415, %v3419
    %v3421 = vadd.f32 %v3420, 0.05243302
    %v3422 = vmul.f32 %v3415, %v3421
    %v3423 = vadd.f32 %v3422, 0.18741608
    %v3424 = vmul.f32 %v3415, %v3423
    %v3425 = vadd.f32 %v3424, 1.1283791
    %v3426 = vmul.f32 %v3332, %v3425
    %v3427 = vmul.f32 %v3415, 3.8918573e-05
    %v3428 = vadd.f32 %v3427, 0.001143296
    %v3429 = vmul.f32 %v3415, %v3428
    %v3430 = vadd.f32 %v3429, 0.014752088
    %v3431 = vmul.f32 %v3415, %v3430
    %v3432 = vadd.f32 %v3431, 0.112945676
    %v3433 = vmul.f32 %v3415, %v3432
    %v3434 = vadd.f32 %v3433, 0.4994258
    %v3435 = vmul.f32 %v3415, %v3434
    %v3436 = vadd.f32 %v3435, 1.0
    %v3437 = vrcp.pop %v3436
    %v3438 = vmul.f32 %v3436, %v3437
    %v3439 = vsub.f32 1.0, %v3438
    %v3440 = vmul.f32 %v3437, %v3439
    %v3441 = vadd.f32 %v3437, %v3440
    %vm3442 = vweird.f32 %v3436
    %vm3443 = vweird.f32 %v3437
    %vm3444 = vmor %vm3442, %vm3443
    %v3445 = vsel %vm3444, %v3437, %v3441
    %v3446 = vand.u32 2147483647, %v3436
    %vm3447 = vcmp.eq.f32.partialorder %v3446, 8.507059e+37
    %v3448 = vand.u32 %v3436, 2147483648
    %v3449 = vor.u32 1.1754944e-38, %v3448
    %v3450 = vsel %vm3447, %v3449, %v3445
    %v3451 = vmul.f32 %v3426, %v3450
    %v3452 = vmin.f32 %v3451, 1.0
    %v3453 = vmax.f32 %v3452, -1.0
    %v3454 = vmul.f32 %v3333, %v3333
    %v3455 = vmin.f32 16.0, %v3454
    %v3456 = vmul.f32 %v3455, 2.1237322e-06
    %v3457 = vadd.f32 %v3456, 0.00028619796
    %v3458 = vmul.f32 %v3455, %v3457
    %v3459 = vadd.f32 %v3458, 0.0036580483
    %v3460 = vmul.f32 %v3455, %v3459
    %v3461 = vadd.f32 %v3460, 0.05243302
    %v3462 = vmul.f32 %v3455, %v3461
    %v3463 = vadd.f32 %v3462, 0.18741608
    %v3464 = vmul.f32 %v3455, %v3463
    %v3465 = vadd.f32 %v3464, 1.1283791
    %v3466 = vmul.f32 %v3333, %v3465
    %v3467 = vmul.f32 %v3455, 3.8918573e-05
    %v3468 = vadd.f32 %v3467, 0.001143296
    %v3469 = vmul.f32 %v3455, %v3468
    %v3470 = vadd.f32 %v3469, 0.014752088
    %v3471 = vmul.f32 %v3455, %v3470
    %v3472 = vadd.f32 %v3471, 0.112945676
    %v3473 = vmul.f32 %v3455, %v3472
    %v3474 = vadd.f32 %v3473, 0.4994258
    %v3475 = vmul.f32 %v3455, %v3474
    %v3476 = vadd.f32 %v3475, 1.0
    %v3477 = vrcp.pop %v3476
    %v3478 = vmul.f32 %v3476, %v3477
    %v3479 = vsub.f32 1.0, %v3478
    %v3480 = vmul.f32 %v3477, %v3479
    %v3481 = vadd.f32 %v3477, %v3480
    %vm3482 = vweird.f32 %v3476
    %vm3483 = vweird.f32 %v3477
    %vm3484 = vmor %vm3482, %vm3483
    %v3485 = vsel %vm3484, %v3477, %v3481
    %v3486 = vand.u32 2147483647, %v3476
    %vm3487 = vcmp.eq.f32.partialorder %v3486, 8.507059e+37
    %v3488 = vand.u32 %v3476, 2147483648
    %v3489 = vor.u32 1.1754944e-38, %v3488
    %v3490 = vsel %vm3487, %v3489, %v3485
    %v3491 = vmul.f32 %v3466, %v3490
    %v3492 = vmin.f32 %v3491, 1.0
    %v3493 = vmax.f32 %v3492, -1.0
    %v3494 = vadd.f32 %v3373, 1.0
    %v3495 = vadd.f32 %v3413, 1.0
    %v3496 = vadd.f32 %v3453, 1.0
    %v3497 = vadd.f32 %v3493, 1.0
    %v3498 = vmul.f32 %v3326, %v3494
    %v3499 = vmul.f32 %v3327, %v3495
    %v3500 = vmul.f32 %v3328, %v3496
    %v3501 = vmul.f32 %v3329, %v3497
    %3502 = vmatpush.msra.mxu0 %v1850
    %3503 = vmatpush.msra.mxu0 %v1849
    %3504 = vmatpush.msra.mxu0 %v1848
    %3505 = vmatpush.msra.mxu0 %v1847
    %3506 = vmatpush.msra.mxu0 %v1846
    %3507 = vmatpush.msra.mxu0 %v1845
    %3508 = vmatpush.msra.mxu0 %v1844
    %3509 = vmatpush.msra.mxu0 %v1843
    %3510 = vmatpush.msra.mxu0 %v1842
    %3511 = vmatpush.msra.mxu0 %v1841
    %3512 = vmatpush.msra.mxu0 %v1840
    %3513 = vmatpush.msra.mxu0 %v1839
    %3514 = vmatpush.msra.mxu0 %v1838
    %3515 = vmatpush.msra.mxu0 %v1837
    %3516 = vmatpush.msra.mxu0 %v1836
    %3517 = vmatpush.msra.mxu0 %v1835
    %3518 = vmatmul.f32.gmra.mxu0 %v3498
    %v3519 = vpop.f32.mrf.mxu0
    %v3520 = vadd.f32 0.0, %v3519
    %3521 = vmatmul.f32.gmra.mxu0 %v3499
    %v3522 = vpop.f32.mrf.mxu0
    %v3523 = vadd.f32 0.0, %v3522
    %3524 = vmatmul.f32.gmra.mxu0 %v3500
    %v3525 = vpop.f32.mrf.mxu0
    %v3526 = vadd.f32 0.0, %v3525
    %3527 = vmatmul.f32.gmra.mxu0 %v3501
    %v3528 = vpop.f32.mrf.mxu0
    %v3529 = vadd.f32 0.0, %v3528
    %3530 = vdwg.mxu0
    %v3531 = vadd.f32 %v3182, %v3520
    %v3532 = vadd.f32 %v3183, %v3523
    %v3533 = vadd.f32 %v3184, %v3526
    %v3534 = vadd.f32 %v3185, %v3529
    %v3535 = vperm.slane %v1857, 0
    %v3536 = vadd.f32 %v3531, %v3535
    %v3537 = vadd.f32 %v3532, %v3535
    %v3538 = vadd.f32 %v3533, %v3535
    %v3539 = vadd.f32 %v3534, %v3535
    %v3540 = vld [vmem:[%s7] sm:$0x1]
    %v3541 = vld [vmem:[%s7 + $0x1] sm:$0x1]
    %v3542 = vsel %vm126, %v3536, 0.0
    %3543 = vadd.xlane.f32.xlu0 %v3542
    %v3544 = vpop.xlane.xlu0 %3543
    %v3545 = vsel %vm126, %v3537, 0.0
    %3546 = vadd.xlane.f32.xlu0 %v3545
    %v3547 = vpop.xlane.xlu0 %3546
    %v3548 = vsel %vm126, %v3538, 0.0
    %3549 = vadd.xlane.f32.xlu0 %v3548
    %v3550 = vpop.xlane.xlu0 %3549
    %v3551 = vsel %vm126, %v3539, 0.0
    %3552 = vadd.xlane.f32.xlu0 %v3551
    %v3553 = vpop.xlane.xlu0 %3552
    %v3554 = vmul.f32 %v3544, %v145
    %v3555 = vmul.f32 %v3547, %v145
    %v3556 = vmul.f32 %v3550, %v145
    %v3557 = vmul.f32 %v3553, %v145
    %v3558 = vsub.f32 %v3536, %v3554
    %v3559 = vsub.f32 %v3537, %v3555
    %v3560 = vsub.f32 %v3538, %v3556
    %v3561 = vsub.f32 %v3539, %v3557
    %v3562 = vmul.f32 %v3558, %v3558
    %v3563 = vmul.f32 %v3559, %v3559
    %v3564 = vmul.f32 %v3560, %v3560
    %v3565 = vmul.f32 %v3561, %v3561
    %v3566 = vsel %vm126, %v3562, 0.0
    %3567 = vadd.xlane.f32.xlu0 %v3566
    %v3568 = vpop.xlane.xlu0 %3567
    %v3569 = vsel %vm126, %v3563, 0.0
    %3570 = vadd.xlane.f32.xlu0 %v3569
    %v3571 = vpop.xlane.xlu0 %3570
    %v3572 = vsel %vm126, %v3564, 0.0
    %3573 = vadd.xlane.f32.xlu0 %v3572
    %v3574 = vpop.xlane.xlu0 %3573
    %v3575 = vsel %vm126, %v3565, 0.0
    %3576 = vadd.xlane.f32.xlu0 %v3575
    %v3577 = vpop.xlane.xlu0 %3576
    %v3578 = vmul.f32 %v3568, %v145
    %v3579 = vmul.f32 %v3571, %v145
    %v3580 = vmul.f32 %v3574, %v145
    %v3581 = vmul.f32 %v3577, %v145
    %v3582 = vadd.f32 %v3578, 1e-05
    %v3583 = vadd.f32 %v3579, 1e-05
    %v3584 = vadd.f32 %v3580, 1e-05
    %v3585 = vadd.f32 %v3581, 1e-05
    %v3586 = vrsqrt.pop %v3582
    %v3587 = vmul.f32 %v3586, %v3582
    %v3588 = vmul.f32 %v3587, %v3586
    %v3589 = vmul.f32 0.5, %v3588
    %v3590 = vsub.f32 1.5, %v3589
    %v3591 = vmul.f32 %v3586, %v3590
    %vm3592 = vweird.f32 %v3582
    %vm3593 = vweird.f32 %v3586
    %vm3594 = vmor %vm3592, %vm3593
    %v3595 = vsel %vm3594, %v3586, %v3591
    %v3596 = vrsqrt.pop %v3583
    %v3597 = vmul.f32 %v3596, %v3583
    %v3598 = vmul.f32 %v3597, %v3596
    %v3599 = vmul.f32 0.5, %v3598
    %v3600 = vsub.f32 1.5, %v3599
    %v3601 = vmul.f32 %v3596, %v3600
    %vm3602 = vweird.f32 %v3583
    %vm3603 = vweird.f32 %v3596
    %vm3604 = vmor %vm3602, %vm3603
    %v3605 = vsel %vm3604, %v3596, %v3601
    %v3606 = vrsqrt.pop %v3584
    %v3607 = vmul.f32 %v3606, %v3584
    %v3608 = vmul.f32 %v3607, %v3606
    %v3609 = vmul.f32 0.5, %v3608
    %v3610 = vsub.f32 1.5, %v3609
    %v3611 = vmul.f32 %v3606, %v3610
    %vm3612 = vweird.f32 %v3584
    %vm3613 = vweird.f32 %v3606
    %vm3614 = vmor %vm3612, %vm3613
    %v3615 = vsel %vm3614, %v3606, %v3611
    %v3616 = vrsqrt.pop %v3585
    %v3617 = vmul.f32 %v3616, %v3585
    %v3618 = vmul.f32 %v3617, %v3616
    %v3619 = vmul.f32 0.5, %v3618
    %v3620 = vsub.f32 1.5, %v3619
    %v3621 = vmul.f32 %v3616, %v3620
    %vm3622 = vweird.f32 %v3585
    %vm3623 = vweird.f32 %v3616
    %vm3624 = vmor %vm3622, %vm3623
    %v3625 = vsel %vm3624, %v3616, %v3621
    %v3626 = vmul.f32 %v3558, %v3595
    %v3627 = vmul.f32 %v3559, %v3605
    %v3628 = vmul.f32 %v3560, %v3615
    %v3629 = vmul.f32 %v3561, %v3625
    %v3630 = vperm.slane %v3540, 0
    %v3631 = vmul.f32 %v3626, %v3630
    %v3632 = vmul.f32 %v3627, %v3630
    %v3633 = vmul.f32 %v3628, %v3630
    %v3634 = vmul.f32 %v3629, %v3630
    %v3635 = vperm.slane %v3541, 0
    %v3636 = vadd.f32 %v3631, %v3635
    %v3637 = vadd.f32 %v3632, %v3635
    %v3638 = vadd.f32 %v3633, %v3635
    %v3639 = vadd.f32 %v3634, %v3635
    %v3640 = vld [vmem:[%s9] sm:$0x1]
    %v3641 = vld [vmem:[%s9 + $0x1] sm:$0x1]
    %v3642 = vld [vmem:[%s9 + $0x2] sm:$0x1]
    %v3643 = vld [vmem:[%s9 + $0x3] sm:$0x1]
    %v3644 = vld [vmem:[%s8] sm:$0xff]
    %v3645 = vld [vmem:[%s8 + $0x8] sm:$0xff]
    %v3646 = vld [vmem:[%s8 + $0x10] sm:$0xff]
    %v3647 = vld [vmem:[%s8 + $0x18] sm:$0xff]
    %v3648 = vperm.slane %v3640, 0
    %v3650 = vsel %vm126, %v3636, 0
    %v3653 = vsel %vm126, %v3637, 0
    %v3656 = vsel %vm126, %v3638, 0
    %v3659 = vsel %vm126, %v3639, 0
    %3661 = vmatpush.msra.mxu0 0.0
    %3662 = vmatpush.msra.mxu0 0.0
    %3663 = vmatpush.msra.mxu0 0.0
    %3664 = vmatpush.msra.mxu0 0.0
    %3665 = vmatpush.msra.mxu0 0.0
    %3666 = vmatpush.msra.mxu0 0.0
    %3667 = vmatpush.msra.mxu0 0.0
    %3668 = vmatpush.msra.mxu0 0.0
    %3669 = vmatpush.msra.mxu0 0.0
    %3670 = vmatpush.msra.mxu0 0.0
    %3671 = vmatpush.msra.mxu0 0.0
    %3672 = vmatpush.msra.mxu0 0.0
    %3673 = vmatpush.msra.mxu0 %v3647
    %3674 = vmatpush.msra.mxu0 %v3646
    %3675 = vmatpush.msra.mxu0 %v3645
    %3676 = vmatpush.msra.mxu0 %v3644
    %3677 = vmatmul.f32.gmra.mxu0 %v3650
    %v3678 = vpop.f32.mrf.mxu0
    %v3679 = vadd.f32 %v3648, %v3678
    %3680 = vmatmul.f32.gmra.mxu0 %v3653
    %v3681 = vpop.f32.mrf.mxu0
    %v3682 = vadd.f32 %v3648, %v3681
    %3683 = vmatmul.f32.gmra.mxu0 %v3656
    %v3684 = vpop.f32.mrf.mxu0
    %v3685 = vadd.f32 %v3648, %v3684
    %3686 = vmatmul.f32.gmra.mxu0 %v3659
    %v3687 = vpop.f32.mrf.mxu0
    %v3688 = vadd.f32 %v3648, %v3687
    %3689 = vdwg.mxu0
    %v3690 = vmax.f32 %v3679, 0.0
    %v3691 = vmax.f32 %v3682, 0.0
    %v3692 = vmax.f32 %v3685, 0.0
    %v3693 = vmax.f32 %v3688, 0.0
    %v3694 = vperm.slane %v3641, 0
    %v3695 = vmul.f32 %v3690, %v3694
    %v3696 = vmul.f32 %v3691, %v3694
    %v3697 = vmul.f32 %v3692, %v3694
    %v3698 = vmul.f32 %v3693, %v3694
    %v3699 = vsel %vm126, %v3695, 0.0
    %3700 = vadd.xlane.f32.xlu0 %v3699
    %v3701 = vpop.xlane.xlu0 %3700
    %v3702 = vsel %vm126, %v3696, 0.0
    %3703 = vadd.xlane.f32.xlu0 %v3702
    %v3704 = vpop.xlane.xlu0 %3703
    %v3705 = vsel %vm126, %v3697, 0.0
    %3706 = vadd.xlane.f32.xlu0 %v3705
    %v3707 = vpop.xlane.xlu0 %3706
    %v3708 = vsel %vm126, %v3698, 0.0
    %3709 = vadd.xlane.f32.xlu0 %v3708
    %v3710 = vpop.xlane.xlu0 %3709
    %s3712 = vtos %v3643
    %v3713 = vstv %s3712
    %v3715 = vadd.f32 %v3701, %v3713
    %v3716 = vadd.f32 %v3704, %v3713
    %v3717 = vadd.f32 %v3707, %v3713
    %v3718 = vadd.f32 %v3710, %v3713
    %v3719 = vperm.slane %v3642, 0
    %3721 = vrot.lane.b32.xlu0 %v3719, 32
    %v3722 = vpop.permute.xlu0 %3721
    %v3724 = vmul.f32 %v3690, %v3722
    %v3725 = vmul.f32 %v3691, %v3722
    %v3726 = vmul.f32 %v3692, %v3722
    %v3727 = vmul.f32 %v3693, %v3722
    %3732 = vrot.lane.b32.xlu0 %v3724, 96
    %v3733 = vpop.permute.xlu0 %3732
    %3734 = vrot.lane.b32.xlu0 %v3725, 96
    %v3735 = vpop.permute.xlu0 %3734
    %3736 = vrot.lane.b32.xlu0 %v3726, 96
    %v3737 = vpop.permute.xlu0 %3736
    %3738 = vrot.lane.b32.xlu0 %v3727, 96
    %v3739 = vpop.permute.xlu0 %3738
    %v3744 = vsel %vm126, %v3733, 0.0
    %3745 = vadd.xlane.f32.xlu0 %v3744
    %v3746 = vpop.xlane.xlu0 %3745
    %v3747 = vsel %vm126, %v3735, 0.0
    %3748 = vadd.xlane.f32.xlu0 %v3747
    %v3749 = vpop.xlane.xlu0 %3748
    %v3750 = vsel %vm126, %v3737, 0.0
    %3751 = vadd.xlane.f32.xlu0 %v3750
    %v3752 = vpop.xlane.xlu0 %3751
    %v3753 = vsel %vm126, %v3739, 0.0
    %3754 = vadd.xlane.f32.xlu0 %v3753
    %v3755 = vpop.xlane.xlu0 %3754
    %3756 = vrot.lane.b32.xlu0 %v3643, 127
    %v3757 = vpop.permute.xlu0 %3756
    %s3758 = vtos %v3757
    %v3759 = vstv %s3758
    %v3761 = vadd.f32 %v3746, %v3759
    %v3762 = vadd.f32 %v3749, %v3759
    %v3763 = vadd.f32 %v3752, %v3759
    %v3764 = vadd.f32 %v3755, %v3759
    %v3765 = vlaneseq
    %v3766 = vshrl.u32 %v3765, 7
    %v3767 = vlaneseq
    %v3768 = vand.u32 %v3767, 127
    %v3769 = vadd.s32 %v3768, 1
    %vm3770 = vcmp.eq.s32.totalorder %v3766, %v3769
    %v3771 = vsel %vm3770, 1, 0
    %v3772 = vcvt.s32.f32 %v3771
    %v3773 = vadd.s32 %v3768, 2
    %vm3774 = vcmp.eq.s32.totalorder %v3766, %v3773
    %v3775 = vsel %vm3774, 1, 0
    %v3776 = vcvt.s32.f32 %v3775
    %v3781 = vperm.slane %v3715, %v3768
    %v3782 = vperm.slane %v3716, %v3768
    %v3783 = vperm.slane %v3717, %v3768
    %v3784 = vperm.slane %v3718, %v3768
    %vm3785 = vcmask 1041409
    %v3786 = vsel %vm3785, %v3782, %v3781
    %vm3787 = vcmask 1042434
    %v3788 = vsel %vm3787, %v3783, %v3786
    %vm3789 = vcmask 1043459
    %v3790 = vsel %vm3789, %v3784, %v3788
    %v3791 = vsel %vm281, %v3790, 0
    %3793 = vmatpush.msra.mxu0 0.0
    %3794 = vmatpush.msra.mxu0 0.0
    %3795 = vmatpush.msra.mxu0 0.0
    %3796 = vmatpush.msra.mxu0 0.0
    %3797 = vmatpush.msra.mxu0 0.0
    %3798 = vmatpush.msra.mxu0 0.0
    %3799 = vmatpush.msra.mxu0 0.0
    %3800 = vmatpush.msra.mxu0 0.0
    %3801 = vmatpush.msra.mxu0 0.0
    %3802 = vmatpush.msra.mxu0 0.0
    %3803 = vmatpush.msra.mxu0 0.0
    %3804 = vmatpush.msra.mxu0 0.0
    %3805 = vmatpush.msra.mxu0 0.0
    %3806 = vmatpush.msra.mxu0 0.0
    %3807 = vmatpush.msra.mxu0 0.0
    %3808 = vmatpush.msra.mxu0 %v3772
    %3809 = vmatmul.f32.gmra.mxu0 %v3791
    %v3810 = vpop.f32.mrf.mxu0
    %v3811 = vadd.f32 0.0, %v3810
    %3812 = vdwg.mxu0
    %v3817 = vperm.slane %v3761, %v3768
    %v3818 = vperm.slane %v3762, %v3768
    %v3819 = vperm.slane %v3763, %v3768
    %v3820 = vperm.slane %v3764, %v3768
    %v3821 = vsel %vm3785, %v3818, %v3817
    %v3822 = vsel %vm3787, %v3819, %v3821
    %v3823 = vsel %vm3789, %v3820, %v3822
    %v3824 = vsel %vm281, %v3823, 0
    %3826 = vmatpush.msra.mxu0 0.0
    %3827 = vmatpush.msra.mxu0 0.0
    %3828 = vmatpush.msra.mxu0 0.0
    %3829 = vmatpush.msra.mxu0 0.0
    %3830 = vmatpush.msra.mxu0 0.0
    %3831 = vmatpush.msra.mxu0 0.0
    %3832 = vmatpush.msra.mxu0 0.0
    %3833 = vmatpush.msra.mxu0 0.0
    %3834 = vmatpush.msra.mxu0 0.0
    %3835 = vmatpush.msra.mxu0 0.0
    %3836 = vmatpush.msra.mxu0 0.0
    %3837 = vmatpush.msra.mxu0 0.0
    %3838 = vmatpush.msra.mxu0 0.0
    %3839 = vmatpush.msra.mxu0 0.0
    %3840 = vmatpush.msra.mxu0 0.0
    %3841 = vmatpush.msra.mxu0 %v3776
    %3842 = vmatmul.f32.gmra.mxu0 %v3824
    %v3843 = vpop.f32.mrf.mxu0
    %v3844 = vadd.f32 0.0, %v3843
    %3845 = vdwg.mxu0
    %v3846 = vld [vmem:[%s2] sm:$0xf]
    %vm3847 = vcmp.gt.f32.partialorder %v3846, 0.5
    %v3848 = vsel %vm3847, 1, 0
    %3849 = vset.pattern.permute.xlu0 0
    %3850 = vperm.xlu0 %3849, %v3848
    %v3851 = vpop.permute.xlu0 %3850
    %vm3852 = vcmp.eq.s32.totalorder %v3851, 1
    %v3853 = vsel %vm3852, %v3844, %v3811
    %vm3854 = vcmask 52224
    %3855 = vst.msk [vmem:[#allocation2] sm:$0xf] %vm3854, %v3853
    // Predicated region
    $region42: #{phylo_tree_forward.1} parent=1 // pred_check
      _
    $region43: #{phylo_tree_forward.1} parent=1 // pred_check_branch
      %3857 = sbr.rel (0) target = $region45
    $region44: #{phylo_tree_forward.1} parent=1 // pred_region
      %3859 = vsyncadd [#allocation3], 0
      %s3861 = sshll.u32 [#allocation2], 4
      %s3862 = int_to_ptr.vmem [resolvable:$true] %s3861
      %s3863 = sshll.u32 %s10, 4
      %s3864 = int_to_ptr.hbm [resolvable:$true] %s3863
      %3866 = dma.vmem_to_hbm [thread:$0]  %s3862, 64, %s3864, [#allocation3]
    $region45: #{phylo_tree_forward.1} parent=1 // pred_fallthru
      _
    // Predicated region
    $region46: #{phylo_tree_forward.1} parent=1 // pred_check
      _
    $region47: #{phylo_tree_forward.1} parent=1 // pred_check_branch
      %3868 = sbr.rel (0) target = $region49
    $region48: #{phylo_tree_forward.1} parent=1 // pred_region
      %3870 = dma.done [#allocation3], 64
    $region49: #{phylo_tree_forward.1} parent=1 // pred_fallthru
      _
    %3871 = vsyncpa [#allocation3], 1

</llo_original>
